<compile_context>
chip_gen: v5e
topology: v5e:2x2
jax: 0.10.0
libtpu: 0.0.40
codegen_flags: <defaults>
</compile_context>

<pallas_src>
import math

import jax
import jax.numpy as jnp
from jax.experimental import pallas as pl
from jax.experimental.pallas import tpu as pltpu

EPS = 1e-5


def _pick_row_tile(hw, target):
    """Largest divisor of hw that is a multiple of 8 and <= target (else hw)."""
    best = None
    for d in range(8, min(hw, target) + 1, 8):
        if hw % d == 0:
            best = d
    return best if best is not None else hw


def _nbytes(shape, itemsize):
    return math.prod(shape) * itemsize


def _vmem_limit(block_bytes, resident_bytes=0, scratch_bytes=0):
    """Working-set-derived scoped-VMEM limit (>= defaults, < v7x physical)."""
    est = 2 * block_bytes + resident_bytes + scratch_bytes + (16 << 20)
    return int(min(max(est, 32 << 20), 56 << 20))


def _stats(o):
    """Per-channel (sum, sum-of-squares) of an (R, C) f32 tile in one fused pass."""
    return jnp.concatenate(
        [jnp.sum(o, axis=0, keepdims=True),
         jnp.sum(o * o, axis=0, keepdims=True)], axis=0)


# ---------------------------------------------------------------------------
# Kernels (channels on the lane axis; rows = flattened H*W positions)
# ---------------------------------------------------------------------------

def _conv1_kernel(x_ref, w_ref, o_ref, s_ref):
    # conv1 (1x1): one bf16 MXU matmul over the row tile, f32 accumulation.
    o = jnp.dot(x_ref[0], w_ref[...], preferred_element_type=jnp.float32)
    o_ref[0] = o.astype(o_ref.dtype)       # bf16 inter-stage activation
    s_ref[0, 0] = _stats(o)                # f32 BN1 partial statistics


def _bn_relu_conv1x1_kernel(x_ref, sc_ref, sh_ref, w_ref, o_ref, s_ref):
    # Precomputed-scale/shift BN + relu in f32, then 1x1 conv with bf16 operands.
    a = jnp.maximum(x_ref[0].astype(jnp.float32) * sc_ref[...] + sh_ref[...], 0.0)
    o = jnp.dot(a.astype(jnp.bfloat16), w_ref[...],
                preferred_element_type=jnp.float32)
    o_ref[0] = o.astype(o_ref.dtype)
    s_ref[0, 0] = _stats(o)


def _make_bn_relu_conv3x3_kernel(H, W, C):
    HW = H * W

    def kernel(x_ref, sc_ref, sh_ref, w_ref, o_ref, s_ref, pad_ref):
        # bn1 + relu (f32), then write as bf16 into the spatially padded scratch.
        a = jnp.maximum(x_ref[0].astype(jnp.float32) * sc_ref[...] + sh_ref[...],
                        0.0)

        # Zero only the 1-pixel halo; the interior is fully overwritten below.
        zrow = jnp.zeros((1, W + 2, C), jnp.bfloat16)
        zcol = jnp.zeros((H + 2, 1, C), jnp.bfloat16)
        pad_ref[0:1, :, :] = zrow
        pad_ref[H + 1:H + 2, :, :] = zrow
        pad_ref[:, 0:1, :] = zcol
        pad_ref[:, W + 1:W + 2, :] = zcol
        pad_ref[1:H + 1, 1:W + 1, :] = a.astype(jnp.bfloat16).reshape(H, W, C)

        # 3x3 conv as nine accumulating MXU matmuls (no materialized im2col
        # temp): same total MXU work, much lower VMEM / copy pressure.
        acc = jnp.zeros((HW, C), jnp.float32)
        for t in range(9):
            dy, dx = t // 3, t % 3
            win = pad_ref[dy:dy + H, dx:dx + W, :].reshape(HW, C)
            acc = acc + jnp.dot(win, w_ref[t], preferred_element_type=jnp.float32)

        o_ref[0] = acc.astype(o_ref.dtype)
        s_ref[0] = _stats(acc)

    return kernel


def _bn_residual_relu_kernel(o3_ref, x_ref, sc_ref, sh_ref, out_ref):
    out_ref[0] = jnp.maximum(
        o3_ref[0].astype(jnp.float32) * sc_ref[...] + sh_ref[...]
        + x_ref[0].astype(jnp.float32), 0.0)


# ---------------------------------------------------------------------------
# Host-side glue
# ---------------------------------------------------------------------------

def _bn_scale_shift(partials, count, gamma, beta):
    """Reduce per-block (sum, sumsq) partials -> per-channel BN scale/shift."""
    c = partials.shape[-1]
    tot = jnp.sum(partials.reshape(-1, 2, c), axis=0)        # (2, C)
    mean = tot[0] / count
    var = jnp.maximum(tot[1] / count - mean * mean, 0.0)
    scale = gamma * jax.lax.rsqrt(var + EPS)
    shift = beta - mean * scale
    return scale.reshape(1, -1), shift.reshape(1, -1)


def bottleneck_forward(x_nchw, params, row_tile=512):
    """Pallas Bottleneck forward. x_nchw: (N, Cin, H, W) -> (N, Cout, H, W)."""
    w1, w2, w3, g1, b1, g2, b2, g3, b3 = params
    N, Cin, H, W = x_nchw.shape
    Cmid = w1.shape[1]
    Cout = w3.shape[1]
    assert Cout == Cin, "identity residual requires inplanes == 4*planes"
    HW = H * W
    TR = _pick_row_tile(HW, row_tile)
    RT = HW // TR
    count = float(N * HW)

    # NHWC rows at the TRUE channel width (no HBM channel padding), bf16 once.
    x_rows = jnp.transpose(x_nchw, (0, 2, 3, 1)).reshape(N, HW, Cin)
    x_bf16 = x_rows.astype(jnp.bfloat16)

    w1_b = w1.astype(jnp.bfloat16)                    # (Cin, Cmid)
    w2_b = w2.astype(jnp.bfloat16)                    # (9, Cmid, Cmid)
    w3_b = w3.astype(jnp.bfloat16)                    # (Cmid, Cout)

    # --- BlockSpec helpers -------------------------------------------------
    def rows2(c, tr=TR):          # (N, RT)-grid row blocks
        return pl.BlockSpec((1, tr, c), lambda n, r: (n, r, 0))

    def rows1(c):                 # (N,)-grid whole-image blocks (stage 2 halo)
        return pl.BlockSpec((1, HW, c), lambda n: (n, 0, 0))

    def stats2(c):                # per-(image, row-block) BN partials
        return pl.BlockSpec((1, 1, 2, c), lambda n, r: (n, r, 0, 0))

    def resident(shape):          # same block every step -> stays VMEM-resident
        nb = len(shape)
        return pl.BlockSpec(shape, lambda *g: (0,) * nb)

    par2 = ("parallel", "parallel")
    par1 = ("parallel",)

    # ---- stage 1: conv1 (1x1) + bn1 partials ----
    cp1 = pltpu.CompilerParams(
        dimension_semantics=par2,
        vmem_limit_bytes=_vmem_limit(
            _nbytes((TR, Cin), 2) + _nbytes((TR, Cmid), 2) + _nbytes((2, Cmid), 4),
            resident_bytes=_nbytes((Cin, Cmid), 2)))
    ce1 = pl.CostEstimate(
        flops=2 * N * HW * Cin * Cmid, transcendentals=0,
        bytes_accessed=_nbytes((N, HW, Cin), 2) + _nbytes((N, HW, Cmid), 2)
        + _nbytes((Cin, Cmid), 2) + _nbytes((N, RT, 2, Cmid), 4))
    o1, s1 = pl.pallas_call(
        _conv1_kernel,
        grid=(N, RT),
        in_specs=[rows2(Cin), resident((Cin, Cmid))],
        out_specs=[rows2(Cmid), stats2(Cmid)],
        out_shape=[jax.ShapeDtypeStruct((N, HW, Cmid), jnp.bfloat16),
                   jax.ShapeDtypeStruct((N, RT, 2, Cmid), jnp.float32)],
        compiler_params=cp1,
        cost_estimate=ce1,
    )(x_bf16, w1_b)
    sc1, sh1 = _bn_scale_shift(s1, count, g1, b1)

    # ---- stage 2: bn1 + relu + conv2 (3x3, nine accumulating dots) + bn2 partials ----
    cp2 = pltpu.CompilerParams(
        dimension_semantics=par1,
        vmem_limit_bytes=_vmem_limit(
            2 * _nbytes((HW, Cmid), 2) + _nbytes((2, Cmid), 4),
            resident_bytes=_nbytes((9, Cmid, Cmid), 2) + 2 * _nbytes((1, Cmid), 4),
            scratch_bytes=_nbytes((H + 2, W + 2, Cmid), 2)))
    ce2 = pl.CostEstimate(
        flops=2 * N * HW * 9 * Cmid * Cmid, transcendentals=0,
        bytes_accessed=2 * _nbytes((N, HW, Cmid), 2)
        + _nbytes((9, Cmid, Cmid), 2) + _nbytes((N, 2, Cmid), 4))
    o2, s2 = pl.pallas_call(
        _make_bn_relu_conv3x3_kernel(H, W, Cmid),
        grid=(N,),
        in_specs=[rows1(Cmid), resident((1, Cmid)), resident((1, Cmid)),
                  resident((9, Cmid, Cmid))],
        out_specs=[rows1(Cmid), pl.BlockSpec((1, 2, Cmid), lambda n: (n, 0, 0))],
        out_shape=[jax.ShapeDtypeStruct((N, HW, Cmid), jnp.bfloat16),
                   jax.ShapeDtypeStruct((N, 2, Cmid), jnp.float32)],
        scratch_shapes=[pltpu.VMEM((H + 2, W + 2, Cmid), jnp.bfloat16)],
        compiler_params=cp2,
        cost_estimate=ce2,
    )(o1, sc1, sh1, w2_b)
    sc2, sh2 = _bn_scale_shift(s2, count, g2, b2)

    # ---- stage 3: bn2 + relu + conv3 (1x1) + bn3 partials ----
    cp3 = pltpu.CompilerParams(
        dimension_semantics=par2,
        vmem_limit_bytes=_vmem_limit(
            _nbytes((TR, Cmid), 2) + _nbytes((TR, Cout), 2) + _nbytes((2, Cout), 4),
            resident_bytes=_nbytes((Cmid, Cout), 2) + 2 * _nbytes((1, Cmid), 4)))
    ce3 = pl.CostEstimate(
        flops=2 * N * HW * Cmid * Cout, transcendentals=0,
        bytes_accessed=_nbytes((N, HW, Cmid), 2) + _nbytes((N, HW, Cout), 2)
        + _nbytes((Cmid, Cout), 2) + _nbytes((N, RT, 2, Cout), 4))
    o3, s3 = pl.pallas_call(
        _bn_relu_conv1x1_kernel,
        grid=(N, RT),
        in_specs=[rows2(Cmid), resident((1, Cmid)), resident((1, Cmid)),
                  resident((Cmid, Cout))],
        out_specs=[rows2(Cout), stats2(Cout)],
        out_shape=[jax.ShapeDtypeStruct((N, HW, Cout), jnp.bfloat16),
                   jax.ShapeDtypeStruct((N, RT, 2, Cout), jnp.float32)],
        compiler_params=cp3,
        cost_estimate=ce3,
    )(o2, sc2, sh2, w3_b)
    sc3, sh3 = _bn_scale_shift(s3, count, g3, b3)

    # ---- stage 4: bn3 + identity residual (bf16 input, no f32 copy) + relu ----
    cp4 = pltpu.CompilerParams(
        dimension_semantics=par2,
        vmem_limit_bytes=_vmem_limit(
            _nbytes((TR, Cout), 2) + _nbytes((TR, Cin), 2) + _nbytes((TR, Cout), 4),
            resident_bytes=2 * _nbytes((1, Cout), 4)))
    ce4 = pl.CostEstimate(
        flops=4 * N * HW * Cout, transcendentals=0,
        bytes_accessed=_nbytes((N, HW, Cout), 2) + _nbytes((N, HW, Cin), 2)
        + _nbytes((N, HW, Cout), 4))
    out_rows = pl.pallas_call(
        _bn_residual_relu_kernel,
        grid=(N, RT),
        in_specs=[rows2(Cout), rows2(Cin), resident((1, Cout)), resident((1, Cout))],
        out_specs=rows2(Cout),
        out_shape=jax.ShapeDtypeStruct((N, HW, Cout), jnp.float32),
        compiler_params=cp4,
        cost_estimate=ce4,
    )(o3, x_bf16, sc3, sh3)

    out = out_rows.reshape(N, H, W, Cout)
    return jnp.transpose(out, (0, 3, 1, 2))


# ---------------------------------------------------------------------------
# Pure-JAX reference & parameter construction
# ---------------------------------------------------------------------------

def bottleneck_ref(x_nchw, params, matmul_dtype=jnp.float32):
    """Pure-JAX reference (training-mode BN).  matmul_dtype=bfloat16 mirrors the
    kernel's bf16 MXU operands / residual; float32 is the exact PyTorch forward."""
    w1, w2, w3, g1, b1, g2, b2, g3, b3 = params
    x = jnp.transpose(x_nchw, (0, 2, 3, 1)).astype(jnp.float32)

    def bn(o, g, b):
        mu = o.mean(axis=(0, 1, 2), keepdims=True)
        var = jnp.square(o - mu).mean(axis=(0, 1, 2), keepdims=True)
        return (o - mu) * jax.lax.rsqrt(var + EPS) * g.reshape(1, 1, 1, -1) \
            + b.reshape(1, 1, 1, -1)

    def mm(a, w):
        return jnp.einsum("nhwc,cd->nhwd", a.astype(matmul_dtype),
                          w.astype(matmul_dtype),
                          preferred_element_type=jnp.float32)

    o = jax.nn.relu(bn(mm(x, w1), g1, b1))
    w2_hwio = w2.reshape(3, 3, w2.shape[1], w2.shape[2])
    o = jax.lax.conv_general_dilated(
        o.astype(matmul_dtype), w2_hwio.astype(matmul_dtype),
        window_strides=(1, 1), padding="SAME",
        dimension_numbers=("NHWC", "HWIO", "NHWC"),
        preferred_element_type=jnp.float32)
    o = jax.nn.relu(bn(o, g2, b2))
    o = bn(mm(o, w3), g3, b3)
    res = x.astype(matmul_dtype).astype(jnp.float32)   # kernel reads bf16 residual
    o = jax.nn.relu(o + res)
    return jnp.transpose(o, (0, 3, 1, 2))


def init_params(key, inplanes, planes):
    """Deterministic synthetic parameters matching the module's shapes."""
    expansion = 4
    k1, k2, k3 = jax.random.split(key, 3)
    # PyTorch conv weights are (Cout, Cin, kH, kW); convert to kernel layouts.
    w1_pt = 0.1 * jax.random.normal(k1, (planes, inplanes, 1, 1), jnp.float32)
    w2_pt = 0.1 * jax.random.normal(k2, (planes, planes, 3, 3), jnp.float32)
    w3_pt = 0.1 * jax.random.normal(k3, (planes * expansion, planes, 1, 1), jnp.float32)

    w1 = jnp.transpose(w1_pt[:, :, 0, 0], (1, 0))                        # (Cin, Cmid)
    w2 = jnp.transpose(w2_pt, (2, 3, 1, 0)).reshape(9, planes, planes)   # (9, Cin, Cout)
    w3 = jnp.transpose(w3_pt[:, :, 0, 0], (1, 0))                        # (Cmid, Cout)

    # BatchNorm2d default init: weight=1, bias=0.
    g1 = jnp.ones((planes,), jnp.float32); b1 = jnp.zeros((planes,), jnp.float32)
    g2 = jnp.ones((planes,), jnp.float32); b2 = jnp.zeros((planes,), jnp.float32)
    g3 = jnp.ones((planes * expansion,), jnp.float32)
    b3 = jnp.zeros((planes * expansion,), jnp.float32)
    return (w1, w2, w3, g1, b1, g2, b2, g3, b3)


if __name__ == "__main__":
    key = jax.random.PRNGKey(0)
    kx, kp = jax.random.split(key)

    N, H, W = 2, 16, 16
    planes = 4
    inplanes = planes * 4          # identity residual (downsample=None)

    x = jax.random.normal(kx, (N, inplanes, H, W), jnp.float32)
    params = init_params(kp, inplanes, planes)

    # row_tile=128 so the test exercises the multi-row-block grid path (HW=256).
    fwd = jax.jit(lambda xx, pp: bottleneck_forward(xx, pp, row_tile=128))
    out = jax.block_until_ready(fwd(x, params))
    assert out.shape == (N, planes * 4, H, W)

    # bf16-consistent reference (mirrors the kernel's bf16 MXU operands / bf16
    # inter-stage activations & residual): tight check.
    ref_bf16 = jax.block_until_ready(bottleneck_ref(x, params, jnp.bfloat16))
    assert jnp.allclose(out, ref_bf16, rtol=3e-2, atol=3e-2), \
        "mismatch vs bf16-consistent reference"

    # Full-f32 forward (PyTorch semantics): differs only by bf16 rounding.
    ref_f32 = jax.block_until_ready(bottleneck_ref(x, params, jnp.float32))
    assert jnp.allclose(out, ref_f32, rtol=0.15, atol=0.15), \
        "mismatch vs f32 reference"

    print("KERNEL_OK")
</pallas_src>

<mosaic_0001>
module attributes {stable_mosaic.version = 11 : i64} {
  func.func @_conv1_kernel(%arg0: i32, %arg1: i32, %arg2: memref<1x128x16xbf16, #tpu.memory_space<vmem>>, %arg3: memref<16x4xbf16, #tpu.memory_space<vmem>>, %arg4: memref<1x128x4xbf16, #tpu.memory_space<vmem>>, %arg5: memref<1x1x2x4xf32, #tpu.memory_space<vmem>>) attributes {dimension_semantics = [#tpu.dimension_semantics<parallel>, #tpu.dimension_semantics<parallel>], iteration_bounds = array<i64: 2, 2>, scalar_prefetch = 0 : i64, scratch_operands = 0 : i64, tpu.core_type = #tpu.core_type<tc>, window_params = [{transform_indices = @transform_0, window_bounds = array<i64: 1, 128, 16>}, {pipeline_mode = #tpu.pipeline_mode<synchronous>, transform_indices = @transform_1, window_bounds = array<i64: 16, 4>}, {transform_indices = @transform_2, window_bounds = array<i64: 1, 128, 4>}, {transform_indices = @transform_3, window_bounds = array<i64: 1, 1, 2, 4>}]} {
    %c0 = arith.constant 0 : index
    %c0_0 = arith.constant 0 : index
    %c0_1 = arith.constant 0 : index
    %0 = vector.load %arg2[%c0, %c0_0, %c0_1] : memref<1x128x16xbf16, #tpu.memory_space<vmem>>, vector<1x128x16xbf16>
    %1 = vector.shape_cast %0 : vector<1x128x16xbf16> to vector<128x16xbf16>
    %c0_2 = arith.constant 0 : index
    %c0_3 = arith.constant 0 : index
    %2 = vector.load %arg3[%c0_2, %c0_3] : memref<16x4xbf16, #tpu.memory_space<vmem>>, vector<16x4xbf16>
    %cst = arith.constant dense<0.000000e+00> : vector<128x4xf32>
    %3 = tpu.matmul %1, %2, %cst {dimension_numbers = #tpu.dot_dimension_numbers<[1], [0], [0], [1], [0, 0, 1, 1], [], []>} : vector<128x16xbf16>, vector<16x4xbf16>, vector<128x4xf32> -> vector<128x4xf32>
    %4 = arith.truncf %3 : vector<128x4xf32> to vector<128x4xbf16>
    %c0_4 = arith.constant 0 : index
    %c0_5 = arith.constant 0 : index
    %c0_6 = arith.constant 0 : index
    %5 = vector.load %arg4[%c0_4, %c0_5, %c0_6] : memref<1x128x4xbf16, #tpu.memory_space<vmem>>, vector<1x128x4xbf16>
    %6 = vector.shape_cast %5 : vector<1x128x4xbf16> to vector<128x4xbf16>
    %7 = vector.shape_cast %4 : vector<128x4xbf16> to vector<1x128x4xbf16>
    tpu.vector_store %arg4[%c0_4, %c0_5, %c0_6], %7 {strides = array<i32>} : memref<1x128x4xbf16, #tpu.memory_space<vmem>>, vector<1x128x4xbf16>,
    %cst_7 = arith.constant dense<0.000000e+00> : vector<4xf32>
    %8 = vector.multi_reduction <add>, %3, %cst_7 [0] : vector<128x4xf32> to vector<4xf32>
    %9 = vector.shape_cast %8 : vector<4xf32> to vector<1x4xf32>
    %10 = arith.mulf %3, %3 : vector<128x4xf32>
    %cst_8 = arith.constant dense<0.000000e+00> : vector<4xf32>
    %11 = vector.multi_reduction <add>, %10, %cst_8 [0] : vector<128x4xf32> to vector<4xf32>
    %12 = vector.shape_cast %11 : vector<4xf32> to vector<1x4xf32>
    %13 = tpu.concatenate %9, %12 in 0 : vector<1x4xf32>, vector<1x4xf32> -> vector<2x4xf32>
    %c0_9 = arith.constant 0 : index
    %c0_10 = arith.constant 0 : index
    %c0_11 = arith.constant 0 : index
    %c0_12 = arith.constant 0 : index
    %14 = vector.load %arg5[%c0_9, %c0_10, %c0_11, %c0_12] : memref<1x1x2x4xf32, #tpu.memory_space<vmem>>, vector<1x1x2x4xf32>
    %15 = vector.shape_cast %14 : vector<1x1x2x4xf32> to vector<2x4xf32>
    %16 = vector.shape_cast %13 : vector<2x4xf32> to vector<1x1x2x4xf32>
    tpu.vector_store %arg5[%c0_9, %c0_10, %c0_11, %c0_12], %16 {strides = array<i32>} : memref<1x1x2x4xf32, #tpu.memory_space<vmem>>, vector<1x1x2x4xf32>,
    return
  }
  func.func @transform_0(%arg0: i32, %arg1: i32) -> (i32, i32, i32) {
    %c0_i32 = arith.constant 0 : i32
    %c0_i32_0 = arith.constant 0 : i32
    return %arg0, %arg1, %c0_i32 : i32, i32, i32
  }
  func.func @transform_1(%arg0: i32, %arg1: i32) -> (i32, i32) {
    %c0_i32 = arith.constant 0 : i32
    %c0_i32_0 = arith.constant 0 : i32
    %c0_i32_1 = arith.constant 0 : i32
    return %c0_i32, %c0_i32_0 : i32, i32
  }
  func.func @transform_2(%arg0: i32, %arg1: i32) -> (i32, i32, i32) {
    %c0_i32 = arith.constant 0 : i32
    %c0_i32_0 = arith.constant 0 : i32
    return %arg0, %arg1, %c0_i32 : i32, i32, i32
  }
  func.func @transform_3(%arg0: i32, %arg1: i32) -> (i32, i32, i32, i32) {
    %c0_i32 = arith.constant 0 : i32
    %c0_i32_0 = arith.constant 0 : i32
    %c0_i32_1 = arith.constant 0 : i32
    return %arg0, %arg1, %c0_i32, %c0_i32_0 : i32, i32, i32, i32
  }
}

module attributes {stable_mosaic.version = 11 : i64} {
  func.func @kernel(%arg0: i32, %arg1: memref<1x256x4xbf16, #tpu.memory_space<vmem>>, %arg2: memref<1x4xf32, #tpu.memory_space<vmem>>, %arg3: memref<1x4xf32, #tpu.memory_space<vmem>>, %arg4: memref<9x4x4xbf16, #tpu.memory_space<vmem>>, %arg5: memref<1x256x4xbf16, #tpu.memory_space<vmem>>, %arg6: memref<1x2x4xf32, #tpu.memory_space<vmem>>, %arg7: memref<18x18x4xbf16, #tpu.memory_space<vmem>>) attributes {dimension_semantics = [#tpu.dimension_semantics<parallel>], iteration_bounds = array<i64: 2>, scalar_prefetch = 0 : i64, scratch_operands = 1 : i64, tpu.core_type = #tpu.core_type<tc>, window_params = [{transform_indices = @transform_0, window_bounds = array<i64: 1, 256, 4>}, {pipeline_mode = #tpu.pipeline_mode<synchronous>, transform_indices = @transform_1, window_bounds = array<i64: 1, 4>}, {pipeline_mode = #tpu.pipeline_mode<synchronous>, transform_indices = @transform_2, window_bounds = array<i64: 1, 4>}, {pipeline_mode = #tpu.pipeline_mode<synchronous>, transform_indices = @transform_3, window_bounds = array<i64: 9, 4, 4>}, {transform_indices = @transform_4, window_bounds = array<i64: 1, 256, 4>}, {transform_indices = @transform_5, window_bounds = array<i64: 1, 2, 4>}]} {
    %c0 = arith.constant 0 : index
    %c0_0 = arith.constant 0 : index
    %c0_1 = arith.constant 0 : index
    %0 = vector.load %arg1[%c0, %c0_0, %c0_1] : memref<1x256x4xbf16, #tpu.memory_space<vmem>>, vector<1x256x4xbf16>
    %1 = vector.shape_cast %0 : vector<1x256x4xbf16> to vector<256x4xbf16>
    %2 = arith.extf %1 : vector<256x4xbf16> to vector<256x4xf32>
    %c0_2 = arith.constant 0 : index
    %c0_3 = arith.constant 0 : index
    %3 = vector.load %arg2[%c0_2, %c0_3] : memref<1x4xf32, #tpu.memory_space<vmem>>, vector<1x4xf32>
    %4 = vector.broadcast %3 : vector<1x4xf32> to vector<256x4xf32>
    %5 = arith.mulf %2, %4 : vector<256x4xf32>
    %c0_4 = arith.constant 0 : index
    %c0_5 = arith.constant 0 : index
    %6 = vector.load %arg3[%c0_4, %c0_5] : memref<1x4xf32, #tpu.memory_space<vmem>>, vector<1x4xf32>
    %7 = vector.broadcast %6 : vector<1x4xf32> to vector<256x4xf32>
    %8 = arith.addf %5, %7 : vector<256x4xf32>
    %cst = arith.constant 0.000000e+00 : f32
    %9 = vector.broadcast %cst : f32 to vector<256x4xf32>
    %10 = arith.maximumf %8, %9 : vector<256x4xf32>
    %cst_6 = arith.constant 0.000000e+00 : bf16
    %11 = vector.broadcast %cst_6 : bf16 to vector<1x18x4xbf16>
    %cst_7 = arith.constant 0.000000e+00 : bf16
    %12 = vector.broadcast %cst_7 : bf16 to vector<18x1x4xbf16>
    %c0_8 = arith.constant 0 : index
    %c0_9 = arith.constant 0 : index
    %c0_10 = arith.constant 0 : index
    %13 = vector.load %arg7[%c0_8, %c0_9, %c0_10] : memref<18x18x4xbf16, #tpu.memory_space<vmem>>, vector<1x18x4xbf16>
    tpu.vector_store %arg7[%c0_8, %c0_9, %c0_10], %11 {strides = array<i32>} : memref<18x18x4xbf16, #tpu.memory_space<vmem>>, vector<1x18x4xbf16>,
    %c17 = arith.constant 17 : index
    %c0_11 = arith.constant 0 : index
    %c0_12 = arith.constant 0 : index
    %14 = vector.load %arg7[%c17, %c0_11, %c0_12] : memref<18x18x4xbf16, #tpu.memory_space<vmem>>, vector<1x18x4xbf16>
    tpu.vector_store %arg7[%c17, %c0_11, %c0_12], %11 {strides = array<i32>} : memref<18x18x4xbf16, #tpu.memory_space<vmem>>, vector<1x18x4xbf16>,
    %c0_13 = arith.constant 0 : index
    %c0_14 = arith.constant 0 : index
    %c0_15 = arith.constant 0 : index
    %15 = vector.load %arg7[%c0_13, %c0_14, %c0_15] : memref<18x18x4xbf16, #tpu.memory_space<vmem>>, vector<18x1x4xbf16>
    tpu.vector_store %arg7[%c0_13, %c0_14, %c0_15], %12 {strides = array<i32>} : memref<18x18x4xbf16, #tpu.memory_space<vmem>>, vector<18x1x4xbf16>,
    %c0_16 = arith.constant 0 : index
    %c17_17 = arith.constant 17 : index
    %c0_18 = arith.constant 0 : index
    %16 = vector.load %arg7[%c0_16, %c17_17, %c0_18] : memref<18x18x4xbf16, #tpu.memory_space<vmem>>, vector<18x1x4xbf16>
    tpu.vector_store %arg7[%c0_16, %c17_17, %c0_18], %12 {strides = array<i32>} : memref<18x18x4xbf16, #tpu.memory_space<vmem>>, vector<18x1x4xbf16>,
    %17 = arith.truncf %10 : vector<256x4xf32> to vector<256x4xbf16>
    %18 = vector.shape_cast %17 : vector<256x4xbf16> to vector<16x16x4xbf16>
    %c1 = arith.constant 1 : index
    %c1_19 = arith.constant 1 : index
    %c0_20 = arith.constant 0 : index
    %19 = vector.load %arg7[%c1, %c1_19, %c0_20] : memref<18x18x4xbf16, #tpu.memory_space<vmem>>, vector<16x16x4xbf16>
    tpu.vector_store %arg7[%c1, %c1_19, %c0_20], %18 {strides = array<i32>} : memref<18x18x4xbf16, #tpu.memory_space<vmem>>, vector<16x16x4xbf16>,
    %cst_21 = arith.constant 0.000000e+00 : f32
    %20 = vector.broadcast %cst_21 : f32 to vector<256x4xf32>
    %c0_22 = arith.constant 0 : index
    %c0_23 = arith.constant 0 : index
    %c0_24 = arith.constant 0 : index
    %21 = vector.load %arg7[%c0_22, %c0_23, %c0_24] : memref<18x18x4xbf16, #tpu.memory_space<vmem>>, vector<16x16x4xbf16>
    %22 = vector.shape_cast %21 : vector<16x16x4xbf16> to vector<256x4xbf16>
    %c0_25 = arith.constant 0 : index
    %c0_26 = arith.constant 0 : index
    %c0_27 = arith.constant 0 : index
    %23 = vector.load %arg4[%c0_25, %c0_26, %c0_27] : memref<9x4x4xbf16, #tpu.memory_space<vmem>>, vector<1x4x4xbf16>
    %24 = vector.shape_cast %23 : vector<1x4x4xbf16> to vector<4x4xbf16>
    %cst_28 = arith.constant dense<0.000000e+00> : vector<256x4xf32>
    %25 = tpu.matmul %22, %24, %cst_28 {dimension_numbers = #tpu.dot_dimension_numbers<[1], [0], [0], [1], [0, 0, 1, 1], [], []>} : vector<256x4xbf16>, vector<4x4xbf16>, vector<256x4xf32> -> vector<256x4xf32>
    %26 = arith.addf %20, %25 : vector<256x4xf32>
    %c0_29 = arith.constant 0 : index
    %c1_30 = arith.constant 1 : index
    %c0_31 = arith.constant 0 : index
    %27 = vector.load %arg7[%c0_29, %c1_30, %c0_31] : memref<18x18x4xbf16, #tpu.memory_space<vmem>>, vector<16x16x4xbf16>
    %28 = vector.shape_cast %27 : vector<16x16x4xbf16> to vector<256x4xbf16>
    %c1_32 = arith.constant 1 : index
    %c0_33 = arith.constant 0 : index
    %c0_34 = arith.constant 0 : index
    %29 = vector.load %arg4[%c1_32, %c0_33, %c0_34] : memref<9x4x4xbf16, #tpu.memory_space<vmem>>, vector<1x4x4xbf16>
    %30 = vector.shape_cast %29 : vector<1x4x4xbf16> to vector<4x4xbf16>
    %cst_35 = arith.constant dense<0.000000e+00> : vector<256x4xf32>
    %31 = tpu.matmul %28, %30, %cst_35 {dimension_numbers = #tpu.dot_dimension_numbers<[1], [0], [0], [1], [0, 0, 1, 1], [], []>} : vector<256x4xbf16>, vector<4x4xbf16>, vector<256x4xf32> -> vector<256x4xf32>
    %32 = arith.addf %26, %31 : vector<256x4xf32>
    %c0_36 = arith.constant 0 : index
    %c2 = arith.constant 2 : index
    %c0_37 = arith.constant 0 : index
    %33 = vector.load %arg7[%c0_36, %c2, %c0_37] : memref<18x18x4xbf16, #tpu.memory_space<vmem>>, vector<16x16x4xbf16>
    %34 = vector.shape_cast %33 : vector<16x16x4xbf16> to vector<256x4xbf16>
    %c2_38 = arith.constant 2 : index
    %c0_39 = arith.constant 0 : index
    %c0_40 = arith.constant 0 : index
    %35 = vector.load %arg4[%c2_38, %c0_39, %c0_40] : memref<9x4x4xbf16, #tpu.memory_space<vmem>>, vector<1x4x4xbf16>
    %36 = vector.shape_cast %35 : vector<1x4x4xbf16> to vector<4x4xbf16>
    %cst_41 = arith.constant dense<0.000000e+00> : vector<256x4xf32>
    %37 = tpu.matmul %34, %36, %cst_41 {dimension_numbers = #tpu.dot_dimension_numbers<[1], [0], [0], [1], [0, 0, 1, 1], [], []>} : vector<256x4xbf16>, vector<4x4xbf16>, vector<256x4xf32> -> vector<256x4xf32>
    %38 = arith.addf %32, %37 : vector<256x4xf32>
    %c1_42 = arith.constant 1 : index
    %c0_43 = arith.constant 0 : index
    %c0_44 = arith.constant 0 : index
    %39 = vector.load %arg7[%c1_42, %c0_43, %c0_44] : memref<18x18x4xbf16, #tpu.memory_space<vmem>>, vector<16x16x4xbf16>
    %40 = vector.shape_cast %39 : vector<16x16x4xbf16> to vector<256x4xbf16>
    %c3 = arith.constant 3 : index
    %c0_45 = arith.constant 0 : index
    %c0_46 = arith.constant 0 : index
    %41 = vector.load %arg4[%c3, %c0_45, %c0_46] : memref<9x4x4xbf16, #tpu.memory_space<vmem>>, vector<1x4x4xbf16>
    %42 = vector.shape_cast %41 : vector<1x4x4xbf16> to vector<4x4xbf16>
    %cst_47 = arith.constant dense<0.000000e+00> : vector<256x4xf32>
    %43 = tpu.matmul %40, %42, %cst_47 {dimension_numbers = #tpu.dot_dimension_numbers<[1], [0], [0], [1], [0, 0, 1, 1], [], []>} : vector<256x4xbf16>, vector<4x4xbf16>, vector<256x4xf32> -> vector<256x4xf32>
    %44 = arith.addf %38, %43 : vector<256x4xf32>
    %c1_48 = arith.constant 1 : index
    %c1_49 = arith.constant 1 : index
    %c0_50 = arith.constant 0 : index
    %45 = vector.load %arg7[%c1_48, %c1_49, %c0_50] : memref<18x18x4xbf16, #tpu.memory_space<vmem>>, vector<16x16x4xbf16>
    %46 = vector.shape_cast %45 : vector<16x16x4xbf16> to vector<256x4xbf16>
    %c4 = arith.constant 4 : index
    %c0_51 = arith.constant 0 : index
    %c0_52 = arith.constant 0 : index
    %47 = vector.load %arg4[%c4, %c0_51, %c0_52] : memref<9x4x4xbf16, #tpu.memory_space<vmem>>, vector<1x4x4xbf16>
    %48 = vector.shape_cast %47 : vector<1x4x4xbf16> to vector<4x4xbf16>
    %cst_53 = arith.constant dense<0.000000e+00> : vector<256x4xf32>
    %49 = tpu.matmul %46, %48, %cst_53 {dimension_numbers = #tpu.dot_dimension_numbers<[1], [0], [0], [1], [0, 0, 1, 1], [], []>} : vector<256x4xbf16>, vector<4x4xbf16>, vector<256x4xf32> -> vector<256x4xf32>
    %50 = arith.addf %44, %49 : vector<256x4xf32>
    %c1_54 = arith.constant 1 : index
    %c2_55 = arith.constant 2 : index
    %c0_56 = arith.constant 0 : index
    %51 = vector.load %arg7[%c1_54, %c2_55, %c0_56] : memref<18x18x4xbf16, #tpu.memory_space<vmem>>, vector<16x16x4xbf16>
    %52 = vector.shape_cast %51 : vector<16x16x4xbf16> to vector<256x4xbf16>
    %c5 = arith.constant 5 : index
    %c0_57 = arith.constant 0 : index
    %c0_58 = arith.constant 0 : index
    %53 = vector.load %arg4[%c5, %c0_57, %c0_58] : memref<9x4x4xbf16, #tpu.memory_space<vmem>>, vector<1x4x4xbf16>
    %54 = vector.shape_cast %53 : vector<1x4x4xbf16> to vector<4x4xbf16>
    %cst_59 = arith.constant dense<0.000000e+00> : vector<256x4xf32>
    %55 = tpu.matmul %52, %54, %cst_59 {dimension_numbers = #tpu.dot_dimension_numbers<[1], [0], [0], [1], [0, 0, 1, 1], [], []>} : vector<256x4xbf16>, vector<4x4xbf16>, vector<256x4xf32> -> vector<256x4xf32>
    %56 = arith.addf %50, %55 : vector<256x4xf32>
    %c2_60 = arith.constant 2 : index
    %c0_61 = arith.constant 0 : index
    %c0_62 = arith.constant 0 : index
    %57 = vector.load %arg7[%c2_60, %c0_61, %c0_62] : memref<18x18x4xbf16, #tpu.memory_space<vmem>>, vector<16x16x4xbf16>
    %58 = vector.shape_cast %57 : vector<16x16x4xbf16> to vector<256x4xbf16>
    %c6 = arith.constant 6 : index
    %c0_63 = arith.constant 0 : index
    %c0_64 = arith.constant 0 : index
    %59 = vector.load %arg4[%c6, %c0_63, %c0_64] : memref<9x4x4xbf16, #tpu.memory_space<vmem>>, vector<1x4x4xbf16>
    %60 = vector.shape_cast %59 : vector<1x4x4xbf16> to vector<4x4xbf16>
    %cst_65 = arith.constant dense<0.000000e+00> : vector<256x4xf32>
    %61 = tpu.matmul %58, %60, %cst_65 {dimension_numbers = #tpu.dot_dimension_numbers<[1], [0], [0], [1], [0, 0, 1, 1], [], []>} : vector<256x4xbf16>, vector<4x4xbf16>, vector<256x4xf32> -> vector<256x4xf32>
    %62 = arith.addf %56, %61 : vector<256x4xf32>
    %c2_66 = arith.constant 2 : index
    %c1_67 = arith.constant 1 : index
    %c0_68 = arith.constant 0 : index
    %63 = vector.load %arg7[%c2_66, %c1_67, %c0_68] : memref<18x18x4xbf16, #tpu.memory_space<vmem>>, vector<16x16x4xbf16>
    %64 = vector.shape_cast %63 : vector<16x16x4xbf16> to vector<256x4xbf16>
    %c7 = arith.constant 7 : index
    %c0_69 = arith.constant 0 : index
    %c0_70 = arith.constant 0 : index
    %65 = vector.load %arg4[%c7, %c0_69, %c0_70] : memref<9x4x4xbf16, #tpu.memory_space<vmem>>, vector<1x4x4xbf16>
    %66 = vector.shape_cast %65 : vector<1x4x4xbf16> to vector<4x4xbf16>
    %cst_71 = arith.constant dense<0.000000e+00> : vector<256x4xf32>
    %67 = tpu.matmul %64, %66, %cst_71 {dimension_numbers = #tpu.dot_dimension_numbers<[1], [0], [0], [1], [0, 0, 1, 1], [], []>} : vector<256x4xbf16>, vector<4x4xbf16>, vector<256x4xf32> -> vector<256x4xf32>
    %68 = arith.addf %62, %67 : vector<256x4xf32>
    %c2_72 = arith.constant 2 : index
    %c2_73 = arith.constant 2 : index
    %c0_74 = arith.constant 0 : index
    %69 = vector.load %arg7[%c2_72, %c2_73, %c0_74] : memref<18x18x4xbf16, #tpu.memory_space<vmem>>, vector<16x16x4xbf16>
    %70 = vector.shape_cast %69 : vector<16x16x4xbf16> to vector<256x4xbf16>
    %c8 = arith.constant 8 : index
    %c0_75 = arith.constant 0 : index
    %c0_76 = arith.constant 0 : index
    %71 = vector.load %arg4[%c8, %c0_75, %c0_76] : memref<9x4x4xbf16, #tpu.memory_space<vmem>>, vector<1x4x4xbf16>
    %72 = vector.shape_cast %71 : vector<1x4x4xbf16> to vector<4x4xbf16>
    %cst_77 = arith.constant dense<0.000000e+00> : vector<256x4xf32>
    %73 = tpu.matmul %70, %72, %cst_77 {dimension_numbers = #tpu.dot_dimension_numbers<[1], [0], [0], [1], [0, 0, 1, 1], [], []>} : vector<256x4xbf16>, vector<4x4xbf16>, vector<256x4xf32> -> vector<256x4xf32>
    %74 = arith.addf %68, %73 : vector<256x4xf32>
    %75 = arith.truncf %74 : vector<256x4xf32> to vector<256x4xbf16>
    %c0_78 = arith.constant 0 : index
    %c0_79 = arith.constant 0 : index
    %c0_80 = arith.constant 0 : index
    %76 = vector.load %arg5[%c0_78, %c0_79, %c0_80] : memref<1x256x4xbf16, #tpu.memory_space<vmem>>, vector<1x256x4xbf16>
    %77 = vector.shape_cast %76 : vector<1x256x4xbf16> to vector<256x4xbf16>
    %78 = vector.shape_cast %75 : vector<256x4xbf16> to vector<1x256x4xbf16>
    tpu.vector_store %arg5[%c0_78, %c0_79, %c0_80], %78 {strides = array<i32>} : memref<1x256x4xbf16, #tpu.memory_space<vmem>>, vector<1x256x4xbf16>,
    %cst_81 = arith.constant dense<0.000000e+00> : vector<4xf32>
    %79 = vector.multi_reduction <add>, %74, %cst_81 [0] : vector<256x4xf32> to vector<4xf32>
    %80 = vector.shape_cast %79 : vector<4xf32> to vector<1x4xf32>
    %81 = arith.mulf %74, %74 : vector<256x4xf32>
    %cst_82 = arith.constant dense<0.000000e+00> : vector<4xf32>
    %82 = vector.multi_reduction <add>, %81, %cst_82 [0] : vector<256x4xf32> to vector<4xf32>
    %83 = vector.shape_cast %82 : vector<4xf32> to vector<1x4xf32>
    %84 = tpu.concatenate %80, %83 in 0 : vector<1x4xf32>, vector<1x4xf32> -> vector<2x4xf32>
    %c0_83 = arith.constant 0 : index
    %c0_84 = arith.constant 0 : index
    %c0_85 = arith.constant 0 : index
    %85 = vector.load %arg6[%c0_83, %c0_84, %c0_85] : memref<1x2x4xf32, #tpu.memory_space<vmem>>, vector<1x2x4xf32>
    %86 = vector.shape_cast %85 : vector<1x2x4xf32> to vector<2x4xf32>
    %87 = vector.shape_cast %84 : vector<2x4xf32> to vector<1x2x4xf32>
    tpu.vector_store %arg6[%c0_83, %c0_84, %c0_85], %87 {strides = array<i32>} : memref<1x2x4xf32, #tpu.memory_space<vmem>>, vector<1x2x4xf32>,
    return
  }
  func.func @transform_0(%arg0: i32) -> (i32, i32, i32) {
    %c0_i32 = arith.constant 0 : i32
    %c0_i32_0 = arith.constant 0 : i32
    %c0_i32_1 = arith.constant 0 : i32
    return %arg0, %c0_i32, %c0_i32_0 : i32, i32, i32
  }
  func.func @transform_1(%arg0: i32) -> (i32, i32) {
    %c0_i32 = arith.constant 0 : i32
    %c0_i32_0 = arith.constant 0 : i32
    %c0_i32_1 = arith.constant 0 : i32
    return %c0_i32, %c0_i32_0 : i32, i32
  }
  func.func @transform_2(%arg0: i32) -> (i32, i32) {
    %c0_i32 = arith.constant 0 : i32
    %c0_i32_0 = arith.constant 0 : i32
    %c0_i32_1 = arith.constant 0 : i32
    return %c0_i32, %c0_i32_0 : i32, i32
  }
  func.func @transform_3(%arg0: i32) -> (i32, i32, i32) {
    %c0_i32 = arith.constant 0 : i32
    %c0_i32_0 = arith.constant 0 : i32
    %c0_i32_1 = arith.constant 0 : i32
    %c0_i32_2 = arith.constant 0 : i32
    return %c0_i32, %c0_i32_0, %c0_i32_1 : i32, i32, i32
  }
  func.func @transform_4(%arg0: i32) -> (i32, i32, i32) {
    %c0_i32 = arith.constant 0 : i32
    %c0_i32_0 = arith.constant 0 : i32
    %c0_i32_1 = arith.constant 0 : i32
    return %arg0, %c0_i32, %c0_i32_0 : i32, i32, i32
  }
  func.func @transform_5(%arg0: i32) -> (i32, i32, i32) {
    %c0_i32 = arith.constant 0 : i32
    %c0_i32_0 = arith.constant 0 : i32
    %c0_i32_1 = arith.constant 0 : i32
    return %arg0, %c0_i32, %c0_i32_0 : i32, i32, i32
  }
}

module attributes {stable_mosaic.version = 11 : i64} {
  func.func @_bn_relu_conv1x1_kernel(%arg0: i32, %arg1: i32, %arg2: memref<1x128x4xbf16, #tpu.memory_space<vmem>>, %arg3: memref<1x4xf32, #tpu.memory_space<vmem>>, %arg4: memref<1x4xf32, #tpu.memory_space<vmem>>, %arg5: memref<4x16xbf16, #tpu.memory_space<vmem>>, %arg6: memref<1x128x16xbf16, #tpu.memory_space<vmem>>, %arg7: memref<1x1x2x16xf32, #tpu.memory_space<vmem>>) attributes {dimension_semantics = [#tpu.dimension_semantics<parallel>, #tpu.dimension_semantics<parallel>], iteration_bounds = array<i64: 2, 2>, scalar_prefetch = 0 : i64, scratch_operands = 0 : i64, tpu.core_type = #tpu.core_type<tc>, window_params = [{transform_indices = @transform_0, window_bounds = array<i64: 1, 128, 4>}, {pipeline_mode = #tpu.pipeline_mode<synchronous>, transform_indices = @transform_1, window_bounds = array<i64: 1, 4>}, {pipeline_mode = #tpu.pipeline_mode<synchronous>, transform_indices = @transform_2, window_bounds = array<i64: 1, 4>}, {pipeline_mode = #tpu.pipeline_mode<synchronous>, transform_indices = @transform_3, window_bounds = array<i64: 4, 16>}, {transform_indices = @transform_4, window_bounds = array<i64: 1, 128, 16>}, {transform_indices = @transform_5, window_bounds = array<i64: 1, 1, 2, 16>}]} {
    %c0 = arith.constant 0 : index
    %c0_0 = arith.constant 0 : index
    %c0_1 = arith.constant 0 : index
    %0 = vector.load %arg2[%c0, %c0_0, %c0_1] : memref<1x128x4xbf16, #tpu.memory_space<vmem>>, vector<1x128x4xbf16>
    %1 = vector.shape_cast %0 : vector<1x128x4xbf16> to vector<128x4xbf16>
    %2 = arith.extf %1 : vector<128x4xbf16> to vector<128x4xf32>
    %c0_2 = arith.constant 0 : index
    %c0_3 = arith.constant 0 : index
    %3 = vector.load %arg3[%c0_2, %c0_3] : memref<1x4xf32, #tpu.memory_space<vmem>>, vector<1x4xf32>
    %4 = vector.broadcast %3 : vector<1x4xf32> to vector<128x4xf32>
    %5 = arith.mulf %2, %4 : vector<128x4xf32>
    %c0_4 = arith.constant 0 : index
    %c0_5 = arith.constant 0 : index
    %6 = vector.load %arg4[%c0_4, %c0_5] : memref<1x4xf32, #tpu.memory_space<vmem>>, vector<1x4xf32>
    %7 = vector.broadcast %6 : vector<1x4xf32> to vector<128x4xf32>
    %8 = arith.addf %5, %7 : vector<128x4xf32>
    %cst = arith.constant 0.000000e+00 : f32
    %9 = vector.broadcast %cst : f32 to vector<128x4xf32>
    %10 = arith.maximumf %8, %9 : vector<128x4xf32>
    %11 = arith.truncf %10 : vector<128x4xf32> to vector<128x4xbf16>
    %c0_6 = arith.constant 0 : index
    %c0_7 = arith.constant 0 : index
    %12 = vector.load %arg5[%c0_6, %c0_7] : memref<4x16xbf16, #tpu.memory_space<vmem>>, vector<4x16xbf16>
    %cst_8 = arith.constant dense<0.000000e+00> : vector<128x16xf32>
    %13 = tpu.matmul %11, %12, %cst_8 {dimension_numbers = #tpu.dot_dimension_numbers<[1], [0], [0], [1], [0, 0, 1, 1], [], []>} : vector<128x4xbf16>, vector<4x16xbf16>, vector<128x16xf32> -> vector<128x16xf32>
    %14 = arith.truncf %13 : vector<128x16xf32> to vector<128x16xbf16>
    %c0_9 = arith.constant 0 : index
    %c0_10 = arith.constant 0 : index
    %c0_11 = arith.constant 0 : index
    %15 = vector.load %arg6[%c0_9, %c0_10, %c0_11] : memref<1x128x16xbf16, #tpu.memory_space<vmem>>, vector<1x128x16xbf16>
    %16 = vector.shape_cast %15 : vector<1x128x16xbf16> to vector<128x16xbf16>
    %17 = vector.shape_cast %14 : vector<128x16xbf16> to vector<1x128x16xbf16>
    tpu.vector_store %arg6[%c0_9, %c0_10, %c0_11], %17 {strides = array<i32>} : memref<1x128x16xbf16, #tpu.memory_space<vmem>>, vector<1x128x16xbf16>,
    %cst_12 = arith.constant dense<0.000000e+00> : vector<16xf32>
    %18 = vector.multi_reduction <add>, %13, %cst_12 [0] : vector<128x16xf32> to vector<16xf32>
    %19 = vector.shape_cast %18 : vector<16xf32> to vector<1x16xf32>
    %20 = arith.mulf %13, %13 : vector<128x16xf32>
    %cst_13 = arith.constant dense<0.000000e+00> : vector<16xf32>
    %21 = vector.multi_reduction <add>, %20, %cst_13 [0] : vector<128x16xf32> to vector<16xf32>
    %22 = vector.shape_cast %21 : vector<16xf32> to vector<1x16xf32>
    %23 = tpu.concatenate %19, %22 in 0 : vector<1x16xf32>, vector<1x16xf32> -> vector<2x16xf32>
    %c0_14 = arith.constant 0 : index
    %c0_15 = arith.constant 0 : index
    %c0_16 = arith.constant 0 : index
    %c0_17 = arith.constant 0 : index
    %24 = vector.load %arg7[%c0_14, %c0_15, %c0_16, %c0_17] : memref<1x1x2x16xf32, #tpu.memory_space<vmem>>, vector<1x1x2x16xf32>
    %25 = vector.shape_cast %24 : vector<1x1x2x16xf32> to vector<2x16xf32>
    %26 = vector.shape_cast %23 : vector<2x16xf32> to vector<1x1x2x16xf32>
    tpu.vector_store %arg7[%c0_14, %c0_15, %c0_16, %c0_17], %26 {strides = array<i32>} : memref<1x1x2x16xf32, #tpu.memory_space<vmem>>, vector<1x1x2x16xf32>,
    return
  }
  func.func @transform_0(%arg0: i32, %arg1: i32) -> (i32, i32, i32) {
    %c0_i32 = arith.constant 0 : i32
    %c0_i32_0 = arith.constant 0 : i32
    return %arg0, %arg1, %c0_i32 : i32, i32, i32
  }
  func.func @transform_1(%arg0: i32, %arg1: i32) -> (i32, i32) {
    %c0_i32 = arith.constant 0 : i32
    %c0_i32_0 = arith.constant 0 : i32
    %c0_i32_1 = arith.constant 0 : i32
    return %c0_i32, %c0_i32_0 : i32, i32
  }
  func.func @transform_2(%arg0: i32, %arg1: i32) -> (i32, i32) {
    %c0_i32 = arith.constant 0 : i32
    %c0_i32_0 = arith.constant 0 : i32
    %c0_i32_1 = arith.constant 0 : i32
    return %c0_i32, %c0_i32_0 : i32, i32
  }
  func.func @transform_3(%arg0: i32, %arg1: i32) -> (i32, i32) {
    %c0_i32 = arith.constant 0 : i32
    %c0_i32_0 = arith.constant 0 : i32
    %c0_i32_1 = arith.constant 0 : i32
    return %c0_i32, %c0_i32_0 : i32, i32
  }
  func.func @transform_4(%arg0: i32, %arg1: i32) -> (i32, i32, i32) {
    %c0_i32 = arith.constant 0 : i32
    %c0_i32_0 = arith.constant 0 : i32
    return %arg0, %arg1, %c0_i32 : i32, i32, i32
  }
  func.func @transform_5(%arg0: i32, %arg1: i32) -> (i32, i32, i32, i32) {
    %c0_i32 = arith.constant 0 : i32
    %c0_i32_0 = arith.constant 0 : i32
    %c0_i32_1 = arith.constant 0 : i32
    return %arg0, %arg1, %c0_i32, %c0_i32_0 : i32, i32, i32, i32
  }
}

module attributes {stable_mosaic.version = 11 : i64} {
  func.func @_bn_residual_relu_kernel(%arg0: i32, %arg1: i32, %arg2: memref<1x128x16xbf16, #tpu.memory_space<vmem>>, %arg3: memref<1x128x16xbf16, #tpu.memory_space<vmem>>, %arg4: memref<1x16xf32, #tpu.memory_space<vmem>>, %arg5: memref<1x16xf32, #tpu.memory_space<vmem>>, %arg6: memref<1x128x16xf32, #tpu.memory_space<vmem>>) attributes {dimension_semantics = [#tpu.dimension_semantics<parallel>, #tpu.dimension_semantics<parallel>], iteration_bounds = array<i64: 2, 2>, scalar_prefetch = 0 : i64, scratch_operands = 0 : i64, tpu.core_type = #tpu.core_type<tc>, window_params = [{transform_indices = @transform_0, window_bounds = array<i64: 1, 128, 16>}, {transform_indices = @transform_1, window_bounds = array<i64: 1, 128, 16>}, {pipeline_mode = #tpu.pipeline_mode<synchronous>, transform_indices = @transform_2, window_bounds = array<i64: 1, 16>}, {pipeline_mode = #tpu.pipeline_mode<synchronous>, transform_indices = @transform_3, window_bounds = array<i64: 1, 16>}, {transform_indices = @transform_4, window_bounds = array<i64: 1, 128, 16>}]} {
    %c0 = arith.constant 0 : index
    %c0_0 = arith.constant 0 : index
    %c0_1 = arith.constant 0 : index
    %0 = vector.load %arg2[%c0, %c0_0, %c0_1] : memref<1x128x16xbf16, #tpu.memory_space<vmem>>, vector<1x128x16xbf16>
    %1 = vector.shape_cast %0 : vector<1x128x16xbf16> to vector<128x16xbf16>
    %2 = arith.extf %1 : vector<128x16xbf16> to vector<128x16xf32>
    %c0_2 = arith.constant 0 : index
    %c0_3 = arith.constant 0 : index
    %3 = vector.load %arg4[%c0_2, %c0_3] : memref<1x16xf32, #tpu.memory_space<vmem>>, vector<1x16xf32>
    %4 = vector.broadcast %3 : vector<1x16xf32> to vector<128x16xf32>
    %5 = arith.mulf %2, %4 : vector<128x16xf32>
    %c0_4 = arith.constant 0 : index
    %c0_5 = arith.constant 0 : index
    %6 = vector.load %arg5[%c0_4, %c0_5] : memref<1x16xf32, #tpu.memory_space<vmem>>, vector<1x16xf32>
    %7 = vector.broadcast %6 : vector<1x16xf32> to vector<128x16xf32>
    %8 = arith.addf %5, %7 : vector<128x16xf32>
    %c0_6 = arith.constant 0 : index
    %c0_7 = arith.constant 0 : index
    %c0_8 = arith.constant 0 : index
    %9 = vector.load %arg3[%c0_6, %c0_7, %c0_8] : memref<1x128x16xbf16, #tpu.memory_space<vmem>>, vector<1x128x16xbf16>
    %10 = vector.shape_cast %9 : vector<1x128x16xbf16> to vector<128x16xbf16>
    %11 = arith.extf %10 : vector<128x16xbf16> to vector<128x16xf32>
    %12 = arith.addf %8, %11 : vector<128x16xf32>
    %cst = arith.constant 0.000000e+00 : f32
    %13 = vector.broadcast %cst : f32 to vector<128x16xf32>
    %14 = arith.maximumf %12, %13 : vector<128x16xf32>
    %c0_9 = arith.constant 0 : index
    %c0_10 = arith.constant 0 : index
    %c0_11 = arith.constant 0 : index
    %15 = vector.load %arg6[%c0_9, %c0_10, %c0_11] : memref<1x128x16xf32, #tpu.memory_space<vmem>>, vector<1x128x16xf32>
    %16 = vector.shape_cast %15 : vector<1x128x16xf32> to vector<128x16xf32>
    %17 = vector.shape_cast %14 : vector<128x16xf32> to vector<1x128x16xf32>
    tpu.vector_store %arg6[%c0_9, %c0_10, %c0_11], %17 {strides = array<i32>} : memref<1x128x16xf32, #tpu.memory_space<vmem>>, vector<1x128x16xf32>,
    return
  }
  func.func @transform_0(%arg0: i32, %arg1: i32) -> (i32, i32, i32) {
    %c0_i32 = arith.constant 0 : i32
    %c0_i32_0 = arith.constant 0 : i32
    return %arg0, %arg1, %c0_i32 : i32, i32, i32
  }
  func.func @transform_1(%arg0: i32, %arg1: i32) -> (i32, i32, i32) {
    %c0_i32 = arith.constant 0 : i32
    %c0_i32_0 = arith.constant 0 : i32
    return %arg0, %arg1, %c0_i32 : i32, i32, i32
  }
  func.func @transform_2(%arg0: i32, %arg1: i32) -> (i32, i32) {
    %c0_i32 = arith.constant 0 : i32
    %c0_i32_0 = arith.constant 0 : i32
    %c0_i32_1 = arith.constant 0 : i32
    return %c0_i32, %c0_i32_0 : i32, i32
  }
  func.func @transform_3(%arg0: i32, %arg1: i32) -> (i32, i32) {
    %c0_i32 = arith.constant 0 : i32
    %c0_i32_0 = arith.constant 0 : i32
    %c0_i32_1 = arith.constant 0 : i32
    return %c0_i32, %c0_i32_0 : i32, i32
  }
  func.func @transform_4(%arg0: i32, %arg1: i32) -> (i32, i32, i32) {
    %c0_i32 = arith.constant 0 : i32
    %c0_i32_0 = arith.constant 0 : i32
    return %arg0, %arg1, %c0_i32 : i32, i32, i32
  }
}

</mosaic_0001>

<llo_original>
// kernel: _lambda_.4
$region0: #{_lambda_.4}
  #allocation0 [shape = 'u32[]', space=smem, size = 0x4, offset = 0x4, fixed_abs, tag = 'smem constant byte address 0x4 - core index']
  #allocation1 [shape = 'u32[72,128]{1,0:T(1,128)}', space=vmem, size = 0x9000, scoped, tag = 'internal scratch']
  %s0 = inlined_call_operand.vmem [shape: bf16[2,256,16], index: 0, kind: input, shape index: {}]
  %s1 = inlined_call_operand.vmem [shape: bf16[16,4], index: 1, kind: input, shape index: {}]
  %s2 = inlined_call_operand.vmem [shape: bf16[2,256,4], index: 2, kind: output, shape index: {0}]
  %s3 = inlined_call_operand.vmem [shape: f32[2,2,2,4], index: 3, kind: output, shape index: {1}]
  %4 = xla_tuple %s2, %s3
  %s5 = sld [smem:[#allocation0]]
  $region49: #{_lambda_.4} parent=0
    _
  %s7 = ssub.s32 1, %s5
  %s8 = scalar_select 0, %s7, %s5
  loop: start=0, step=1, limit=6
  $region2: #{_lambda_.4} parent=0 // loop_pre_header
    _
  $region3: #{_lambda_.4} parent=0 // loop_header
    %s10 = sphi 0, %s14
    %p11 = scmp.ge.s32.totalorder %s10, 6
    %s17 = sphi 0, %s29
    %s18 = sphi 0, %s25
    %s19 = sphi 0, %s17
    %s20 = sphi 0, %s18
    %s21 = sphi 0, %s19
    %s22 = sphi 0, %s20
    %s34 = sphi 0, %s36
    %s37 = sphi 0, %s34
    %s38 = sphi 0, %s37
    %s54 = sphi 0, %s38
    %s58 = sphi 0, %s58
    %s60 = sphi 0, %s58
    %s61 = sphi 0, %s60
    %s75 = sphi 0, %s61
    %s83 = sphi 0, %s85
    %s86 = sphi 0, %s83
    %s87 = sphi 0, %s86
    %s103 = sphi 0, %s87
    %s111 = sphi 0, %s113
    %s114 = sphi 0, %s111
    %s115 = sphi 0, %s114
    %s131 = sphi 0, %s115
  $region4: #{_lambda_.4} parent=0 // loop_header_branch
    %13 = sbr.rel (%p11) target = $region8
  $region5: #{_lambda_.4} parent=0 // loop_body
    %s15 = ssub.s32 %s10, 1
    %s16 = ssub.s32 %s10, 2
    %s23 = sadd.s32 1, %s18
    %p24 = scmp.ge.s32.totalorder %s23, 2
    %s25 = scalar_select %p24, 0, %s23
    %s26 = sadd.s32 1, %s17
    %s27 = scalar_select %p24, %s26, %s17
    %p28 = scmp.ge.s32.totalorder %s27, 2
    %s29 = scalar_select %p28, 0, %s27
    %s30 = ssub.s32 %s17, %s29
    %s31 = ssub.s32 %s18, %s25
    %s32 = sor.u32 %s30, %s31
    %p33 = scmp.eq.s32.totalorder %s32, 0
    %s35 = sadd.s32 %s34, 1
    %s36 = scalar_select %p33, %s34, %s35
    %p39 = pneg %p33
    %p40 = scmp.eq.s32.totalorder %s10, 3
    %p41 = por %p39, %p40
    %p42 = scmp.ne.s32.totalorder %s34, %s37
    %p43 = scmp.eq.s32.totalorder %s10, 0
    %p44 = por %p42, %p43
    %p45 = scmp.ne.s32.totalorder %s34, %s37
    %p46 = scmp.eq.s32.totalorder %s15, 3
    %p47 = por %p45, %p46
    %p48 = scmp.ne.s32.totalorder %s37, %s38
    %p49 = scmp.eq.s32.totalorder %s15, 0
    %p50 = por %p48, %p49
    %p51 = scmp.ne.s32.totalorder %s37, %s38
    %p52 = scmp.eq.s32.totalorder %s16, 3
    %p53 = por %p51, %p52
    %p55 = scmp.ne.s32.totalorder %s38, %s54
    %p56 = scmp.eq.s32.totalorder %s16, 0
    %p57 = por %p55, %p56
    %s59 = sadd.s32 %s58, 1
    %p62 = scmp.eq.s32.totalorder %s10, 3
    %p63 = scmp.ne.s32.totalorder %s58, %s60
    %p64 = scmp.eq.s32.totalorder %s10, 0
    %p65 = por %p63, %p64
    %p66 = scmp.ne.s32.totalorder %s58, %s60
    %p67 = scmp.eq.s32.totalorder %s15, 3
    %p68 = por %p66, %p67
    %p69 = scmp.ne.s32.totalorder %s60, %s61
    %p70 = scmp.eq.s32.totalorder %s15, 0
    %p71 = por %p69, %p70
    %p72 = scmp.ne.s32.totalorder %s60, %s61
    %p73 = scmp.eq.s32.totalorder %s16, 3
    %p74 = por %p72, %p73
    %p76 = scmp.ne.s32.totalorder %s61, %s75
    %p77 = scmp.eq.s32.totalorder %s16, 0
    %p78 = por %p76, %p77
    %s79 = ssub.s32 %s17, %s29
    %s80 = ssub.s32 %s18, %s25
    %s81 = sor.u32 %s79, %s80
    %p82 = scmp.eq.s32.totalorder %s81, 0
    %s84 = sadd.s32 %s83, 1
    %s85 = scalar_select %p82, %s83, %s84
    %p88 = pneg %p82
    %p89 = scmp.eq.s32.totalorder %s10, 3
    %p90 = por %p88, %p89
    %p91 = scmp.ne.s32.totalorder %s83, %s86
    %p92 = scmp.eq.s32.totalorder %s10, 0
    %p93 = por %p91, %p92
    %p94 = scmp.ne.s32.totalorder %s83, %s86
    %p95 = scmp.eq.s32.totalorder %s15, 3
    %p96 = por %p94, %p95
    %p97 = scmp.ne.s32.totalorder %s86, %s87
    %p98 = scmp.eq.s32.totalorder %s15, 0
    %p99 = por %p97, %p98
    %p100 = scmp.ne.s32.totalorder %s86, %s87
    %p101 = scmp.eq.s32.totalorder %s16, 3
    %p102 = por %p100, %p101
    %p104 = scmp.ne.s32.totalorder %s87, %s103
    %p105 = scmp.eq.s32.totalorder %s16, 0
    %p106 = por %p104, %p105
    %s107 = ssub.s32 %s17, %s29
    %s108 = ssub.s32 %s18, %s25
    %s109 = sor.u32 %s107, %s108
    %p110 = scmp.eq.s32.totalorder %s109, 0
    %s112 = sadd.s32 %s111, 1
    %s113 = scalar_select %p110, %s111, %s112
    %p116 = pneg %p110
    %p117 = scmp.eq.s32.totalorder %s10, 3
    %p118 = por %p116, %p117
    %p119 = scmp.ne.s32.totalorder %s111, %s114
    %p120 = scmp.eq.s32.totalorder %s10, 0
    %p121 = por %p119, %p120
    %p122 = scmp.ne.s32.totalorder %s111, %s114
    %p123 = scmp.eq.s32.totalorder %s15, 3
    %p124 = por %p122, %p123
    %p125 = scmp.ne.s32.totalorder %s114, %s115
    %p126 = scmp.eq.s32.totalorder %s15, 0
    %p127 = por %p125, %p126
    %p128 = scmp.ne.s32.totalorder %s114, %s115
    %p129 = scmp.eq.s32.totalorder %s16, 3
    %p130 = por %p128, %p129
    %p132 = scmp.ne.s32.totalorder %s115, %s131
    %p133 = scmp.eq.s32.totalorder %s16, 0
    %p134 = por %p132, %p133
    %p135 = scmp.le.s32.totalorder 1, %s10
    %p136 = scmp.lt.s32.totalorder %s10, 5
    %p137 = pnand %p135, %p136
    %p138 = pneg %p137
    // Predicated region
    $region9: #{_lambda_.4} parent=5 // pred_check
      _
    $region10: #{_lambda_.4} parent=5 // pred_check_branch
      %140 = sbr.rel (%p137) target = $region12
    $region11: #{_lambda_.4} parent=5 // pred_region
      %s141 = ssub.s32 %s10, 1
      // Predicated region
      $region13: #{_lambda_.4} parent=11 // pred_check
        %p142 = pneg %p71
      $region14: #{_lambda_.4} parent=11 // pred_check_branch
        %144 = sbr.rel (%p142) target = $region16
      $region15: #{_lambda_.4} parent=11 // pred_region
        _
      $region16: #{_lambda_.4} parent=11 // pred_fallthru
        _
    $region12: #{_lambda_.4} parent=5 // pred_fallthru
      _
    %p145 = scmp.lt.s32.totalorder %s10, 4
    // Predicated region
    $region17: #{_lambda_.4} parent=5 // pred_check
      %p146 = pneg %p145
    $region18: #{_lambda_.4} parent=5 // pred_check_branch
      %148 = sbr.rel (%p146) target = $region20
    $region19: #{_lambda_.4} parent=5 // pred_region
      // Predicated region
      $region21: #{_lambda_.4} parent=19 // pred_check
        %p149 = pneg %p44
      $region22: #{_lambda_.4} parent=19 // pred_check_branch
        %151 = sbr.rel (%p149) target = $region24
      $region23: #{_lambda_.4} parent=19 // pred_region
        %s152 = smul.u32 16, %s18
        %p153 = scmp.lt.s32.totalorder %s17, 1
        %s154 = scalar_select %p153, %s17, 1
        %p155 = scmp.lt.s32.totalorder %s152, 31
        %s156 = scalar_select %p155, %s152, 31
        %s157 = smul.addr %s154, 32
        %s158 = sadd.s32 %s156, %s157
        %s159 = smul.addr %s158, 4
        %s160 = scalar_lea.vmem %s0, %s159
        %s161 = smul.u32 16, %s18
      $region24: #{_lambda_.4} parent=19 // pred_fallthru
        _
    $region20: #{_lambda_.4} parent=5 // pred_fallthru
      _
    %p162 = scmp.le.s32.totalorder 1, %s10
    %p163 = scmp.lt.s32.totalorder %s10, 5
    %p164 = pnand %p162, %p163
    %p165 = pneg %p164
    // Predicated region
    $region25: #{_lambda_.4} parent=5 // pred_check
      _
    $region26: #{_lambda_.4} parent=5 // pred_check_branch
      %167 = sbr.rel (%p164) target = $region28
    $region27: #{_lambda_.4} parent=5 // pred_region
      %s168 = ssub.s32 %s10, 1
      %s169 = smul.u32 16, %s20
      %p170 = scmp.lt.s32.totalorder %s19, 1
      %s171 = scalar_select %p170, %s19, 1
      %p172 = scmp.lt.s32.totalorder %s169, 31
      %s173 = scalar_select %p172, %s169, 31
      %s174 = smul.addr %s171, 32
      %s175 = sadd.s32 %s173, %s174
      %s176 = smul.addr %s175, 4
      %s177 = scalar_lea.vmem %s0, %s176
      %p178 = pneg %p50
      %p179 = pneg %p47
      %p180 = pneg %p71
      %p181 = pneg %p68
      %p182 = pneg %p99
      %p183 = pneg %p96
      %s184 = smul.u32 16, %s20
      %p185 = scmp.lt.s32.totalorder %s19, 1
      %s186 = scalar_select %p185, %s19, 1
      %p187 = scmp.lt.s32.totalorder %s184, 31
      %s188 = scalar_select %p187, %s184, 31
      %s189 = smul.addr %s186, 32
      %s190 = sadd.s32 %s188, %s189
      %s191 = smul.addr %s190, 4
      %s192 = scalar_lea.vmem %s2, %s191
      %p193 = pneg %p127
      %p194 = pneg %p124
      %p195 = scmp.lt.s32.totalorder %s19, 1
      %s196 = scalar_select %p195, %s19, 1
      %p197 = scmp.lt.s32.totalorder %s20, 1
      %s198 = scalar_select %p197, %s20, 1
      %s199 = smul.addr %s196, 2
      %s200 = sadd.s32 %s198, %s199
      %s201 = smul.addr %s200, 2
      %s202 = scalar_lea.vmem %s3, %s201
      %s203 = smul.u32 16, %s20
      %p204 = scmp.lt.s32.totalorder %s19, 1
      %s205 = scalar_select %p204, %s19, 1
      %p206 = scmp.lt.s32.totalorder %s203, 31
      %s207 = scalar_select %p206, %s203, 31
      %s208 = smul.addr %s205, 32
      %s209 = sadd.s32 %s207, %s208
      %s210 = smul.addr %s209, 4
      %s211 = scalar_lea.vmem %s0, %s210
      %s212 = smul.u32 16, %s20
      %s213 = smul.u32 16, %s20
      %p214 = scmp.lt.s32.totalorder %s19, 1
      %s215 = scalar_select %p214, %s19, 1
      %p216 = scmp.lt.s32.totalorder %s213, 31
      %s217 = scalar_select %p216, %s213, 31
      %s218 = smul.addr %s215, 32
      %s219 = sadd.s32 %s217, %s218
      %s220 = smul.addr %s219, 4
      %s221 = scalar_lea.vmem %s2, %s220
      %s222 = smul.u32 16, %s20
      %p223 = scmp.lt.s32.totalorder %s19, 1
      %s224 = scalar_select %p223, %s19, 1
      %p225 = scmp.lt.s32.totalorder %s20, 1
      %s226 = scalar_select %p225, %s20, 1
      %s227 = smul.addr %s224, 2
      %s228 = sadd.s32 %s226, %s227
      %s229 = smul.addr %s228, 2
      %s230 = scalar_lea.vmem %s3, %s229
      %v232 = vld [vmem:[%s211] sm:$0xf]
      %v233 = vld [vmem:[%s211 + $0x4] sm:$0xf]
      %v234 = vld [vmem:[%s211 + $0x8] sm:$0xf]
      %v235 = vld [vmem:[%s211 + $0xc] sm:$0xf]
      %v236 = vld [vmem:[%s211 + $0x10] sm:$0xf]
      %v237 = vld [vmem:[%s211 + $0x14] sm:$0xf]
      %v238 = vld [vmem:[%s211 + $0x18] sm:$0xf]
      %v239 = vld [vmem:[%s211 + $0x1c] sm:$0xf]
      %v240 = vld [vmem:[%s211 + $0x20] sm:$0xf]
      %v241 = vld [vmem:[%s211 + $0x24] sm:$0xf]
      %v242 = vld [vmem:[%s211 + $0x28] sm:$0xf]
      %v243 = vld [vmem:[%s211 + $0x2c] sm:$0xf]
      %v244 = vld [vmem:[%s211 + $0x30] sm:$0xf]
      %v245 = vld [vmem:[%s211 + $0x34] sm:$0xf]
      %v246 = vld [vmem:[%s211 + $0x38] sm:$0xf]
      %v247 = vld [vmem:[%s211 + $0x3c] sm:$0xf]
      %v248 = vld [vmem:[%s1] sm:$0xf]
      %v249 = vld [vmem:[%s1 + $0x4] sm:$0xf]
      %v266 = vunpack.c.l.b16 %v232
      %v267 = vunpack.c.l.b16 %v233
      %v268 = vunpack.c.l.b16 %v234
      %v269 = vunpack.c.l.b16 %v235
      %v270 = vunpack.c.l.b16 %v236
      %v271 = vunpack.c.l.b16 %v237
      %v272 = vunpack.c.l.b16 %v238
      %v273 = vunpack.c.l.b16 %v239
      %v274 = vunpack.c.l.b16 %v240
      %v275 = vunpack.c.l.b16 %v241
      %v276 = vunpack.c.l.b16 %v242
      %v277 = vunpack.c.l.b16 %v243
      %v278 = vunpack.c.l.b16 %v244
      %v279 = vunpack.c.l.b16 %v245
      %v280 = vunpack.c.l.b16 %v246
      %v281 = vunpack.c.l.b16 %v247
      %v282 = vpack.c.b16 %v267, %v266
      %v283 = vpack.c.b16 %v269, %v268
      %v284 = vpack.c.b16 %v271, %v270
      %v285 = vpack.c.b16 %v273, %v272
      %v286 = vpack.c.b16 %v275, %v274
      %v287 = vpack.c.b16 %v277, %v276
      %v288 = vpack.c.b16 %v279, %v278
      %v289 = vpack.c.b16 %v281, %v280
      %v292 = vunpack.c.l.b16 %v248
      %v293 = vunpack.c.l.b16 %v249
      %v294 = vpack.c.b16 %v293, %v292
      %vm296 = vcmask 130048
      %v298 = vsel %vm296, %v282, 0
      %v301 = vsel %vm296, %v283, 0
      %v304 = vsel %vm296, %v284, 0
      %v307 = vsel %vm296, %v285, 0
      %v310 = vsel %vm296, %v286, 0
      %v313 = vsel %vm296, %v287, 0
      %v316 = vsel %vm296, %v288, 0
      %v319 = vsel %vm296, %v289, 0
      %321 = vmatpush.bf16.msra.mxu0 0
      %322 = vmatpush.bf16.msra.mxu0 0
      %323 = vmatpush.bf16.msra.mxu0 0
      %324 = vmatpush.bf16.msra.mxu0 0
      %325 = vmatpush.bf16.msra.mxu0 0
      %326 = vmatpush.bf16.msra.mxu0 0
      %327 = vmatpush.bf16.msra.mxu0 0
      %328 = vmatpush.bf16.msra.mxu0 %v294
      %329 = vmatmul.bf16.gmra.mxu0 %v298
      %v330 = vpop.f32.mrf.mxu0
      %v331 = vadd.f32 0.0, %v330
      %v332 = vpop.f32.mrf.mxu0
      %v333 = vadd.f32 0.0, %v332
      %334 = vmatmul.bf16.gmra.mxu0 %v301
      %v335 = vpop.f32.mrf.mxu0
      %v336 = vadd.f32 0.0, %v335
      %v337 = vpop.f32.mrf.mxu0
      %v338 = vadd.f32 0.0, %v337
      %339 = vmatmul.bf16.gmra.mxu0 %v304
      %v340 = vpop.f32.mrf.mxu0
      %v341 = vadd.f32 0.0, %v340
      %v342 = vpop.f32.mrf.mxu0
      %v343 = vadd.f32 0.0, %v342
      %344 = vmatmul.bf16.gmra.mxu0 %v307
      %v345 = vpop.f32.mrf.mxu0
      %v346 = vadd.f32 0.0, %v345
      %v347 = vpop.f32.mrf.mxu0
      %v348 = vadd.f32 0.0, %v347
      %349 = vmatmul.bf16.gmra.mxu0 %v310
      %v350 = vpop.f32.mrf.mxu0
      %v351 = vadd.f32 0.0, %v350
      %v352 = vpop.f32.mrf.mxu0
      %v353 = vadd.f32 0.0, %v352
      %354 = vmatmul.bf16.gmra.mxu0 %v313
      %v355 = vpop.f32.mrf.mxu0
      %v356 = vadd.f32 0.0, %v355
      %v357 = vpop.f32.mrf.mxu0
      %v358 = vadd.f32 0.0, %v357
      %359 = vmatmul.bf16.gmra.mxu0 %v316
      %v360 = vpop.f32.mrf.mxu0
      %v361 = vadd.f32 0.0, %v360
      %v362 = vpop.f32.mrf.mxu0
      %v363 = vadd.f32 0.0, %v362
      %364 = vmatmul.bf16.gmra.mxu0 %v319
      %v365 = vpop.f32.mrf.mxu0
      %v366 = vadd.f32 0.0, %v365
      %v367 = vpop.f32.mrf.mxu0
      %v368 = vadd.f32 0.0, %v367
      %369 = vdwg.mxu0
      %v370 = vpack.c.bf16 %v331, %v331
      %v371 = vpack.c.bf16 %v333, %v333
      %v372 = vpack.c.bf16 %v336, %v336
      %v373 = vpack.c.bf16 %v338, %v338
      %v374 = vpack.c.bf16 %v341, %v341
      %v375 = vpack.c.bf16 %v343, %v343
      %v376 = vpack.c.bf16 %v346, %v346
      %v377 = vpack.c.bf16 %v348, %v348
      %v378 = vpack.c.bf16 %v351, %v351
      %v379 = vpack.c.bf16 %v353, %v353
      %v380 = vpack.c.bf16 %v356, %v356
      %v381 = vpack.c.bf16 %v358, %v358
      %v382 = vpack.c.bf16 %v361, %v361
      %v383 = vpack.c.bf16 %v363, %v363
      %v384 = vpack.c.bf16 %v366, %v366
      %v385 = vpack.c.bf16 %v368, %v368
      %vm386 = vcmask 27648
      %387 = vst.msk [vmem:[%s221] sm:$0xf] %vm386, %v370
      %388 = vst.msk [vmem:[%s221 + $0x4] sm:$0xf] %vm386, %v371
      %389 = vst.msk [vmem:[%s221 + $0x8] sm:$0xf] %vm386, %v372
      %390 = vst.msk [vmem:[%s221 + $0xc] sm:$0xf] %vm386, %v373
      %391 = vst.msk [vmem:[%s221 + $0x10] sm:$0xf] %vm386, %v374
      %392 = vst.msk [vmem:[%s221 + $0x14] sm:$0xf] %vm386, %v375
      %393 = vst.msk [vmem:[%s221 + $0x18] sm:$0xf] %vm386, %v376
      %394 = vst.msk [vmem:[%s221 + $0x1c] sm:$0xf] %vm386, %v377
      %395 = vst.msk [vmem:[%s221 + $0x20] sm:$0xf] %vm386, %v378
      %396 = vst.msk [vmem:[%s221 + $0x24] sm:$0xf] %vm386, %v379
      %397 = vst.msk [vmem:[%s221 + $0x28] sm:$0xf] %vm386, %v380
      %398 = vst.msk [vmem:[%s221 + $0x2c] sm:$0xf] %vm386, %v381
      %399 = vst.msk [vmem:[%s221 + $0x30] sm:$0xf] %vm386, %v382
      %400 = vst.msk [vmem:[%s221 + $0x34] sm:$0xf] %vm386, %v383
      %401 = vst.msk [vmem:[%s221 + $0x38] sm:$0xf] %vm386, %v384
      %402 = vst.msk [vmem:[%s221 + $0x3c] sm:$0xf] %vm386, %v385
      %vm403 = vcmask 31744
      %v404 = vsel %vm403, %v331, 0.0
      %v405 = vsel %vm403, %v333, 0.0
      %v406 = vadd.f32 %v404, %v405
      %v407 = vsel %vm403, %v336, 0.0
      %v408 = vadd.f32 %v406, %v407
      %v409 = vsel %vm403, %v338, 0.0
      %v410 = vadd.f32 %v408, %v409
      %v411 = vsel %vm403, %v341, 0.0
      %v412 = vadd.f32 %v410, %v411
      %v413 = vsel %vm403, %v343, 0.0
      %v414 = vadd.f32 %v412, %v413
      %v415 = vsel %vm403, %v346, 0.0
      %v416 = vadd.f32 %v414, %v415
      %v417 = vsel %vm403, %v348, 0.0
      %v418 = vadd.f32 %v416, %v417
      %v419 = vsel %vm403, %v351, 0.0
      %v420 = vadd.f32 %v418, %v419
      %v421 = vsel %vm403, %v353, 0.0
      %v422 = vadd.f32 %v420, %v421
      %v423 = vsel %vm403, %v356, 0.0
      %v424 = vadd.f32 %v422, %v423
      %v425 = vsel %vm403, %v358, 0.0
      %v426 = vadd.f32 %v424, %v425
      %v427 = vsel %vm403, %v361, 0.0
      %v428 = vadd.f32 %v426, %v427
      %v429 = vsel %vm403, %v363, 0.0
      %v430 = vadd.f32 %v428, %v429
      %v431 = vsel %vm403, %v366, 0.0
      %v432 = vadd.f32 %v430, %v431
      %v433 = vsel %vm403, %v368, 0.0
      %v434 = vadd.f32 %v432, %v433
      %v435 = vrot.slane %v434, 4
      %v436 = vadd.f32 %v434, %v435
      %v437 = vrot.slane %v436, 2
      %v438 = vadd.f32 %v436, %v437
      %v439 = vrot.slane %v438, 1
      %v440 = vadd.f32 %v438, %v439
      %v441 = vmul.f32 %v331, %v331
      %v442 = vmul.f32 %v333, %v333
      %v443 = vmul.f32 %v336, %v336
      %v444 = vmul.f32 %v338, %v338
      %v445 = vmul.f32 %v341, %v341
      %v446 = vmul.f32 %v343, %v343
      %v447 = vmul.f32 %v346, %v346
      %v448 = vmul.f32 %v348, %v348
      %v449 = vmul.f32 %v351, %v351
      %v450 = vmul.f32 %v353, %v353
      %v451 = vmul.f32 %v356, %v356
      %v452 = vmul.f32 %v358, %v358
      %v453 = vmul.f32 %v361, %v361
      %v454 = vmul.f32 %v363, %v363
      %v455 = vmul.f32 %v366, %v366
      %v456 = vmul.f32 %v368, %v368
      %v457 = vsel %vm403, %v441, 0.0
      %v458 = vsel %vm403, %v442, 0.0
      %v459 = vadd.f32 %v457, %v458
      %v460 = vsel %vm403, %v443, 0.0
      %v461 = vadd.f32 %v459, %v460
      %v462 = vsel %vm403, %v444, 0.0
      %v463 = vadd.f32 %v461, %v462
      %v464 = vsel %vm403, %v445, 0.0
      %v465 = vadd.f32 %v463, %v464
      %v466 = vsel %vm403, %v446, 0.0
      %v467 = vadd.f32 %v465, %v466
      %v468 = vsel %vm403, %v447, 0.0
      %v469 = vadd.f32 %v467, %v468
      %v470 = vsel %vm403, %v448, 0.0
      %v471 = vadd.f32 %v469, %v470
      %v472 = vsel %vm403, %v449, 0.0
      %v473 = vadd.f32 %v471, %v472
      %v474 = vsel %vm403, %v450, 0.0
      %v475 = vadd.f32 %v473, %v474
      %v476 = vsel %vm403, %v451, 0.0
      %v477 = vadd.f32 %v475, %v476
      %v478 = vsel %vm403, %v452, 0.0
      %v479 = vadd.f32 %v477, %v478
      %v480 = vsel %vm403, %v453, 0.0
      %v481 = vadd.f32 %v479, %v480
      %v482 = vsel %vm403, %v454, 0.0
      %v483 = vadd.f32 %v481, %v482
      %v484 = vsel %vm403, %v455, 0.0
      %v485 = vadd.f32 %v483, %v484
      %v486 = vsel %vm403, %v456, 0.0
      %v487 = vadd.f32 %v485, %v486
      %v488 = vrot.slane %v487, 4
      %v489 = vadd.f32 %v487, %v488
      %v490 = vrot.slane %v489, 2
      %v491 = vadd.f32 %v489, %v490
      %v492 = vrot.slane %v491, 1
      %v493 = vadd.f32 %v491, %v492
      %vm494 = vcmask 1040384
      %v495 = vsel %vm494, %v440, %v493
      %vm496 = vcmask 25600
      %497 = vst.msk [vmem:[%s230] sm:$0x3] %vm496, %v495
      %s498 = smul.u32 16, %s20
      %p499 = scmp.lt.s32.totalorder %s19, 1
      %s500 = scalar_select %p499, %s19, 1
      %p501 = scmp.lt.s32.totalorder %s498, 31
      %s502 = scalar_select %p501, %s498, 31
      %s503 = smul.addr %s500, 32
      %s504 = sadd.s32 %s502, %s503
      %s505 = smul.addr %s504, 4
      %s506 = scalar_lea.vmem %s2, %s505
      %p507 = scmp.lt.s32.totalorder %s19, 1
      %s508 = scalar_select %p507, %s19, 1
      %p509 = scmp.lt.s32.totalorder %s20, 1
      %s510 = scalar_select %p509, %s20, 1
      %s511 = smul.addr %s508, 2
      %s512 = sadd.s32 %s510, %s511
      %s513 = smul.addr %s512, 2
      %s514 = scalar_lea.vmem %s3, %s513
      // Predicated region
      $region29: #{_lambda_.4} parent=27 // pred_check
        %p515 = pneg %p96
      $region30: #{_lambda_.4} parent=27 // pred_check_branch
        %517 = sbr.rel (%p515) target = $region32
      $region31: #{_lambda_.4} parent=27 // pred_region
        %s518 = smul.u32 16, %s20
      $region32: #{_lambda_.4} parent=27 // pred_fallthru
        _
      // Predicated region
      $region33: #{_lambda_.4} parent=27 // pred_check
        %p519 = pneg %p124
      $region34: #{_lambda_.4} parent=27 // pred_check_branch
        %521 = sbr.rel (%p519) target = $region36
      $region35: #{_lambda_.4} parent=27 // pred_region
        _
      $region36: #{_lambda_.4} parent=27 // pred_fallthru
        _
    $region28: #{_lambda_.4} parent=5 // pred_fallthru
      _
    %p522 = scmp.le.s32.totalorder 2, %s10
    // Predicated region
    $region37: #{_lambda_.4} parent=5 // pred_check
      %p523 = pneg %p522
    $region38: #{_lambda_.4} parent=5 // pred_check_branch
      %525 = sbr.rel (%p523) target = $region40
    $region39: #{_lambda_.4} parent=5 // pred_region
      %s526 = ssub.s32 %s10, 2
      // Predicated region
      $region41: #{_lambda_.4} parent=39 // pred_check
        %p527 = pneg %p102
      $region42: #{_lambda_.4} parent=39 // pred_check_branch
        %529 = sbr.rel (%p527) target = $region44
      $region43: #{_lambda_.4} parent=39 // pred_region
        %s530 = smul.u32 16, %s22
        %p531 = scmp.lt.s32.totalorder %s21, 1
        %s532 = scalar_select %p531, %s21, 1
        %p533 = scmp.lt.s32.totalorder %s530, 31
        %s534 = scalar_select %p533, %s530, 31
        %s535 = smul.addr %s532, 32
        %s536 = sadd.s32 %s534, %s535
        %s537 = smul.addr %s536, 4
        %s538 = scalar_lea.vmem %s2, %s537
      $region44: #{_lambda_.4} parent=39 // pred_fallthru
        _
      // Predicated region
      $region45: #{_lambda_.4} parent=39 // pred_check
        %p539 = pneg %p130
      $region46: #{_lambda_.4} parent=39 // pred_check_branch
        %541 = sbr.rel (%p539) target = $region48
      $region47: #{_lambda_.4} parent=39 // pred_region
        %p542 = scmp.lt.s32.totalorder %s21, 1
        %s543 = scalar_select %p542, %s21, 1
        %p544 = scmp.lt.s32.totalorder %s22, 1
        %s545 = scalar_select %p544, %s22, 1
        %s546 = smul.addr %s543, 2
        %s547 = sadd.s32 %s545, %s546
        %s548 = smul.addr %s547, 2
        %s549 = scalar_lea.vmem %s3, %s548
      $region48: #{_lambda_.4} parent=39 // pred_fallthru
        _
    $region40: #{_lambda_.4} parent=5 // pred_fallthru
      _
  $region6: #{_lambda_.4} parent=0 // loop_footer
    %s14 = sadd.s32 1, %s10
  $region7: #{_lambda_.4} parent=0 // loop_footer_branch
    %9 = sbr.rel target = $region3
  $region8: #{_lambda_.4} parent=0 // loop_exit
    _

// kernel: _lambda_.6
$region0: #{_lambda_.6}
  #allocation0 [shape = 'u32[]', space=smem, size = 0x4, offset = 0x4, fixed_abs, tag = 'smem constant byte address 0x4 - core index']
  #allocation1 [shape = 'u32[72,128]{1,0:T(1,128)}', space=vmem, size = 0x9000, scoped, tag = 'internal scratch']
  %s0 = inlined_call_operand.vmem [shape: bf16[2,256,4], index: 0, kind: input, shape index: {}]
  %s1 = inlined_call_operand.vmem [shape: f32[1,4], index: 1, kind: input, shape index: {}]
  %s2 = inlined_call_operand.vmem [shape: f32[1,4], index: 2, kind: input, shape index: {}]
  %s3 = inlined_call_operand.vmem [shape: bf16[4,16], index: 3, kind: input, shape index: {}]
  %s4 = inlined_call_operand.vmem [shape: bf16[2,256,16], index: 4, kind: output, shape index: {0}]
  %s5 = inlined_call_operand.vmem [shape: f32[2,2,2,16], index: 5, kind: output, shape index: {1}]
  %6 = xla_tuple %s4, %s5
  %s7 = sld [smem:[#allocation0]]
  $region57: #{_lambda_.6} parent=0
    _
  %s9 = ssub.s32 1, %s7
  %s10 = scalar_select 0, %s9, %s7
  loop: start=0, step=1, limit=6
  $region2: #{_lambda_.6} parent=0 // loop_pre_header
    _
  $region3: #{_lambda_.6} parent=0 // loop_header
    %s12 = sphi 0, %s16
    %p13 = scmp.ge.s32.totalorder %s12, 6
    %s19 = sphi 0, %s31
    %s20 = sphi 0, %s27
    %s21 = sphi 0, %s19
    %s22 = sphi 0, %s20
    %s23 = sphi 0, %s21
    %s24 = sphi 0, %s22
    %s36 = sphi 0, %s38
    %s39 = sphi 0, %s36
    %s40 = sphi 0, %s39
    %s56 = sphi 0, %s40
    %s60 = sphi 0, %s60
    %s62 = sphi 0, %s60
    %s63 = sphi 0, %s62
    %s77 = sphi 0, %s63
    %s81 = sphi 0, %s81
    %s83 = sphi 0, %s81
    %s84 = sphi 0, %s83
    %s98 = sphi 0, %s84
    %s102 = sphi 0, %s102
    %s104 = sphi 0, %s102
    %s105 = sphi 0, %s104
    %s119 = sphi 0, %s105
    %s127 = sphi 0, %s129
    %s130 = sphi 0, %s127
    %s131 = sphi 0, %s130
    %s147 = sphi 0, %s131
    %s155 = sphi 0, %s157
    %s158 = sphi 0, %s155
    %s159 = sphi 0, %s158
    %s175 = sphi 0, %s159
  $region4: #{_lambda_.6} parent=0 // loop_header_branch
    %15 = sbr.rel (%p13) target = $region8
  $region5: #{_lambda_.6} parent=0 // loop_body
    %s17 = ssub.s32 %s12, 1
    %s18 = ssub.s32 %s12, 2
    %s25 = sadd.s32 1, %s20
    %p26 = scmp.ge.s32.totalorder %s25, 2
    %s27 = scalar_select %p26, 0, %s25
    %s28 = sadd.s32 1, %s19
    %s29 = scalar_select %p26, %s28, %s19
    %p30 = scmp.ge.s32.totalorder %s29, 2
    %s31 = scalar_select %p30, 0, %s29
    %s32 = ssub.s32 %s19, %s31
    %s33 = ssub.s32 %s20, %s27
    %s34 = sor.u32 %s32, %s33
    %p35 = scmp.eq.s32.totalorder %s34, 0
    %s37 = sadd.s32 %s36, 1
    %s38 = scalar_select %p35, %s36, %s37
    %p41 = pneg %p35
    %p42 = scmp.eq.s32.totalorder %s12, 3
    %p43 = por %p41, %p42
    %p44 = scmp.ne.s32.totalorder %s36, %s39
    %p45 = scmp.eq.s32.totalorder %s12, 0
    %p46 = por %p44, %p45
    %p47 = scmp.ne.s32.totalorder %s36, %s39
    %p48 = scmp.eq.s32.totalorder %s17, 3
    %p49 = por %p47, %p48
    %p50 = scmp.ne.s32.totalorder %s39, %s40
    %p51 = scmp.eq.s32.totalorder %s17, 0
    %p52 = por %p50, %p51
    %p53 = scmp.ne.s32.totalorder %s39, %s40
    %p54 = scmp.eq.s32.totalorder %s18, 3
    %p55 = por %p53, %p54
    %p57 = scmp.ne.s32.totalorder %s40, %s56
    %p58 = scmp.eq.s32.totalorder %s18, 0
    %p59 = por %p57, %p58
    %s61 = sadd.s32 %s60, 1
    %p64 = scmp.eq.s32.totalorder %s12, 3
    %p65 = scmp.ne.s32.totalorder %s60, %s62
    %p66 = scmp.eq.s32.totalorder %s12, 0
    %p67 = por %p65, %p66
    %p68 = scmp.ne.s32.totalorder %s60, %s62
    %p69 = scmp.eq.s32.totalorder %s17, 3
    %p70 = por %p68, %p69
    %p71 = scmp.ne.s32.totalorder %s62, %s63
    %p72 = scmp.eq.s32.totalorder %s17, 0
    %p73 = por %p71, %p72
    %p74 = scmp.ne.s32.totalorder %s62, %s63
    %p75 = scmp.eq.s32.totalorder %s18, 3
    %p76 = por %p74, %p75
    %p78 = scmp.ne.s32.totalorder %s63, %s77
    %p79 = scmp.eq.s32.totalorder %s18, 0
    %p80 = por %p78, %p79
    %s82 = sadd.s32 %s81, 1
    %p85 = scmp.eq.s32.totalorder %s12, 3
    %p86 = scmp.ne.s32.totalorder %s81, %s83
    %p87 = scmp.eq.s32.totalorder %s12, 0
    %p88 = por %p86, %p87
    %p89 = scmp.ne.s32.totalorder %s81, %s83
    %p90 = scmp.eq.s32.totalorder %s17, 3
    %p91 = por %p89, %p90
    %p92 = scmp.ne.s32.totalorder %s83, %s84
    %p93 = scmp.eq.s32.totalorder %s17, 0
    %p94 = por %p92, %p93
    %p95 = scmp.ne.s32.totalorder %s83, %s84
    %p96 = scmp.eq.s32.totalorder %s18, 3
    %p97 = por %p95, %p96
    %p99 = scmp.ne.s32.totalorder %s84, %s98
    %p100 = scmp.eq.s32.totalorder %s18, 0
    %p101 = por %p99, %p100
    %s103 = sadd.s32 %s102, 1
    %p106 = scmp.eq.s32.totalorder %s12, 3
    %p107 = scmp.ne.s32.totalorder %s102, %s104
    %p108 = scmp.eq.s32.totalorder %s12, 0
    %p109 = por %p107, %p108
    %p110 = scmp.ne.s32.totalorder %s102, %s104
    %p111 = scmp.eq.s32.totalorder %s17, 3
    %p112 = por %p110, %p111
    %p113 = scmp.ne.s32.totalorder %s104, %s105
    %p114 = scmp.eq.s32.totalorder %s17, 0
    %p115 = por %p113, %p114
    %p116 = scmp.ne.s32.totalorder %s104, %s105
    %p117 = scmp.eq.s32.totalorder %s18, 3
    %p118 = por %p116, %p117
    %p120 = scmp.ne.s32.totalorder %s105, %s119
    %p121 = scmp.eq.s32.totalorder %s18, 0
    %p122 = por %p120, %p121
    %s123 = ssub.s32 %s19, %s31
    %s124 = ssub.s32 %s20, %s27
    %s125 = sor.u32 %s123, %s124
    %p126 = scmp.eq.s32.totalorder %s125, 0
    %s128 = sadd.s32 %s127, 1
    %s129 = scalar_select %p126, %s127, %s128
    %p132 = pneg %p126
    %p133 = scmp.eq.s32.totalorder %s12, 3
    %p134 = por %p132, %p133
    %p135 = scmp.ne.s32.totalorder %s127, %s130
    %p136 = scmp.eq.s32.totalorder %s12, 0
    %p137 = por %p135, %p136
    %p138 = scmp.ne.s32.totalorder %s127, %s130
    %p139 = scmp.eq.s32.totalorder %s17, 3
    %p140 = por %p138, %p139
    %p141 = scmp.ne.s32.totalorder %s130, %s131
    %p142 = scmp.eq.s32.totalorder %s17, 0
    %p143 = por %p141, %p142
    %p144 = scmp.ne.s32.totalorder %s130, %s131
    %p145 = scmp.eq.s32.totalorder %s18, 3
    %p146 = por %p144, %p145
    %p148 = scmp.ne.s32.totalorder %s131, %s147
    %p149 = scmp.eq.s32.totalorder %s18, 0
    %p150 = por %p148, %p149
    %s151 = ssub.s32 %s19, %s31
    %s152 = ssub.s32 %s20, %s27
    %s153 = sor.u32 %s151, %s152
    %p154 = scmp.eq.s32.totalorder %s153, 0
    %s156 = sadd.s32 %s155, 1
    %s157 = scalar_select %p154, %s155, %s156
    %p160 = pneg %p154
    %p161 = scmp.eq.s32.totalorder %s12, 3
    %p162 = por %p160, %p161
    %p163 = scmp.ne.s32.totalorder %s155, %s158
    %p164 = scmp.eq.s32.totalorder %s12, 0
    %p165 = por %p163, %p164
    %p166 = scmp.ne.s32.totalorder %s155, %s158
    %p167 = scmp.eq.s32.totalorder %s17, 3
    %p168 = por %p166, %p167
    %p169 = scmp.ne.s32.totalorder %s158, %s159
    %p170 = scmp.eq.s32.totalorder %s17, 0
    %p171 = por %p169, %p170
    %p172 = scmp.ne.s32.totalorder %s158, %s159
    %p173 = scmp.eq.s32.totalorder %s18, 3
    %p174 = por %p172, %p173
    %p176 = scmp.ne.s32.totalorder %s159, %s175
    %p177 = scmp.eq.s32.totalorder %s18, 0
    %p178 = por %p176, %p177
    %p179 = scmp.le.s32.totalorder 1, %s12
    %p180 = scmp.lt.s32.totalorder %s12, 5
    %p181 = pnand %p179, %p180
    %p182 = pneg %p181
    // Predicated region
    $region9: #{_lambda_.6} parent=5 // pred_check
      _
    $region10: #{_lambda_.6} parent=5 // pred_check_branch
      %184 = sbr.rel (%p181) target = $region12
    $region11: #{_lambda_.6} parent=5 // pred_region
      %s185 = ssub.s32 %s12, 1
      // Predicated region
      $region13: #{_lambda_.6} parent=11 // pred_check
        %p186 = pneg %p73
      $region14: #{_lambda_.6} parent=11 // pred_check_branch
        %188 = sbr.rel (%p186) target = $region16
      $region15: #{_lambda_.6} parent=11 // pred_region
        _
      $region16: #{_lambda_.6} parent=11 // pred_fallthru
        _
      // Predicated region
      $region17: #{_lambda_.6} parent=11 // pred_check
        %p189 = pneg %p94
      $region18: #{_lambda_.6} parent=11 // pred_check_branch
        %191 = sbr.rel (%p189) target = $region20
      $region19: #{_lambda_.6} parent=11 // pred_region
        _
      $region20: #{_lambda_.6} parent=11 // pred_fallthru
        _
      // Predicated region
      $region21: #{_lambda_.6} parent=11 // pred_check
        %p192 = pneg %p115
      $region22: #{_lambda_.6} parent=11 // pred_check_branch
        %194 = sbr.rel (%p192) target = $region24
      $region23: #{_lambda_.6} parent=11 // pred_region
        _
      $region24: #{_lambda_.6} parent=11 // pred_fallthru
        _
    $region12: #{_lambda_.6} parent=5 // pred_fallthru
      _
    %p195 = scmp.lt.s32.totalorder %s12, 4
    // Predicated region
    $region25: #{_lambda_.6} parent=5 // pred_check
      %p196 = pneg %p195
    $region26: #{_lambda_.6} parent=5 // pred_check_branch
      %198 = sbr.rel (%p196) target = $region28
    $region27: #{_lambda_.6} parent=5 // pred_region
      // Predicated region
      $region29: #{_lambda_.6} parent=27 // pred_check
        %p199 = pneg %p46
      $region30: #{_lambda_.6} parent=27 // pred_check_branch
        %201 = sbr.rel (%p199) target = $region32
      $region31: #{_lambda_.6} parent=27 // pred_region
        %s202 = smul.u32 16, %s20
        %p203 = scmp.lt.s32.totalorder %s19, 1
        %s204 = scalar_select %p203, %s19, 1
        %p205 = scmp.lt.s32.totalorder %s202, 31
        %s206 = scalar_select %p205, %s202, 31
        %s207 = smul.addr %s204, 32
        %s208 = sadd.s32 %s206, %s207
        %s209 = smul.addr %s208, 4
        %s210 = scalar_lea.vmem %s0, %s209
        %s211 = smul.u32 16, %s20
      $region32: #{_lambda_.6} parent=27 // pred_fallthru
        _
    $region28: #{_lambda_.6} parent=5 // pred_fallthru
      _
    %p212 = scmp.le.s32.totalorder 1, %s12
    %p213 = scmp.lt.s32.totalorder %s12, 5
    %p214 = pnand %p212, %p213
    %p215 = pneg %p214
    // Predicated region
    $region33: #{_lambda_.6} parent=5 // pred_check
      _
    $region34: #{_lambda_.6} parent=5 // pred_check_branch
      %217 = sbr.rel (%p214) target = $region36
    $region35: #{_lambda_.6} parent=5 // pred_region
      %s218 = ssub.s32 %s12, 1
      %s219 = smul.u32 16, %s22
      %p220 = scmp.lt.s32.totalorder %s21, 1
      %s221 = scalar_select %p220, %s21, 1
      %p222 = scmp.lt.s32.totalorder %s219, 31
      %s223 = scalar_select %p222, %s219, 31
      %s224 = smul.addr %s221, 32
      %s225 = sadd.s32 %s223, %s224
      %s226 = smul.addr %s225, 4
      %s227 = scalar_lea.vmem %s0, %s226
      %p228 = pneg %p52
      %p229 = pneg %p49
      %p230 = pneg %p73
      %p231 = pneg %p70
      %p232 = pneg %p94
      %p233 = pneg %p91
      %p234 = pneg %p115
      %p235 = pneg %p112
      %p236 = pneg %p143
      %p237 = pneg %p140
      %s238 = smul.u32 16, %s22
      %p239 = scmp.lt.s32.totalorder %s21, 1
      %s240 = scalar_select %p239, %s21, 1
      %p241 = scmp.lt.s32.totalorder %s238, 31
      %s242 = scalar_select %p241, %s238, 31
      %s243 = smul.addr %s240, 32
      %s244 = sadd.s32 %s242, %s243
      %s245 = smul.addr %s244, 4
      %s246 = scalar_lea.vmem %s4, %s245
      %p247 = pneg %p171
      %p248 = pneg %p168
      %p249 = scmp.lt.s32.totalorder %s21, 1
      %s250 = scalar_select %p249, %s21, 1
      %p251 = scmp.lt.s32.totalorder %s22, 1
      %s252 = scalar_select %p251, %s22, 1
      %s253 = smul.addr %s250, 2
      %s254 = sadd.s32 %s252, %s253
      %s255 = smul.addr %s254, 2
      %s256 = scalar_lea.vmem %s5, %s255
      %s257 = smul.u32 16, %s22
      %p258 = scmp.lt.s32.totalorder %s21, 1
      %s259 = scalar_select %p258, %s21, 1
      %p260 = scmp.lt.s32.totalorder %s257, 31
      %s261 = scalar_select %p260, %s257, 31
      %s262 = smul.addr %s259, 32
      %s263 = sadd.s32 %s261, %s262
      %s264 = smul.addr %s263, 4
      %s265 = scalar_lea.vmem %s0, %s264
      %s266 = smul.u32 16, %s22
      %s267 = smul.u32 16, %s22
      %p268 = scmp.lt.s32.totalorder %s21, 1
      %s269 = scalar_select %p268, %s21, 1
      %p270 = scmp.lt.s32.totalorder %s267, 31
      %s271 = scalar_select %p270, %s267, 31
      %s272 = smul.addr %s269, 32
      %s273 = sadd.s32 %s271, %s272
      %s274 = smul.addr %s273, 4
      %s275 = scalar_lea.vmem %s4, %s274
      %s276 = smul.u32 16, %s22
      %p277 = scmp.lt.s32.totalorder %s21, 1
      %s278 = scalar_select %p277, %s21, 1
      %p279 = scmp.lt.s32.totalorder %s22, 1
      %s280 = scalar_select %p279, %s22, 1
      %s281 = smul.addr %s278, 2
      %s282 = sadd.s32 %s280, %s281
      %s283 = smul.addr %s282, 2
      %s284 = scalar_lea.vmem %s5, %s283
      %v286 = vld [vmem:[%s265] sm:$0xf]
      %v287 = vld [vmem:[%s265 + $0x4] sm:$0xf]
      %v288 = vld [vmem:[%s265 + $0x8] sm:$0xf]
      %v289 = vld [vmem:[%s265 + $0xc] sm:$0xf]
      %v290 = vld [vmem:[%s265 + $0x10] sm:$0xf]
      %v291 = vld [vmem:[%s265 + $0x14] sm:$0xf]
      %v292 = vld [vmem:[%s265 + $0x18] sm:$0xf]
      %v293 = vld [vmem:[%s265 + $0x1c] sm:$0xf]
      %v294 = vld [vmem:[%s265 + $0x20] sm:$0xf]
      %v295 = vld [vmem:[%s265 + $0x24] sm:$0xf]
      %v296 = vld [vmem:[%s265 + $0x28] sm:$0xf]
      %v297 = vld [vmem:[%s265 + $0x2c] sm:$0xf]
      %v298 = vld [vmem:[%s265 + $0x30] sm:$0xf]
      %v299 = vld [vmem:[%s265 + $0x34] sm:$0xf]
      %v300 = vld [vmem:[%s265 + $0x38] sm:$0xf]
      %v301 = vld [vmem:[%s265 + $0x3c] sm:$0xf]
      %v302 = vunpack.c.l.bf16 %v286
      %v303 = vunpack.c.l.bf16 %v287
      %v304 = vunpack.c.l.bf16 %v288
      %v305 = vunpack.c.l.bf16 %v289
      %v306 = vunpack.c.l.bf16 %v290
      %v307 = vunpack.c.l.bf16 %v291
      %v308 = vunpack.c.l.bf16 %v292
      %v309 = vunpack.c.l.bf16 %v293
      %v310 = vunpack.c.l.bf16 %v294
      %v311 = vunpack.c.l.bf16 %v295
      %v312 = vunpack.c.l.bf16 %v296
      %v313 = vunpack.c.l.bf16 %v297
      %v314 = vunpack.c.l.bf16 %v298
      %v315 = vunpack.c.l.bf16 %v299
      %v316 = vunpack.c.l.bf16 %v300
      %v317 = vunpack.c.l.bf16 %v301
      %v318 = vld [vmem:[%s1] sm:$0x1]
      %v320 = vperm.slane %v318, 0
      %v322 = vmul.f32 %v302, %v320
      %v323 = vmul.f32 %v303, %v320
      %v324 = vmul.f32 %v304, %v320
      %v325 = vmul.f32 %v305, %v320
      %v326 = vmul.f32 %v306, %v320
      %v327 = vmul.f32 %v307, %v320
      %v328 = vmul.f32 %v308, %v320
      %v329 = vmul.f32 %v309, %v320
      %v330 = vmul.f32 %v310, %v320
      %v331 = vmul.f32 %v311, %v320
      %v332 = vmul.f32 %v312, %v320
      %v333 = vmul.f32 %v313, %v320
      %v334 = vmul.f32 %v314, %v320
      %v335 = vmul.f32 %v315, %v320
      %v336 = vmul.f32 %v316, %v320
      %v337 = vmul.f32 %v317, %v320
      %v338 = vld [vmem:[%s2] sm:$0x1]
      %v340 = vperm.slane %v338, 0
      %v342 = vadd.f32 %v322, %v340
      %v343 = vadd.f32 %v323, %v340
      %v344 = vadd.f32 %v324, %v340
      %v345 = vadd.f32 %v325, %v340
      %v346 = vadd.f32 %v326, %v340
      %v347 = vadd.f32 %v327, %v340
      %v348 = vadd.f32 %v328, %v340
      %v349 = vadd.f32 %v329, %v340
      %v350 = vadd.f32 %v330, %v340
      %v351 = vadd.f32 %v331, %v340
      %v352 = vadd.f32 %v332, %v340
      %v353 = vadd.f32 %v333, %v340
      %v354 = vadd.f32 %v334, %v340
      %v355 = vadd.f32 %v335, %v340
      %v356 = vadd.f32 %v336, %v340
      %v357 = vadd.f32 %v337, %v340
      %v358 = vmax.f32 %v342, 0.0
      %v359 = vmax.f32 %v343, 0.0
      %v360 = vmax.f32 %v344, 0.0
      %v361 = vmax.f32 %v345, 0.0
      %v362 = vmax.f32 %v346, 0.0
      %v363 = vmax.f32 %v347, 0.0
      %v364 = vmax.f32 %v348, 0.0
      %v365 = vmax.f32 %v349, 0.0
      %v366 = vmax.f32 %v350, 0.0
      %v367 = vmax.f32 %v351, 0.0
      %v368 = vmax.f32 %v352, 0.0
      %v369 = vmax.f32 %v353, 0.0
      %v370 = vmax.f32 %v354, 0.0
      %v371 = vmax.f32 %v355, 0.0
      %v372 = vmax.f32 %v356, 0.0
      %v373 = vmax.f32 %v357, 0.0
      %v374 = vpack.c.bf16 %v359, %v358
      %v375 = vpack.c.bf16 %v361, %v360
      %v376 = vpack.c.bf16 %v363, %v362
      %v377 = vpack.c.bf16 %v365, %v364
      %v378 = vpack.c.bf16 %v367, %v366
      %v379 = vpack.c.bf16 %v369, %v368
      %v380 = vpack.c.bf16 %v371, %v370
      %v381 = vpack.c.bf16 %v373, %v372
      %v382 = vld [vmem:[%s3] sm:$0x3]
      %vm383 = vcmask 31744
      %v385 = vsel %vm383, %v374, 0
      %v388 = vsel %vm383, %v375, 0
      %v391 = vsel %vm383, %v376, 0
      %v394 = vsel %vm383, %v377, 0
      %v397 = vsel %vm383, %v378, 0
      %v400 = vsel %vm383, %v379, 0
      %v403 = vsel %vm383, %v380, 0
      %v406 = vsel %vm383, %v381, 0
      %vm408 = vcmask 1041408
      %v410 = vsel %vm408, %v382, 0
      %412 = vmatpush.bf16.msra.mxu0 0
      %413 = vmatpush.bf16.msra.mxu0 0
      %414 = vmatpush.bf16.msra.mxu0 0
      %415 = vmatpush.bf16.msra.mxu0 0
      %416 = vmatpush.bf16.msra.mxu0 0
      %417 = vmatpush.bf16.msra.mxu0 0
      %418 = vmatpush.bf16.msra.mxu0 0
      %419 = vmatpush.bf16.msra.mxu0 %v410
      %420 = vmatmul.bf16.gmra.mxu0 %v385
      %v421 = vpop.f32.mrf.mxu0
      %v422 = vadd.f32 0.0, %v421
      %v423 = vpop.f32.mrf.mxu0
      %v424 = vadd.f32 0.0, %v423
      %425 = vmatmul.bf16.gmra.mxu0 %v388
      %v426 = vpop.f32.mrf.mxu0
      %v427 = vadd.f32 0.0, %v426
      %v428 = vpop.f32.mrf.mxu0
      %v429 = vadd.f32 0.0, %v428
      %430 = vmatmul.bf16.gmra.mxu0 %v391
      %v431 = vpop.f32.mrf.mxu0
      %v432 = vadd.f32 0.0, %v431
      %v433 = vpop.f32.mrf.mxu0
      %v434 = vadd.f32 0.0, %v433
      %435 = vmatmul.bf16.gmra.mxu0 %v394
      %v436 = vpop.f32.mrf.mxu0
      %v437 = vadd.f32 0.0, %v436
      %v438 = vpop.f32.mrf.mxu0
      %v439 = vadd.f32 0.0, %v438
      %440 = vmatmul.bf16.gmra.mxu0 %v397
      %v441 = vpop.f32.mrf.mxu0
      %v442 = vadd.f32 0.0, %v441
      %v443 = vpop.f32.mrf.mxu0
      %v444 = vadd.f32 0.0, %v443
      %445 = vmatmul.bf16.gmra.mxu0 %v400
      %v446 = vpop.f32.mrf.mxu0
      %v447 = vadd.f32 0.0, %v446
      %v448 = vpop.f32.mrf.mxu0
      %v449 = vadd.f32 0.0, %v448
      %450 = vmatmul.bf16.gmra.mxu0 %v403
      %v451 = vpop.f32.mrf.mxu0
      %v452 = vadd.f32 0.0, %v451
      %v453 = vpop.f32.mrf.mxu0
      %v454 = vadd.f32 0.0, %v453
      %455 = vmatmul.bf16.gmra.mxu0 %v406
      %v456 = vpop.f32.mrf.mxu0
      %v457 = vadd.f32 0.0, %v456
      %v458 = vpop.f32.mrf.mxu0
      %v459 = vadd.f32 0.0, %v458
      %460 = vdwg.mxu0
      %v461 = vpack.c.bf16 %v422, %v422
      %v462 = vpack.c.bf16 %v424, %v424
      %v463 = vpack.c.bf16 %v427, %v427
      %v464 = vpack.c.bf16 %v429, %v429
      %v465 = vpack.c.bf16 %v432, %v432
      %v466 = vpack.c.bf16 %v434, %v434
      %v467 = vpack.c.bf16 %v437, %v437
      %v468 = vpack.c.bf16 %v439, %v439
      %v469 = vpack.c.bf16 %v442, %v442
      %v470 = vpack.c.bf16 %v444, %v444
      %v471 = vpack.c.bf16 %v447, %v447
      %v472 = vpack.c.bf16 %v449, %v449
      %v473 = vpack.c.bf16 %v452, %v452
      %v474 = vpack.c.bf16 %v454, %v454
      %v475 = vpack.c.bf16 %v457, %v457
      %v476 = vpack.c.bf16 %v459, %v459
      %vm477 = vcmask 125952
      %478 = vst.msk [vmem:[%s275] sm:$0xf] %vm477, %v461
      %479 = vst.msk [vmem:[%s275 + $0x4] sm:$0xf] %vm477, %v462
      %480 = vst.msk [vmem:[%s275 + $0x8] sm:$0xf] %vm477, %v463
      %481 = vst.msk [vmem:[%s275 + $0xc] sm:$0xf] %vm477, %v464
      %482 = vst.msk [vmem:[%s275 + $0x10] sm:$0xf] %vm477, %v465
      %483 = vst.msk [vmem:[%s275 + $0x14] sm:$0xf] %vm477, %v466
      %484 = vst.msk [vmem:[%s275 + $0x18] sm:$0xf] %vm477, %v467
      %485 = vst.msk [vmem:[%s275 + $0x1c] sm:$0xf] %vm477, %v468
      %486 = vst.msk [vmem:[%s275 + $0x20] sm:$0xf] %vm477, %v469
      %487 = vst.msk [vmem:[%s275 + $0x24] sm:$0xf] %vm477, %v470
      %488 = vst.msk [vmem:[%s275 + $0x28] sm:$0xf] %vm477, %v471
      %489 = vst.msk [vmem:[%s275 + $0x2c] sm:$0xf] %vm477, %v472
      %490 = vst.msk [vmem:[%s275 + $0x30] sm:$0xf] %vm477, %v473
      %491 = vst.msk [vmem:[%s275 + $0x34] sm:$0xf] %vm477, %v474
      %492 = vst.msk [vmem:[%s275 + $0x38] sm:$0xf] %vm477, %v475
      %493 = vst.msk [vmem:[%s275 + $0x3c] sm:$0xf] %vm477, %v476
      %vm494 = vcmask 130048
      %v495 = vsel %vm494, %v422, 0.0
      %v496 = vsel %vm494, %v424, 0.0
      %v497 = vadd.f32 %v495, %v496
      %v498 = vsel %vm494, %v427, 0.0
      %v499 = vadd.f32 %v497, %v498
      %v500 = vsel %vm494, %v429, 0.0
      %v501 = vadd.f32 %v499, %v500
      %v502 = vsel %vm494, %v432, 0.0
      %v503 = vadd.f32 %v501, %v502
      %v504 = vsel %vm494, %v434, 0.0
      %v505 = vadd.f32 %v503, %v504
      %v506 = vsel %vm494, %v437, 0.0
      %v507 = vadd.f32 %v505, %v506
      %v508 = vsel %vm494, %v439, 0.0
      %v509 = vadd.f32 %v507, %v508
      %v510 = vsel %vm494, %v442, 0.0
      %v511 = vadd.f32 %v509, %v510
      %v512 = vsel %vm494, %v444, 0.0
      %v513 = vadd.f32 %v511, %v512
      %v514 = vsel %vm494, %v447, 0.0
      %v515 = vadd.f32 %v513, %v514
      %v516 = vsel %vm494, %v449, 0.0
      %v517 = vadd.f32 %v515, %v516
      %v518 = vsel %vm494, %v452, 0.0
      %v519 = vadd.f32 %v517, %v518
      %v520 = vsel %vm494, %v454, 0.0
      %v521 = vadd.f32 %v519, %v520
      %v522 = vsel %vm494, %v457, 0.0
      %v523 = vadd.f32 %v521, %v522
      %v524 = vsel %vm494, %v459, 0.0
      %v525 = vadd.f32 %v523, %v524
      %v526 = vrot.slane %v525, 4
      %v527 = vadd.f32 %v525, %v526
      %v528 = vrot.slane %v527, 2
      %v529 = vadd.f32 %v527, %v528
      %v530 = vrot.slane %v529, 1
      %v531 = vadd.f32 %v529, %v530
      %v532 = vmul.f32 %v422, %v422
      %v533 = vmul.f32 %v424, %v424
      %v534 = vmul.f32 %v427, %v427
      %v535 = vmul.f32 %v429, %v429
      %v536 = vmul.f32 %v432, %v432
      %v537 = vmul.f32 %v434, %v434
      %v538 = vmul.f32 %v437, %v437
      %v539 = vmul.f32 %v439, %v439
      %v540 = vmul.f32 %v442, %v442
      %v541 = vmul.f32 %v444, %v444
      %v542 = vmul.f32 %v447, %v447
      %v543 = vmul.f32 %v449, %v449
      %v544 = vmul.f32 %v452, %v452
      %v545 = vmul.f32 %v454, %v454
      %v546 = vmul.f32 %v457, %v457
      %v547 = vmul.f32 %v459, %v459
      %v548 = vsel %vm494, %v532, 0.0
      %v549 = vsel %vm494, %v533, 0.0
      %v550 = vadd.f32 %v548, %v549
      %v551 = vsel %vm494, %v534, 0.0
      %v552 = vadd.f32 %v550, %v551
      %v553 = vsel %vm494, %v535, 0.0
      %v554 = vadd.f32 %v552, %v553
      %v555 = vsel %vm494, %v536, 0.0
      %v556 = vadd.f32 %v554, %v555
      %v557 = vsel %vm494, %v537, 0.0
      %v558 = vadd.f32 %v556, %v557
      %v559 = vsel %vm494, %v538, 0.0
      %v560 = vadd.f32 %v558, %v559
      %v561 = vsel %vm494, %v539, 0.0
      %v562 = vadd.f32 %v560, %v561
      %v563 = vsel %vm494, %v540, 0.0
      %v564 = vadd.f32 %v562, %v563
      %v565 = vsel %vm494, %v541, 0.0
      %v566 = vadd.f32 %v564, %v565
      %v567 = vsel %vm494, %v542, 0.0
      %v568 = vadd.f32 %v566, %v567
      %v569 = vsel %vm494, %v543, 0.0
      %v570 = vadd.f32 %v568, %v569
      %v571 = vsel %vm494, %v544, 0.0
      %v572 = vadd.f32 %v570, %v571
      %v573 = vsel %vm494, %v545, 0.0
      %v574 = vadd.f32 %v572, %v573
      %v575 = vsel %vm494, %v546, 0.0
      %v576 = vadd.f32 %v574, %v575
      %v577 = vsel %vm494, %v547, 0.0
      %v578 = vadd.f32 %v576, %v577
      %v579 = vrot.slane %v578, 4
      %v580 = vadd.f32 %v578, %v579
      %v581 = vrot.slane %v580, 2
      %v582 = vadd.f32 %v580, %v581
      %v583 = vrot.slane %v582, 1
      %v584 = vadd.f32 %v582, %v583
      %vm585 = vcmask 1040384
      %v586 = vsel %vm585, %v531, %v584
      %vm587 = vcmask 123904
      %588 = vst.msk [vmem:[%s284] sm:$0x3] %vm587, %v586
      %s589 = smul.u32 16, %s22
      %p590 = scmp.lt.s32.totalorder %s21, 1
      %s591 = scalar_select %p590, %s21, 1
      %p592 = scmp.lt.s32.totalorder %s589, 31
      %s593 = scalar_select %p592, %s589, 31
      %s594 = smul.addr %s591, 32
      %s595 = sadd.s32 %s593, %s594
      %s596 = smul.addr %s595, 4
      %s597 = scalar_lea.vmem %s4, %s596
      %p598 = scmp.lt.s32.totalorder %s21, 1
      %s599 = scalar_select %p598, %s21, 1
      %p600 = scmp.lt.s32.totalorder %s22, 1
      %s601 = scalar_select %p600, %s22, 1
      %s602 = smul.addr %s599, 2
      %s603 = sadd.s32 %s601, %s602
      %s604 = smul.addr %s603, 2
      %s605 = scalar_lea.vmem %s5, %s604
      // Predicated region
      $region37: #{_lambda_.6} parent=35 // pred_check
        %p606 = pneg %p140
      $region38: #{_lambda_.6} parent=35 // pred_check_branch
        %608 = sbr.rel (%p606) target = $region40
      $region39: #{_lambda_.6} parent=35 // pred_region
        %s609 = smul.u32 16, %s22
      $region40: #{_lambda_.6} parent=35 // pred_fallthru
        _
      // Predicated region
      $region41: #{_lambda_.6} parent=35 // pred_check
        %p610 = pneg %p168
      $region42: #{_lambda_.6} parent=35 // pred_check_branch
        %612 = sbr.rel (%p610) target = $region44
      $region43: #{_lambda_.6} parent=35 // pred_region
        _
      $region44: #{_lambda_.6} parent=35 // pred_fallthru
        _
    $region36: #{_lambda_.6} parent=5 // pred_fallthru
      _
    %p613 = scmp.le.s32.totalorder 2, %s12
    // Predicated region
    $region45: #{_lambda_.6} parent=5 // pred_check
      %p614 = pneg %p613
    $region46: #{_lambda_.6} parent=5 // pred_check_branch
      %616 = sbr.rel (%p614) target = $region48
    $region47: #{_lambda_.6} parent=5 // pred_region
      %s617 = ssub.s32 %s12, 2
      // Predicated region
      $region49: #{_lambda_.6} parent=47 // pred_check
        %p618 = pneg %p146
      $region50: #{_lambda_.6} parent=47 // pred_check_branch
        %620 = sbr.rel (%p618) target = $region52
      $region51: #{_lambda_.6} parent=47 // pred_region
        %s621 = smul.u32 16, %s24
        %p622 = scmp.lt.s32.totalorder %s23, 1
        %s623 = scalar_select %p622, %s23, 1
        %p624 = scmp.lt.s32.totalorder %s621, 31
        %s625 = scalar_select %p624, %s621, 31
        %s626 = smul.addr %s623, 32
        %s627 = sadd.s32 %s625, %s626
        %s628 = smul.addr %s627, 4
        %s629 = scalar_lea.vmem %s4, %s628
      $region52: #{_lambda_.6} parent=47 // pred_fallthru
        _
      // Predicated region
      $region53: #{_lambda_.6} parent=47 // pred_check
        %p630 = pneg %p174
      $region54: #{_lambda_.6} parent=47 // pred_check_branch
        %632 = sbr.rel (%p630) target = $region56
      $region55: #{_lambda_.6} parent=47 // pred_region
        %p633 = scmp.lt.s32.totalorder %s23, 1
        %s634 = scalar_select %p633, %s23, 1
        %p635 = scmp.lt.s32.totalorder %s24, 1
        %s636 = scalar_select %p635, %s24, 1
        %s637 = smul.addr %s634, 2
        %s638 = sadd.s32 %s636, %s637
        %s639 = smul.addr %s638, 2
        %s640 = scalar_lea.vmem %s5, %s639
      $region56: #{_lambda_.6} parent=47 // pred_fallthru
        _
    $region48: #{_lambda_.6} parent=5 // pred_fallthru
      _
  $region6: #{_lambda_.6} parent=0 // loop_footer
    %s16 = sadd.s32 1, %s12
  $region7: #{_lambda_.6} parent=0 // loop_footer_branch
    %11 = sbr.rel target = $region3
  $region8: #{_lambda_.6} parent=0 // loop_exit
    _

// kernel: _lambda_.7
$region0: #{_lambda_.7}
  #allocation0 [shape = 'u32[]', space=smem, size = 0x4, offset = 0x4, fixed_abs, tag = 'smem constant byte address 0x4 - core index']
  #allocation1 [shape = 'u32[72,128]{1,0:T(1,128)}', space=vmem, size = 0x9000, scoped, tag = 'internal scratch']
  %s0 = inlined_call_operand.vmem [shape: bf16[2,256,16], index: 0, kind: input, shape index: {}]
  %s1 = inlined_call_operand.vmem [shape: bf16[2,256,16], index: 1, kind: input, shape index: {}]
  %s2 = inlined_call_operand.vmem [shape: f32[1,16], index: 2, kind: input, shape index: {}]
  %s3 = inlined_call_operand.vmem [shape: f32[1,16], index: 3, kind: input, shape index: {}]
  %s4 = inlined_call_operand.vmem [shape: f32[2,256,16], index: 4, kind: output, shape index: {}]
  %s5 = sld [smem:[#allocation0]]
  $region49: #{_lambda_.7} parent=0
    _
  %s7 = ssub.s32 1, %s5
  %s8 = scalar_select 0, %s7, %s5
  loop: start=0, step=1, limit=6
  $region2: #{_lambda_.7} parent=0 // loop_pre_header
    _
  $region3: #{_lambda_.7} parent=0 // loop_header
    %s10 = sphi 0, %s14
    %p11 = scmp.ge.s32.totalorder %s10, 6
    %s17 = sphi 0, %s29
    %s18 = sphi 0, %s25
    %s19 = sphi 0, %s17
    %s20 = sphi 0, %s18
    %s21 = sphi 0, %s19
    %s22 = sphi 0, %s20
    %s34 = sphi 0, %s36
    %s37 = sphi 0, %s34
    %s38 = sphi 0, %s37
    %s54 = sphi 0, %s38
    %s62 = sphi 0, %s64
    %s65 = sphi 0, %s62
    %s66 = sphi 0, %s65
    %s82 = sphi 0, %s66
    %s86 = sphi 0, %s86
    %s88 = sphi 0, %s86
    %s89 = sphi 0, %s88
    %s103 = sphi 0, %s89
    %s107 = sphi 0, %s107
    %s109 = sphi 0, %s107
    %s110 = sphi 0, %s109
    %s124 = sphi 0, %s110
    %s132 = sphi 0, %s134
    %s135 = sphi 0, %s132
    %s136 = sphi 0, %s135
    %s152 = sphi 0, %s136
  $region4: #{_lambda_.7} parent=0 // loop_header_branch
    %13 = sbr.rel (%p11) target = $region8
  $region5: #{_lambda_.7} parent=0 // loop_body
    %s15 = ssub.s32 %s10, 1
    %s16 = ssub.s32 %s10, 2
    %s23 = sadd.s32 1, %s18
    %p24 = scmp.ge.s32.totalorder %s23, 2
    %s25 = scalar_select %p24, 0, %s23
    %s26 = sadd.s32 1, %s17
    %s27 = scalar_select %p24, %s26, %s17
    %p28 = scmp.ge.s32.totalorder %s27, 2
    %s29 = scalar_select %p28, 0, %s27
    %s30 = ssub.s32 %s17, %s29
    %s31 = ssub.s32 %s18, %s25
    %s32 = sor.u32 %s30, %s31
    %p33 = scmp.eq.s32.totalorder %s32, 0
    %s35 = sadd.s32 %s34, 1
    %s36 = scalar_select %p33, %s34, %s35
    %p39 = pneg %p33
    %p40 = scmp.eq.s32.totalorder %s10, 3
    %p41 = por %p39, %p40
    %p42 = scmp.ne.s32.totalorder %s34, %s37
    %p43 = scmp.eq.s32.totalorder %s10, 0
    %p44 = por %p42, %p43
    %p45 = scmp.ne.s32.totalorder %s34, %s37
    %p46 = scmp.eq.s32.totalorder %s15, 3
    %p47 = por %p45, %p46
    %p48 = scmp.ne.s32.totalorder %s37, %s38
    %p49 = scmp.eq.s32.totalorder %s15, 0
    %p50 = por %p48, %p49
    %p51 = scmp.ne.s32.totalorder %s37, %s38
    %p52 = scmp.eq.s32.totalorder %s16, 3
    %p53 = por %p51, %p52
    %p55 = scmp.ne.s32.totalorder %s38, %s54
    %p56 = scmp.eq.s32.totalorder %s16, 0
    %p57 = por %p55, %p56
    %s58 = ssub.s32 %s17, %s29
    %s59 = ssub.s32 %s18, %s25
    %s60 = sor.u32 %s58, %s59
    %p61 = scmp.eq.s32.totalorder %s60, 0
    %s63 = sadd.s32 %s62, 1
    %s64 = scalar_select %p61, %s62, %s63
    %p67 = pneg %p61
    %p68 = scmp.eq.s32.totalorder %s10, 3
    %p69 = por %p67, %p68
    %p70 = scmp.ne.s32.totalorder %s62, %s65
    %p71 = scmp.eq.s32.totalorder %s10, 0
    %p72 = por %p70, %p71
    %p73 = scmp.ne.s32.totalorder %s62, %s65
    %p74 = scmp.eq.s32.totalorder %s15, 3
    %p75 = por %p73, %p74
    %p76 = scmp.ne.s32.totalorder %s65, %s66
    %p77 = scmp.eq.s32.totalorder %s15, 0
    %p78 = por %p76, %p77
    %p79 = scmp.ne.s32.totalorder %s65, %s66
    %p80 = scmp.eq.s32.totalorder %s16, 3
    %p81 = por %p79, %p80
    %p83 = scmp.ne.s32.totalorder %s66, %s82
    %p84 = scmp.eq.s32.totalorder %s16, 0
    %p85 = por %p83, %p84
    %s87 = sadd.s32 %s86, 1
    %p90 = scmp.eq.s32.totalorder %s10, 3
    %p91 = scmp.ne.s32.totalorder %s86, %s88
    %p92 = scmp.eq.s32.totalorder %s10, 0
    %p93 = por %p91, %p92
    %p94 = scmp.ne.s32.totalorder %s86, %s88
    %p95 = scmp.eq.s32.totalorder %s15, 3
    %p96 = por %p94, %p95
    %p97 = scmp.ne.s32.totalorder %s88, %s89
    %p98 = scmp.eq.s32.totalorder %s15, 0
    %p99 = por %p97, %p98
    %p100 = scmp.ne.s32.totalorder %s88, %s89
    %p101 = scmp.eq.s32.totalorder %s16, 3
    %p102 = por %p100, %p101
    %p104 = scmp.ne.s32.totalorder %s89, %s103
    %p105 = scmp.eq.s32.totalorder %s16, 0
    %p106 = por %p104, %p105
    %s108 = sadd.s32 %s107, 1
    %p111 = scmp.eq.s32.totalorder %s10, 3
    %p112 = scmp.ne.s32.totalorder %s107, %s109
    %p113 = scmp.eq.s32.totalorder %s10, 0
    %p114 = por %p112, %p113
    %p115 = scmp.ne.s32.totalorder %s107, %s109
    %p116 = scmp.eq.s32.totalorder %s15, 3
    %p117 = por %p115, %p116
    %p118 = scmp.ne.s32.totalorder %s109, %s110
    %p119 = scmp.eq.s32.totalorder %s15, 0
    %p120 = por %p118, %p119
    %p121 = scmp.ne.s32.totalorder %s109, %s110
    %p122 = scmp.eq.s32.totalorder %s16, 3
    %p123 = por %p121, %p122
    %p125 = scmp.ne.s32.totalorder %s110, %s124
    %p126 = scmp.eq.s32.totalorder %s16, 0
    %p127 = por %p125, %p126
    %s128 = ssub.s32 %s17, %s29
    %s129 = ssub.s32 %s18, %s25
    %s130 = sor.u32 %s128, %s129
    %p131 = scmp.eq.s32.totalorder %s130, 0
    %s133 = sadd.s32 %s132, 1
    %s134 = scalar_select %p131, %s132, %s133
    %p137 = pneg %p131
    %p138 = scmp.eq.s32.totalorder %s10, 3
    %p139 = por %p137, %p138
    %p140 = scmp.ne.s32.totalorder %s132, %s135
    %p141 = scmp.eq.s32.totalorder %s10, 0
    %p142 = por %p140, %p141
    %p143 = scmp.ne.s32.totalorder %s132, %s135
    %p144 = scmp.eq.s32.totalorder %s15, 3
    %p145 = por %p143, %p144
    %p146 = scmp.ne.s32.totalorder %s135, %s136
    %p147 = scmp.eq.s32.totalorder %s15, 0
    %p148 = por %p146, %p147
    %p149 = scmp.ne.s32.totalorder %s135, %s136
    %p150 = scmp.eq.s32.totalorder %s16, 3
    %p151 = por %p149, %p150
    %p153 = scmp.ne.s32.totalorder %s136, %s152
    %p154 = scmp.eq.s32.totalorder %s16, 0
    %p155 = por %p153, %p154
    %p156 = scmp.le.s32.totalorder 1, %s10
    %p157 = scmp.lt.s32.totalorder %s10, 5
    %p158 = pnand %p156, %p157
    %p159 = pneg %p158
    // Predicated region
    $region9: #{_lambda_.7} parent=5 // pred_check
      _
    $region10: #{_lambda_.7} parent=5 // pred_check_branch
      %161 = sbr.rel (%p158) target = $region12
    $region11: #{_lambda_.7} parent=5 // pred_region
      %s162 = ssub.s32 %s10, 1
      // Predicated region
      $region13: #{_lambda_.7} parent=11 // pred_check
        %p163 = pneg %p99
      $region14: #{_lambda_.7} parent=11 // pred_check_branch
        %165 = sbr.rel (%p163) target = $region16
      $region15: #{_lambda_.7} parent=11 // pred_region
        _
      $region16: #{_lambda_.7} parent=11 // pred_fallthru
        _
      // Predicated region
      $region17: #{_lambda_.7} parent=11 // pred_check
        %p166 = pneg %p120
      $region18: #{_lambda_.7} parent=11 // pred_check_branch
        %168 = sbr.rel (%p166) target = $region20
      $region19: #{_lambda_.7} parent=11 // pred_region
        _
      $region20: #{_lambda_.7} parent=11 // pred_fallthru
        _
    $region12: #{_lambda_.7} parent=5 // pred_fallthru
      _
    %p169 = scmp.lt.s32.totalorder %s10, 4
    // Predicated region
    $region21: #{_lambda_.7} parent=5 // pred_check
      %p170 = pneg %p169
    $region22: #{_lambda_.7} parent=5 // pred_check_branch
      %172 = sbr.rel (%p170) target = $region24
    $region23: #{_lambda_.7} parent=5 // pred_region
      // Predicated region
      $region25: #{_lambda_.7} parent=23 // pred_check
        %p173 = pneg %p44
      $region26: #{_lambda_.7} parent=23 // pred_check_branch
        %175 = sbr.rel (%p173) target = $region28
      $region27: #{_lambda_.7} parent=23 // pred_region
        %s176 = smul.u32 16, %s18
        %p177 = scmp.lt.s32.totalorder %s17, 1
        %s178 = scalar_select %p177, %s17, 1
        %p179 = scmp.lt.s32.totalorder %s176, 31
        %s180 = scalar_select %p179, %s176, 31
        %s181 = smul.addr %s178, 32
        %s182 = sadd.s32 %s180, %s181
        %s183 = smul.addr %s182, 4
        %s184 = scalar_lea.vmem %s0, %s183
        %s185 = smul.u32 16, %s18
      $region28: #{_lambda_.7} parent=23 // pred_fallthru
        _
      // Predicated region
      $region29: #{_lambda_.7} parent=23 // pred_check
        %p186 = pneg %p72
      $region30: #{_lambda_.7} parent=23 // pred_check_branch
        %188 = sbr.rel (%p186) target = $region32
      $region31: #{_lambda_.7} parent=23 // pred_region
        %s189 = smul.u32 16, %s18
        %p190 = scmp.lt.s32.totalorder %s17, 1
        %s191 = scalar_select %p190, %s17, 1
        %p192 = scmp.lt.s32.totalorder %s189, 31
        %s193 = scalar_select %p192, %s189, 31
        %s194 = smul.addr %s191, 32
        %s195 = sadd.s32 %s193, %s194
        %s196 = smul.addr %s195, 4
        %s197 = scalar_lea.vmem %s1, %s196
        %s198 = smul.u32 16, %s18
      $region32: #{_lambda_.7} parent=23 // pred_fallthru
        _
    $region24: #{_lambda_.7} parent=5 // pred_fallthru
      _
    %p199 = scmp.le.s32.totalorder 1, %s10
    %p200 = scmp.lt.s32.totalorder %s10, 5
    %p201 = pnand %p199, %p200
    %p202 = pneg %p201
    // Predicated region
    $region33: #{_lambda_.7} parent=5 // pred_check
      _
    $region34: #{_lambda_.7} parent=5 // pred_check_branch
      %204 = sbr.rel (%p201) target = $region36
    $region35: #{_lambda_.7} parent=5 // pred_region
      %s205 = ssub.s32 %s10, 1
      %s206 = smul.u32 16, %s20
      %p207 = scmp.lt.s32.totalorder %s19, 1
      %s208 = scalar_select %p207, %s19, 1
      %p209 = scmp.lt.s32.totalorder %s206, 31
      %s210 = scalar_select %p209, %s206, 31
      %s211 = smul.addr %s208, 32
      %s212 = sadd.s32 %s210, %s211
      %s213 = smul.addr %s212, 4
      %s214 = scalar_lea.vmem %s0, %s213
      %p215 = pneg %p50
      %p216 = pneg %p47
      %s217 = smul.u32 16, %s20
      %p218 = scmp.lt.s32.totalorder %s19, 1
      %s219 = scalar_select %p218, %s19, 1
      %p220 = scmp.lt.s32.totalorder %s217, 31
      %s221 = scalar_select %p220, %s217, 31
      %s222 = smul.addr %s219, 32
      %s223 = sadd.s32 %s221, %s222
      %s224 = smul.addr %s223, 4
      %s225 = scalar_lea.vmem %s1, %s224
      %p226 = pneg %p78
      %p227 = pneg %p75
      %p228 = pneg %p99
      %p229 = pneg %p96
      %p230 = pneg %p120
      %p231 = pneg %p117
      %p232 = pneg %p148
      %p233 = pneg %p145
      %s234 = smul.u32 16, %s20
      %p235 = scmp.lt.s32.totalorder %s19, 1
      %s236 = scalar_select %p235, %s19, 1
      %p237 = scmp.lt.s32.totalorder %s234, 31
      %s238 = scalar_select %p237, %s234, 31
      %s239 = smul.addr %s236, 32
      %s240 = sadd.s32 %s238, %s239
      %s241 = smul.addr %s240, 8
      %s242 = scalar_lea.vmem %s4, %s241
      %s243 = smul.u32 16, %s20
      %p244 = scmp.lt.s32.totalorder %s19, 1
      %s245 = scalar_select %p244, %s19, 1
      %p246 = scmp.lt.s32.totalorder %s243, 31
      %s247 = scalar_select %p246, %s243, 31
      %s248 = smul.addr %s245, 32
      %s249 = sadd.s32 %s247, %s248
      %s250 = smul.addr %s249, 4
      %s251 = scalar_lea.vmem %s0, %s250
      %s252 = smul.u32 16, %s20
      %s253 = smul.u32 16, %s20
      %p254 = scmp.lt.s32.totalorder %s19, 1
      %s255 = scalar_select %p254, %s19, 1
      %p256 = scmp.lt.s32.totalorder %s253, 31
      %s257 = scalar_select %p256, %s253, 31
      %s258 = smul.addr %s255, 32
      %s259 = sadd.s32 %s257, %s258
      %s260 = smul.addr %s259, 4
      %s261 = scalar_lea.vmem %s1, %s260
      %s262 = smul.u32 16, %s20
      %s263 = smul.u32 16, %s20
      %p264 = scmp.lt.s32.totalorder %s19, 1
      %s265 = scalar_select %p264, %s19, 1
      %p266 = scmp.lt.s32.totalorder %s263, 31
      %s267 = scalar_select %p266, %s263, 31
      %s268 = smul.addr %s265, 32
      %s269 = sadd.s32 %s267, %s268
      %s270 = smul.addr %s269, 8
      %s271 = scalar_lea.vmem %s4, %s270
      %s272 = smul.u32 16, %s20
      %v273 = vld [vmem:[%s251] sm:$0xf]
      %v274 = vld [vmem:[%s251 + $0x4] sm:$0xf]
      %v275 = vld [vmem:[%s251 + $0x8] sm:$0xf]
      %v276 = vld [vmem:[%s251 + $0xc] sm:$0xf]
      %v277 = vld [vmem:[%s251 + $0x10] sm:$0xf]
      %v278 = vld [vmem:[%s251 + $0x14] sm:$0xf]
      %v279 = vld [vmem:[%s251 + $0x18] sm:$0xf]
      %v280 = vld [vmem:[%s251 + $0x1c] sm:$0xf]
      %v281 = vld [vmem:[%s251 + $0x20] sm:$0xf]
      %v282 = vld [vmem:[%s251 + $0x24] sm:$0xf]
      %v283 = vld [vmem:[%s251 + $0x28] sm:$0xf]
      %v284 = vld [vmem:[%s251 + $0x2c] sm:$0xf]
      %v285 = vld [vmem:[%s251 + $0x30] sm:$0xf]
      %v286 = vld [vmem:[%s251 + $0x34] sm:$0xf]
      %v287 = vld [vmem:[%s251 + $0x38] sm:$0xf]
      %v288 = vld [vmem:[%s251 + $0x3c] sm:$0xf]
      %v289 = vunpack.c.l.bf16 %v273
      %v290 = vunpack.c.l.bf16 %v274
      %v291 = vunpack.c.l.bf16 %v275
      %v292 = vunpack.c.l.bf16 %v276
      %v293 = vunpack.c.l.bf16 %v277
      %v294 = vunpack.c.l.bf16 %v278
      %v295 = vunpack.c.l.bf16 %v279
      %v296 = vunpack.c.l.bf16 %v280
      %v297 = vunpack.c.l.bf16 %v281
      %v298 = vunpack.c.l.bf16 %v282
      %v299 = vunpack.c.l.bf16 %v283
      %v300 = vunpack.c.l.bf16 %v284
      %v301 = vunpack.c.l.bf16 %v285
      %v302 = vunpack.c.l.bf16 %v286
      %v303 = vunpack.c.l.bf16 %v287
      %v304 = vunpack.c.l.bf16 %v288
      %v305 = vld [vmem:[%s2] sm:$0x1]
      %v307 = vperm.slane %v305, 0
      %v309 = vmul.f32 %v289, %v307
      %v310 = vmul.f32 %v290, %v307
      %v311 = vmul.f32 %v291, %v307
      %v312 = vmul.f32 %v292, %v307
      %v313 = vmul.f32 %v293, %v307
      %v314 = vmul.f32 %v294, %v307
      %v315 = vmul.f32 %v295, %v307
      %v316 = vmul.f32 %v296, %v307
      %v317 = vmul.f32 %v297, %v307
      %v318 = vmul.f32 %v298, %v307
      %v319 = vmul.f32 %v299, %v307
      %v320 = vmul.f32 %v300, %v307
      %v321 = vmul.f32 %v301, %v307
      %v322 = vmul.f32 %v302, %v307
      %v323 = vmul.f32 %v303, %v307
      %v324 = vmul.f32 %v304, %v307
      %v325 = vld [vmem:[%s3] sm:$0x1]
      %v327 = vperm.slane %v325, 0
      %v329 = vadd.f32 %v309, %v327
      %v330 = vadd.f32 %v310, %v327
      %v331 = vadd.f32 %v311, %v327
      %v332 = vadd.f32 %v312, %v327
      %v333 = vadd.f32 %v313, %v327
      %v334 = vadd.f32 %v314, %v327
      %v335 = vadd.f32 %v315, %v327
      %v336 = vadd.f32 %v316, %v327
      %v337 = vadd.f32 %v317, %v327
      %v338 = vadd.f32 %v318, %v327
      %v339 = vadd.f32 %v319, %v327
      %v340 = vadd.f32 %v320, %v327
      %v341 = vadd.f32 %v321, %v327
      %v342 = vadd.f32 %v322, %v327
      %v343 = vadd.f32 %v323, %v327
      %v344 = vadd.f32 %v324, %v327
      %v345 = vld [vmem:[%s261] sm:$0xf]
      %v346 = vld [vmem:[%s261 + $0x4] sm:$0xf]
      %v347 = vld [vmem:[%s261 + $0x8] sm:$0xf]
      %v348 = vld [vmem:[%s261 + $0xc] sm:$0xf]
      %v349 = vld [vmem:[%s261 + $0x10] sm:$0xf]
      %v350 = vld [vmem:[%s261 + $0x14] sm:$0xf]
      %v351 = vld [vmem:[%s261 + $0x18] sm:$0xf]
      %v352 = vld [vmem:[%s261 + $0x1c] sm:$0xf]
      %v353 = vld [vmem:[%s261 + $0x20] sm:$0xf]
      %v354 = vld [vmem:[%s261 + $0x24] sm:$0xf]
      %v355 = vld [vmem:[%s261 + $0x28] sm:$0xf]
      %v356 = vld [vmem:[%s261 + $0x2c] sm:$0xf]
      %v357 = vld [vmem:[%s261 + $0x30] sm:$0xf]
      %v358 = vld [vmem:[%s261 + $0x34] sm:$0xf]
      %v359 = vld [vmem:[%s261 + $0x38] sm:$0xf]
      %v360 = vld [vmem:[%s261 + $0x3c] sm:$0xf]
      %v361 = vunpack.c.l.bf16 %v345
      %v362 = vunpack.c.l.bf16 %v346
      %v363 = vunpack.c.l.bf16 %v347
      %v364 = vunpack.c.l.bf16 %v348
      %v365 = vunpack.c.l.bf16 %v349
      %v366 = vunpack.c.l.bf16 %v350
      %v367 = vunpack.c.l.bf16 %v351
      %v368 = vunpack.c.l.bf16 %v352
      %v369 = vunpack.c.l.bf16 %v353
      %v370 = vunpack.c.l.bf16 %v354
      %v371 = vunpack.c.l.bf16 %v355
      %v372 = vunpack.c.l.bf16 %v356
      %v373 = vunpack.c.l.bf16 %v357
      %v374 = vunpack.c.l.bf16 %v358
      %v375 = vunpack.c.l.bf16 %v359
      %v376 = vunpack.c.l.bf16 %v360
      %v377 = vadd.f32 %v329, %v361
      %v378 = vadd.f32 %v330, %v362
      %v379 = vadd.f32 %v331, %v363
      %v380 = vadd.f32 %v332, %v364
      %v381 = vadd.f32 %v333, %v365
      %v382 = vadd.f32 %v334, %v366
      %v383 = vadd.f32 %v335, %v367
      %v384 = vadd.f32 %v336, %v368
      %v385 = vadd.f32 %v337, %v369
      %v386 = vadd.f32 %v338, %v370
      %v387 = vadd.f32 %v339, %v371
      %v388 = vadd.f32 %v340, %v372
      %v389 = vadd.f32 %v341, %v373
      %v390 = vadd.f32 %v342, %v374
      %v391 = vadd.f32 %v343, %v375
      %v392 = vadd.f32 %v344, %v376
      %v393 = vmax.f32 %v377, 0.0
      %v394 = vmax.f32 %v378, 0.0
      %v395 = vmax.f32 %v379, 0.0
      %v396 = vmax.f32 %v380, 0.0
      %v397 = vmax.f32 %v381, 0.0
      %v398 = vmax.f32 %v382, 0.0
      %v399 = vmax.f32 %v383, 0.0
      %v400 = vmax.f32 %v384, 0.0
      %v401 = vmax.f32 %v385, 0.0
      %v402 = vmax.f32 %v386, 0.0
      %v403 = vmax.f32 %v387, 0.0
      %v404 = vmax.f32 %v388, 0.0
      %v405 = vmax.f32 %v389, 0.0
      %v406 = vmax.f32 %v390, 0.0
      %v407 = vmax.f32 %v391, 0.0
      %v408 = vmax.f32 %v392, 0.0
      %vm409 = vcmask 130048
      %410 = vst.msk [vmem:[%s271] sm:$0xff] %vm409, %v393
      %411 = vst.msk [vmem:[%s271 + $0x8] sm:$0xff] %vm409, %v394
      %412 = vst.msk [vmem:[%s271 + $0x10] sm:$0xff] %vm409, %v395
      %413 = vst.msk [vmem:[%s271 + $0x18] sm:$0xff] %vm409, %v396
      %414 = vst.msk [vmem:[%s271 + $0x20] sm:$0xff] %vm409, %v397
      %415 = vst.msk [vmem:[%s271 + $0x28] sm:$0xff] %vm409, %v398
      %416 = vst.msk [vmem:[%s271 + $0x30] sm:$0xff] %vm409, %v399
      %417 = vst.msk [vmem:[%s271 + $0x38] sm:$0xff] %vm409, %v400
      %418 = vst.msk [vmem:[%s271 + $0x40] sm:$0xff] %vm409, %v401
      %419 = vst.msk [vmem:[%s271 + $0x48] sm:$0xff] %vm409, %v402
      %420 = vst.msk [vmem:[%s271 + $0x50] sm:$0xff] %vm409, %v403
      %421 = vst.msk [vmem:[%s271 + $0x58] sm:$0xff] %vm409, %v404
      %422 = vst.msk [vmem:[%s271 + $0x60] sm:$0xff] %vm409, %v405
      %423 = vst.msk [vmem:[%s271 + $0x68] sm:$0xff] %vm409, %v406
      %424 = vst.msk [vmem:[%s271 + $0x70] sm:$0xff] %vm409, %v407
      %425 = vst.msk [vmem:[%s271 + $0x78] sm:$0xff] %vm409, %v408
      %s426 = smul.u32 16, %s20
      %p427 = scmp.lt.s32.totalorder %s19, 1
      %s428 = scalar_select %p427, %s19, 1
      %p429 = scmp.lt.s32.totalorder %s426, 31
      %s430 = scalar_select %p429, %s426, 31
      %s431 = smul.addr %s428, 32
      %s432 = sadd.s32 %s430, %s431
      %s433 = smul.addr %s432, 8
      %s434 = scalar_lea.vmem %s4, %s433
      // Predicated region
      $region37: #{_lambda_.7} parent=35 // pred_check
        %p435 = pneg %p145
      $region38: #{_lambda_.7} parent=35 // pred_check_branch
        %437 = sbr.rel (%p435) target = $region40
      $region39: #{_lambda_.7} parent=35 // pred_region
        %s438 = smul.u32 16, %s20
      $region40: #{_lambda_.7} parent=35 // pred_fallthru
        _
    $region36: #{_lambda_.7} parent=5 // pred_fallthru
      _
    %p439 = scmp.le.s32.totalorder 2, %s10
    // Predicated region
    $region41: #{_lambda_.7} parent=5 // pred_check
      %p440 = pneg %p439
    $region42: #{_lambda_.7} parent=5 // pred_check_branch
      %442 = sbr.rel (%p440) target = $region44
    $region43: #{_lambda_.7} parent=5 // pred_region
      %s443 = ssub.s32 %s10, 2
      // Predicated region
      $region45: #{_lambda_.7} parent=43 // pred_check
        %p444 = pneg %p151
      $region46: #{_lambda_.7} parent=43 // pred_check_branch
        %446 = sbr.rel (%p444) target = $region48
      $region47: #{_lambda_.7} parent=43 // pred_region
        %s447 = smul.u32 16, %s22
        %p448 = scmp.lt.s32.totalorder %s21, 1
        %s449 = scalar_select %p448, %s21, 1
        %p450 = scmp.lt.s32.totalorder %s447, 31
        %s451 = scalar_select %p450, %s447, 31
        %s452 = smul.addr %s449, 32
        %s453 = sadd.s32 %s451, %s452
        %s454 = smul.addr %s453, 8
        %s455 = scalar_lea.vmem %s4, %s454
      $region48: #{_lambda_.7} parent=43 // pred_fallthru
        _
    $region44: #{_lambda_.7} parent=5 // pred_fallthru
      _
  $region6: #{_lambda_.7} parent=0 // loop_footer
    %s14 = sadd.s32 1, %s10
  $region7: #{_lambda_.7} parent=0 // loop_footer_branch
    %9 = sbr.rel target = $region3
  $region8: #{_lambda_.7} parent=0 // loop_exit
    _

// kernel: _lambda_.5
$region0: #{_lambda_.5}
  #allocation0 [shape = 'u32[]', space=smem, size = 0x4, offset = 0x4, fixed_abs, tag = 'smem constant byte address 0x4 - core index']
  #allocation1 [shape = 'u32[72,128]{1,0:T(1,128)}', space=vmem, size = 0x9000, scoped, tag = 'internal scratch']
  #allocation2 [shape = 'bf16[18,18,4]{2,1,0:T(8,128)(2,1)}', space=vmem, size = 0x1b000, scoped, tag = 'scratch operand']
  %s0 = inlined_call_operand.vmem [shape: bf16[2,256,4], index: 0, kind: input, shape index: {}]
  %s1 = inlined_call_operand.vmem [shape: f32[1,4], index: 1, kind: input, shape index: {}]
  %s2 = inlined_call_operand.vmem [shape: f32[1,4], index: 2, kind: input, shape index: {}]
  %s3 = inlined_call_operand.vmem [shape: bf16[9,4,4], index: 3, kind: input, shape index: {}]
  %s4 = inlined_call_operand.vmem [shape: bf16[2,256,4], index: 4, kind: output, shape index: {0}]
  %s5 = inlined_call_operand.vmem [shape: f32[2,2,4], index: 5, kind: output, shape index: {1}]
  %6 = xla_tuple %s4, %s5
  %s7 = sld [smem:[#allocation0]]
  $region57: #{_lambda_.5} parent=0
    _
  %s9 = ssub.s32 1, %s7
  %s10 = scalar_select 0, %s9, %s7
  loop: start=0, step=1, limit=4
  $region2: #{_lambda_.5} parent=0 // loop_pre_header
    _
  $region3: #{_lambda_.5} parent=0 // loop_header
    %s12 = sphi 0, %s16
    %p13 = scmp.ge.s32.totalorder %s12, 4
    %s22 = sphi 0, %s24
    %s25 = sphi 0, %s22
    %s26 = sphi 0, %s25
    %s42 = sphi 0, %s26
    %s46 = sphi 0, %s46
    %s48 = sphi 0, %s46
    %s49 = sphi 0, %s48
    %s63 = sphi 0, %s49
    %s67 = sphi 0, %s67
    %s69 = sphi 0, %s67
    %s70 = sphi 0, %s69
    %s84 = sphi 0, %s70
    %s88 = sphi 0, %s88
    %s90 = sphi 0, %s88
    %s91 = sphi 0, %s90
    %s105 = sphi 0, %s91
    %s111 = sphi 0, %s113
    %s114 = sphi 0, %s111
    %s115 = sphi 0, %s114
    %s131 = sphi 0, %s115
    %s137 = sphi 0, %s139
    %s140 = sphi 0, %s137
    %s141 = sphi 0, %s140
    %s157 = sphi 0, %s141
  $region4: #{_lambda_.5} parent=0 // loop_header_branch
    %15 = sbr.rel (%p13) target = $region8
  $region5: #{_lambda_.5} parent=0 // loop_body
    %s17 = ssub.s32 %s12, 1
    %s18 = ssub.s32 %s12, 2
    %s19 = sadd.s32 %s12, 1
    %s20 = ssub.s32 %s12, %s19
    %p21 = scmp.eq.s32.totalorder %s20, 0
    %s23 = sadd.s32 %s22, 1
    %s24 = scalar_select %p21, %s22, %s23
    %p27 = pneg %p21
    %p28 = scmp.eq.s32.totalorder %s12, 1
    %p29 = por %p27, %p28
    %p30 = scmp.ne.s32.totalorder %s22, %s25
    %p31 = scmp.eq.s32.totalorder %s12, 0
    %p32 = por %p30, %p31
    %p33 = scmp.ne.s32.totalorder %s22, %s25
    %p34 = scmp.eq.s32.totalorder %s17, 1
    %p35 = por %p33, %p34
    %p36 = scmp.ne.s32.totalorder %s25, %s26
    %p37 = scmp.eq.s32.totalorder %s17, 0
    %p38 = por %p36, %p37
    %p39 = scmp.ne.s32.totalorder %s25, %s26
    %p40 = scmp.eq.s32.totalorder %s18, 1
    %p41 = por %p39, %p40
    %p43 = scmp.ne.s32.totalorder %s26, %s42
    %p44 = scmp.eq.s32.totalorder %s18, 0
    %p45 = por %p43, %p44
    %s47 = sadd.s32 %s46, 1
    %p50 = scmp.eq.s32.totalorder %s12, 1
    %p51 = scmp.ne.s32.totalorder %s46, %s48
    %p52 = scmp.eq.s32.totalorder %s12, 0
    %p53 = por %p51, %p52
    %p54 = scmp.ne.s32.totalorder %s46, %s48
    %p55 = scmp.eq.s32.totalorder %s17, 1
    %p56 = por %p54, %p55
    %p57 = scmp.ne.s32.totalorder %s48, %s49
    %p58 = scmp.eq.s32.totalorder %s17, 0
    %p59 = por %p57, %p58
    %p60 = scmp.ne.s32.totalorder %s48, %s49
    %p61 = scmp.eq.s32.totalorder %s18, 1
    %p62 = por %p60, %p61
    %p64 = scmp.ne.s32.totalorder %s49, %s63
    %p65 = scmp.eq.s32.totalorder %s18, 0
    %p66 = por %p64, %p65
    %s68 = sadd.s32 %s67, 1
    %p71 = scmp.eq.s32.totalorder %s12, 1
    %p72 = scmp.ne.s32.totalorder %s67, %s69
    %p73 = scmp.eq.s32.totalorder %s12, 0
    %p74 = por %p72, %p73
    %p75 = scmp.ne.s32.totalorder %s67, %s69
    %p76 = scmp.eq.s32.totalorder %s17, 1
    %p77 = por %p75, %p76
    %p78 = scmp.ne.s32.totalorder %s69, %s70
    %p79 = scmp.eq.s32.totalorder %s17, 0
    %p80 = por %p78, %p79
    %p81 = scmp.ne.s32.totalorder %s69, %s70
    %p82 = scmp.eq.s32.totalorder %s18, 1
    %p83 = por %p81, %p82
    %p85 = scmp.ne.s32.totalorder %s70, %s84
    %p86 = scmp.eq.s32.totalorder %s18, 0
    %p87 = por %p85, %p86
    %s89 = sadd.s32 %s88, 1
    %p92 = scmp.eq.s32.totalorder %s12, 1
    %p93 = scmp.ne.s32.totalorder %s88, %s90
    %p94 = scmp.eq.s32.totalorder %s12, 0
    %p95 = por %p93, %p94
    %p96 = scmp.ne.s32.totalorder %s88, %s90
    %p97 = scmp.eq.s32.totalorder %s17, 1
    %p98 = por %p96, %p97
    %p99 = scmp.ne.s32.totalorder %s90, %s91
    %p100 = scmp.eq.s32.totalorder %s17, 0
    %p101 = por %p99, %p100
    %p102 = scmp.ne.s32.totalorder %s90, %s91
    %p103 = scmp.eq.s32.totalorder %s18, 1
    %p104 = por %p102, %p103
    %p106 = scmp.ne.s32.totalorder %s91, %s105
    %p107 = scmp.eq.s32.totalorder %s18, 0
    %p108 = por %p106, %p107
    %s109 = ssub.s32 %s12, %s19
    %p110 = scmp.eq.s32.totalorder %s109, 0
    %s112 = sadd.s32 %s111, 1
    %s113 = scalar_select %p110, %s111, %s112
    %p116 = pneg %p110
    %p117 = scmp.eq.s32.totalorder %s12, 1
    %p118 = por %p116, %p117
    %p119 = scmp.ne.s32.totalorder %s111, %s114
    %p120 = scmp.eq.s32.totalorder %s12, 0
    %p121 = por %p119, %p120
    %p122 = scmp.ne.s32.totalorder %s111, %s114
    %p123 = scmp.eq.s32.totalorder %s17, 1
    %p124 = por %p122, %p123
    %p125 = scmp.ne.s32.totalorder %s114, %s115
    %p126 = scmp.eq.s32.totalorder %s17, 0
    %p127 = por %p125, %p126
    %p128 = scmp.ne.s32.totalorder %s114, %s115
    %p129 = scmp.eq.s32.totalorder %s18, 1
    %p130 = por %p128, %p129
    %p132 = scmp.ne.s32.totalorder %s115, %s131
    %p133 = scmp.eq.s32.totalorder %s18, 0
    %p134 = por %p132, %p133
    %s135 = ssub.s32 %s12, %s19
    %p136 = scmp.eq.s32.totalorder %s135, 0
    %s138 = sadd.s32 %s137, 1
    %s139 = scalar_select %p136, %s137, %s138
    %p142 = pneg %p136
    %p143 = scmp.eq.s32.totalorder %s12, 1
    %p144 = por %p142, %p143
    %p145 = scmp.ne.s32.totalorder %s137, %s140
    %p146 = scmp.eq.s32.totalorder %s12, 0
    %p147 = por %p145, %p146
    %p148 = scmp.ne.s32.totalorder %s137, %s140
    %p149 = scmp.eq.s32.totalorder %s17, 1
    %p150 = por %p148, %p149
    %p151 = scmp.ne.s32.totalorder %s140, %s141
    %p152 = scmp.eq.s32.totalorder %s17, 0
    %p153 = por %p151, %p152
    %p154 = scmp.ne.s32.totalorder %s140, %s141
    %p155 = scmp.eq.s32.totalorder %s18, 1
    %p156 = por %p154, %p155
    %p158 = scmp.ne.s32.totalorder %s141, %s157
    %p159 = scmp.eq.s32.totalorder %s18, 0
    %p160 = por %p158, %p159
    %p161 = scmp.le.s32.totalorder 1, %s12
    %p162 = scmp.lt.s32.totalorder %s12, 3
    %p163 = pnand %p161, %p162
    %p164 = pneg %p163
    // Predicated region
    $region9: #{_lambda_.5} parent=5 // pred_check
      _
    $region10: #{_lambda_.5} parent=5 // pred_check_branch
      %166 = sbr.rel (%p163) target = $region12
    $region11: #{_lambda_.5} parent=5 // pred_region
      %s167 = ssub.s32 %s12, 1
      // Predicated region
      $region13: #{_lambda_.5} parent=11 // pred_check
        %p168 = pneg %p59
      $region14: #{_lambda_.5} parent=11 // pred_check_branch
        %170 = sbr.rel (%p168) target = $region16
      $region15: #{_lambda_.5} parent=11 // pred_region
        _
      $region16: #{_lambda_.5} parent=11 // pred_fallthru
        _
      // Predicated region
      $region17: #{_lambda_.5} parent=11 // pred_check
        %p171 = pneg %p80
      $region18: #{_lambda_.5} parent=11 // pred_check_branch
        %173 = sbr.rel (%p171) target = $region20
      $region19: #{_lambda_.5} parent=11 // pred_region
        _
      $region20: #{_lambda_.5} parent=11 // pred_fallthru
        _
      // Predicated region
      $region21: #{_lambda_.5} parent=11 // pred_check
        %p174 = pneg %p101
      $region22: #{_lambda_.5} parent=11 // pred_check_branch
        %176 = sbr.rel (%p174) target = $region24
      $region23: #{_lambda_.5} parent=11 // pred_region
        _
      $region24: #{_lambda_.5} parent=11 // pred_fallthru
        _
    $region12: #{_lambda_.5} parent=5 // pred_fallthru
      _
    %p177 = scmp.lt.s32.totalorder %s12, 2
    // Predicated region
    $region25: #{_lambda_.5} parent=5 // pred_check
      %p178 = pneg %p177
    $region26: #{_lambda_.5} parent=5 // pred_check_branch
      %180 = sbr.rel (%p178) target = $region28
    $region27: #{_lambda_.5} parent=5 // pred_region
      // Predicated region
      $region29: #{_lambda_.5} parent=27 // pred_check
        %p181 = pneg %p32
      $region30: #{_lambda_.5} parent=27 // pred_check_branch
        %183 = sbr.rel (%p181) target = $region32
      $region31: #{_lambda_.5} parent=27 // pred_region
        %p184 = scmp.lt.s32.totalorder %s12, 1
        %s185 = scalar_select %p184, %s12, 1
        %s186 = smul.addr %s185, 32
        %s187 = smul.addr %s186, 4
        %s188 = scalar_lea.vmem %s0, %s187
      $region32: #{_lambda_.5} parent=27 // pred_fallthru
        _
    $region28: #{_lambda_.5} parent=5 // pred_fallthru
      _
    %p189 = scmp.le.s32.totalorder 1, %s12
    %p190 = scmp.lt.s32.totalorder %s12, 3
    %p191 = pnand %p189, %p190
    %p192 = pneg %p191
    // Predicated region
    $region33: #{_lambda_.5} parent=5 // pred_check
      _
    $region34: #{_lambda_.5} parent=5 // pred_check_branch
      %194 = sbr.rel (%p191) target = $region36
    $region35: #{_lambda_.5} parent=5 // pred_region
      %s195 = ssub.s32 %s12, 1
      %p196 = scmp.lt.s32.totalorder %s17, 1
      %s197 = scalar_select %p196, %s17, 1
      %s198 = smul.addr %s197, 32
      %s199 = smul.addr %s198, 4
      %s200 = scalar_lea.vmem %s0, %s199
      %p201 = pneg %p38
      %p202 = pneg %p35
      %p203 = pneg %p59
      %p204 = pneg %p56
      %p205 = pneg %p80
      %p206 = pneg %p77
      %p207 = pneg %p101
      %p208 = pneg %p98
      %p209 = pneg %p127
      %p210 = pneg %p124
      %p211 = scmp.lt.s32.totalorder %s17, 1
      %s212 = scalar_select %p211, %s17, 1
      %s213 = smul.addr %s212, 32
      %s214 = smul.addr %s213, 4
      %s215 = scalar_lea.vmem %s4, %s214
      %p216 = pneg %p153
      %p217 = pneg %p150
      %p218 = scmp.lt.s32.totalorder %s17, 1
      %s219 = scalar_select %p218, %s17, 1
      %s220 = smul.addr %s219, 2
      %s221 = scalar_lea.vmem %s5, %s220
      %p222 = scmp.lt.s32.totalorder %s17, 1
      %s223 = scalar_select %p222, %s17, 1
      %s224 = smul.addr %s223, 32
      %s225 = smul.addr %s224, 4
      %s226 = scalar_lea.vmem %s0, %s225
      %p227 = scmp.lt.s32.totalorder %s17, 1
      %s228 = scalar_select %p227, %s17, 1
      %s229 = smul.addr %s228, 32
      %s230 = smul.addr %s229, 4
      %s231 = scalar_lea.vmem %s4, %s230
      %p232 = scmp.lt.s32.totalorder %s17, 1
      %s233 = scalar_select %p232, %s17, 1
      %s234 = smul.addr %s233, 2
      %s235 = scalar_lea.vmem %s5, %s234
      %v237 = vld [vmem:[%s226] sm:$0xf]
      %v238 = vld [vmem:[%s226 + $0x4] sm:$0xf]
      %v239 = vld [vmem:[%s226 + $0x8] sm:$0xf]
      %v240 = vld [vmem:[%s226 + $0xc] sm:$0xf]
      %v241 = vld [vmem:[%s226 + $0x10] sm:$0xf]
      %v242 = vld [vmem:[%s226 + $0x14] sm:$0xf]
      %v243 = vld [vmem:[%s226 + $0x18] sm:$0xf]
      %v244 = vld [vmem:[%s226 + $0x1c] sm:$0xf]
      %v245 = vld [vmem:[%s226 + $0x20] sm:$0xf]
      %v246 = vld [vmem:[%s226 + $0x24] sm:$0xf]
      %v247 = vld [vmem:[%s226 + $0x28] sm:$0xf]
      %v248 = vld [vmem:[%s226 + $0x2c] sm:$0xf]
      %v249 = vld [vmem:[%s226 + $0x30] sm:$0xf]
      %v250 = vld [vmem:[%s226 + $0x34] sm:$0xf]
      %v251 = vld [vmem:[%s226 + $0x38] sm:$0xf]
      %v252 = vld [vmem:[%s226 + $0x3c] sm:$0xf]
      %v253 = vld [vmem:[%s226 + $0x40] sm:$0xf]
      %v254 = vld [vmem:[%s226 + $0x44] sm:$0xf]
      %v255 = vld [vmem:[%s226 + $0x48] sm:$0xf]
      %v256 = vld [vmem:[%s226 + $0x4c] sm:$0xf]
      %v257 = vld [vmem:[%s226 + $0x50] sm:$0xf]
      %v258 = vld [vmem:[%s226 + $0x54] sm:$0xf]
      %v259 = vld [vmem:[%s226 + $0x58] sm:$0xf]
      %v260 = vld [vmem:[%s226 + $0x5c] sm:$0xf]
      %v261 = vld [vmem:[%s226 + $0x60] sm:$0xf]
      %v262 = vld [vmem:[%s226 + $0x64] sm:$0xf]
      %v263 = vld [vmem:[%s226 + $0x68] sm:$0xf]
      %v264 = vld [vmem:[%s226 + $0x6c] sm:$0xf]
      %v265 = vld [vmem:[%s226 + $0x70] sm:$0xf]
      %v266 = vld [vmem:[%s226 + $0x74] sm:$0xf]
      %v267 = vld [vmem:[%s226 + $0x78] sm:$0xf]
      %v268 = vld [vmem:[%s226 + $0x7c] sm:$0xf]
      %v269 = vunpack.c.l.bf16 %v237
      %v270 = vunpack.c.l.bf16 %v238
      %v271 = vunpack.c.l.bf16 %v239
      %v272 = vunpack.c.l.bf16 %v240
      %v273 = vunpack.c.l.bf16 %v241
      %v274 = vunpack.c.l.bf16 %v242
      %v275 = vunpack.c.l.bf16 %v243
      %v276 = vunpack.c.l.bf16 %v244
      %v277 = vunpack.c.l.bf16 %v245
      %v278 = vunpack.c.l.bf16 %v246
      %v279 = vunpack.c.l.bf16 %v247
      %v280 = vunpack.c.l.bf16 %v248
      %v281 = vunpack.c.l.bf16 %v249
      %v282 = vunpack.c.l.bf16 %v250
      %v283 = vunpack.c.l.bf16 %v251
      %v284 = vunpack.c.l.bf16 %v252
      %v285 = vunpack.c.l.bf16 %v253
      %v286 = vunpack.c.l.bf16 %v254
      %v287 = vunpack.c.l.bf16 %v255
      %v288 = vunpack.c.l.bf16 %v256
      %v289 = vunpack.c.l.bf16 %v257
      %v290 = vunpack.c.l.bf16 %v258
      %v291 = vunpack.c.l.bf16 %v259
      %v292 = vunpack.c.l.bf16 %v260
      %v293 = vunpack.c.l.bf16 %v261
      %v294 = vunpack.c.l.bf16 %v262
      %v295 = vunpack.c.l.bf16 %v263
      %v296 = vunpack.c.l.bf16 %v264
      %v297 = vunpack.c.l.bf16 %v265
      %v298 = vunpack.c.l.bf16 %v266
      %v299 = vunpack.c.l.bf16 %v267
      %v300 = vunpack.c.l.bf16 %v268
      %v301 = vld [vmem:[%s1] sm:$0x1]
      %v303 = vperm.slane %v301, 0
      %v305 = vmul.f32 %v269, %v303
      %v306 = vmul.f32 %v270, %v303
      %v307 = vmul.f32 %v271, %v303
      %v308 = vmul.f32 %v272, %v303
      %v309 = vmul.f32 %v273, %v303
      %v310 = vmul.f32 %v274, %v303
      %v311 = vmul.f32 %v275, %v303
      %v312 = vmul.f32 %v276, %v303
      %v313 = vmul.f32 %v277, %v303
      %v314 = vmul.f32 %v278, %v303
      %v315 = vmul.f32 %v279, %v303
      %v316 = vmul.f32 %v280, %v303
      %v317 = vmul.f32 %v281, %v303
      %v318 = vmul.f32 %v282, %v303
      %v319 = vmul.f32 %v283, %v303
      %v320 = vmul.f32 %v284, %v303
      %v321 = vmul.f32 %v285, %v303
      %v322 = vmul.f32 %v286, %v303
      %v323 = vmul.f32 %v287, %v303
      %v324 = vmul.f32 %v288, %v303
      %v325 = vmul.f32 %v289, %v303
      %v326 = vmul.f32 %v290, %v303
      %v327 = vmul.f32 %v291, %v303
      %v328 = vmul.f32 %v292, %v303
      %v329 = vmul.f32 %v293, %v303
      %v330 = vmul.f32 %v294, %v303
      %v331 = vmul.f32 %v295, %v303
      %v332 = vmul.f32 %v296, %v303
      %v333 = vmul.f32 %v297, %v303
      %v334 = vmul.f32 %v298, %v303
      %v335 = vmul.f32 %v299, %v303
      %v336 = vmul.f32 %v300, %v303
      %v337 = vld [vmem:[%s2] sm:$0x1]
      %v339 = vperm.slane %v337, 0
      %v341 = vadd.f32 %v305, %v339
      %v342 = vadd.f32 %v306, %v339
      %v343 = vadd.f32 %v307, %v339
      %v344 = vadd.f32 %v308, %v339
      %v345 = vadd.f32 %v309, %v339
      %v346 = vadd.f32 %v310, %v339
      %v347 = vadd.f32 %v311, %v339
      %v348 = vadd.f32 %v312, %v339
      %v349 = vadd.f32 %v313, %v339
      %v350 = vadd.f32 %v314, %v339
      %v351 = vadd.f32 %v315, %v339
      %v352 = vadd.f32 %v316, %v339
      %v353 = vadd.f32 %v317, %v339
      %v354 = vadd.f32 %v318, %v339
      %v355 = vadd.f32 %v319, %v339
      %v356 = vadd.f32 %v320, %v339
      %v357 = vadd.f32 %v321, %v339
      %v358 = vadd.f32 %v322, %v339
      %v359 = vadd.f32 %v323, %v339
      %v360 = vadd.f32 %v324, %v339
      %v361 = vadd.f32 %v325, %v339
      %v362 = vadd.f32 %v326, %v339
      %v363 = vadd.f32 %v327, %v339
      %v364 = vadd.f32 %v328, %v339
      %v365 = vadd.f32 %v329, %v339
      %v366 = vadd.f32 %v330, %v339
      %v367 = vadd.f32 %v331, %v339
      %v368 = vadd.f32 %v332, %v339
      %v369 = vadd.f32 %v333, %v339
      %v370 = vadd.f32 %v334, %v339
      %v371 = vadd.f32 %v335, %v339
      %v372 = vadd.f32 %v336, %v339
      %v373 = vmax.f32 %v341, 0.0
      %v374 = vmax.f32 %v342, 0.0
      %v375 = vmax.f32 %v343, 0.0
      %v376 = vmax.f32 %v344, 0.0
      %v377 = vmax.f32 %v345, 0.0
      %v378 = vmax.f32 %v346, 0.0
      %v379 = vmax.f32 %v347, 0.0
      %v380 = vmax.f32 %v348, 0.0
      %v381 = vmax.f32 %v349, 0.0
      %v382 = vmax.f32 %v350, 0.0
      %v383 = vmax.f32 %v351, 0.0
      %v384 = vmax.f32 %v352, 0.0
      %v385 = vmax.f32 %v353, 0.0
      %v386 = vmax.f32 %v354, 0.0
      %v387 = vmax.f32 %v355, 0.0
      %v388 = vmax.f32 %v356, 0.0
      %v389 = vmax.f32 %v357, 0.0
      %v390 = vmax.f32 %v358, 0.0
      %v391 = vmax.f32 %v359, 0.0
      %v392 = vmax.f32 %v360, 0.0
      %v393 = vmax.f32 %v361, 0.0
      %v394 = vmax.f32 %v362, 0.0
      %v395 = vmax.f32 %v363, 0.0
      %v396 = vmax.f32 %v364, 0.0
      %v397 = vmax.f32 %v365, 0.0
      %v398 = vmax.f32 %v366, 0.0
      %v399 = vmax.f32 %v367, 0.0
      %v400 = vmax.f32 %v368, 0.0
      %v401 = vmax.f32 %v369, 0.0
      %v402 = vmax.f32 %v370, 0.0
      %v403 = vmax.f32 %v371, 0.0
      %v404 = vmax.f32 %v372, 0.0
      %vm405 = vcmask 27648
      %406 = vst.msk [vmem:[#allocation2] sm:$0xf] %vm405, 0
      %407 = vst.msk [vmem:[#allocation2 + $0x4] sm:$0xf] %vm405, 0
      %vm408 = vcmask 24576
      %409 = vst.msk [vmem:[#allocation2 + $0x8] sm:$0x1] %vm408, 0
      %s410 = scalar_lea.vmem [#allocation2], 204
      %411 = vst.msk [vmem:[%s410] sm:$0xf] %vm405, 0
      %412 = vst.msk [vmem:[%s410 + $0x4] sm:$0xf] %vm405, 0
      %413 = vst.msk [vmem:[%s410 + $0x8] sm:$0x1] %vm408, 0
      %vm414 = vcmask 24576
      %vm415 = vsmask.f32 256
      %vm416 = vmand %vm414, %vm415
      %v417 = vld [vmem:[#allocation2] sm:$0x1]
      %v418 = vsel %vm416, 0, %v417
      %419 = vst [vmem:[#allocation2] sm:$0x1] %v418
      %v420 = vld [vmem:[#allocation2 + $0xc] sm:$0x1]
      %v421 = vsel %vm416, 0, %v420
      %422 = vst [vmem:[#allocation2 + $0xc] sm:$0x1] %v421
      %v423 = vld [vmem:[#allocation2 + $0x18] sm:$0x1]
      %v424 = vsel %vm416, 0, %v423
      %425 = vst [vmem:[#allocation2 + $0x18] sm:$0x1] %v424
      %v426 = vld [vmem:[#allocation2 + $0x24] sm:$0x1]
      %v427 = vsel %vm416, 0, %v426
      %428 = vst [vmem:[#allocation2 + $0x24] sm:$0x1] %v427
      %v429 = vld [vmem:[#allocation2 + $0x30] sm:$0x1]
      %v430 = vsel %vm416, 0, %v429
      %431 = vst [vmem:[#allocation2 + $0x30] sm:$0x1] %v430
      %v432 = vld [vmem:[#allocation2 + $0x3c] sm:$0x1]
      %v433 = vsel %vm416, 0, %v432
      %434 = vst [vmem:[#allocation2 + $0x3c] sm:$0x1] %v433
      %v435 = vld [vmem:[#allocation2 + $0x48] sm:$0x1]
      %v436 = vsel %vm416, 0, %v435
      %437 = vst [vmem:[#allocation2 + $0x48] sm:$0x1] %v436
      %v438 = vld [vmem:[#allocation2 + $0x54] sm:$0x1]
      %v439 = vsel %vm416, 0, %v438
      %440 = vst [vmem:[#allocation2 + $0x54] sm:$0x1] %v439
      %v441 = vld [vmem:[#allocation2 + $0x60] sm:$0x1]
      %v442 = vsel %vm416, 0, %v441
      %443 = vst [vmem:[#allocation2 + $0x60] sm:$0x1] %v442
      %v444 = vld [vmem:[#allocation2 + $0x6c] sm:$0x1]
      %v445 = vsel %vm416, 0, %v444
      %446 = vst [vmem:[#allocation2 + $0x6c] sm:$0x1] %v445
      %v447 = vld [vmem:[#allocation2 + $0x78] sm:$0x1]
      %v448 = vsel %vm416, 0, %v447
      %449 = vst [vmem:[#allocation2 + $0x78] sm:$0x1] %v448
      %v450 = vld [vmem:[#allocation2 + $0x84] sm:$0x1]
      %v451 = vsel %vm416, 0, %v450
      %452 = vst [vmem:[#allocation2 + $0x84] sm:$0x1] %v451
      %v453 = vld [vmem:[#allocation2 + $0x90] sm:$0x1]
      %v454 = vsel %vm416, 0, %v453
      %455 = vst [vmem:[#allocation2 + $0x90] sm:$0x1] %v454
      %v456 = vld [vmem:[#allocation2 + $0x9c] sm:$0x1]
      %v457 = vsel %vm416, 0, %v456
      %458 = vst [vmem:[#allocation2 + $0x9c] sm:$0x1] %v457
      %v459 = vld [vmem:[#allocation2 + $0xa8] sm:$0x1]
      %v460 = vsel %vm416, 0, %v459
      %461 = vst [vmem:[#allocation2 + $0xa8] sm:$0x1] %v460
      %v462 = vld [vmem:[#allocation2 + $0xb4] sm:$0x1]
      %v463 = vsel %vm416, 0, %v462
      %464 = vst [vmem:[#allocation2 + $0xb4] sm:$0x1] %v463
      %v465 = vld [vmem:[#allocation2 + $0xc0] sm:$0x1]
      %v466 = vsel %vm416, 0, %v465
      %467 = vst [vmem:[#allocation2 + $0xc0] sm:$0x1] %v466
      %v468 = vld [vmem:[#allocation2 + $0xcc] sm:$0x1]
      %v469 = vsel %vm416, 0, %v468
      %470 = vst [vmem:[#allocation2 + $0xcc] sm:$0x1] %v469
      %vm471 = vsmask.f32 7938
      %vm472 = vmand %vm414, %vm471
      %v473 = vld [vmem:[#allocation2 + $0x8] sm:$0x1]
      %v474 = vsel %vm472, 0, %v473
      %475 = vst [vmem:[#allocation2 + $0x8] sm:$0x1] %v474
      %v476 = vld [vmem:[#allocation2 + $0x14] sm:$0x1]
      %v477 = vsel %vm472, 0, %v476
      %478 = vst [vmem:[#allocation2 + $0x14] sm:$0x1] %v477
      %v479 = vld [vmem:[#allocation2 + $0x20] sm:$0x1]
      %v480 = vsel %vm472, 0, %v479
      %481 = vst [vmem:[#allocation2 + $0x20] sm:$0x1] %v480
      %v482 = vld [vmem:[#allocation2 + $0x2c] sm:$0x1]
      %v483 = vsel %vm472, 0, %v482
      %484 = vst [vmem:[#allocation2 + $0x2c] sm:$0x1] %v483
      %v485 = vld [vmem:[#allocation2 + $0x38] sm:$0x1]
      %v486 = vsel %vm472, 0, %v485
      %487 = vst [vmem:[#allocation2 + $0x38] sm:$0x1] %v486
      %v488 = vld [vmem:[#allocation2 + $0x44] sm:$0x1]
      %v489 = vsel %vm472, 0, %v488
      %490 = vst [vmem:[#allocation2 + $0x44] sm:$0x1] %v489
      %v491 = vld [vmem:[#allocation2 + $0x50] sm:$0x1]
      %v492 = vsel %vm472, 0, %v491
      %493 = vst [vmem:[#allocation2 + $0x50] sm:$0x1] %v492
      %v494 = vld [vmem:[#allocation2 + $0x5c] sm:$0x1]
      %v495 = vsel %vm472, 0, %v494
      %496 = vst [vmem:[#allocation2 + $0x5c] sm:$0x1] %v495
      %v497 = vld [vmem:[#allocation2 + $0x68] sm:$0x1]
      %v498 = vsel %vm472, 0, %v497
      %499 = vst [vmem:[#allocation2 + $0x68] sm:$0x1] %v498
      %v500 = vld [vmem:[#allocation2 + $0x74] sm:$0x1]
      %v501 = vsel %vm472, 0, %v500
      %502 = vst [vmem:[#allocation2 + $0x74] sm:$0x1] %v501
      %v503 = vld [vmem:[#allocation2 + $0x80] sm:$0x1]
      %v504 = vsel %vm472, 0, %v503
      %505 = vst [vmem:[#allocation2 + $0x80] sm:$0x1] %v504
      %v506 = vld [vmem:[#allocation2 + $0x8c] sm:$0x1]
      %v507 = vsel %vm472, 0, %v506
      %508 = vst [vmem:[#allocation2 + $0x8c] sm:$0x1] %v507
      %v509 = vld [vmem:[#allocation2 + $0x98] sm:$0x1]
      %v510 = vsel %vm472, 0, %v509
      %511 = vst [vmem:[#allocation2 + $0x98] sm:$0x1] %v510
      %v512 = vld [vmem:[#allocation2 + $0xa4] sm:$0x1]
      %v513 = vsel %vm472, 0, %v512
      %514 = vst [vmem:[#allocation2 + $0xa4] sm:$0x1] %v513
      %v515 = vld [vmem:[#allocation2 + $0xb0] sm:$0x1]
      %v516 = vsel %vm472, 0, %v515
      %517 = vst [vmem:[#allocation2 + $0xb0] sm:$0x1] %v516
      %v518 = vld [vmem:[#allocation2 + $0xbc] sm:$0x1]
      %v519 = vsel %vm472, 0, %v518
      %520 = vst [vmem:[#allocation2 + $0xbc] sm:$0x1] %v519
      %v521 = vld [vmem:[#allocation2 + $0xc8] sm:$0x1]
      %v522 = vsel %vm472, 0, %v521
      %523 = vst [vmem:[#allocation2 + $0xc8] sm:$0x1] %v522
      %v524 = vld [vmem:[#allocation2 + $0xd4] sm:$0x1]
      %v525 = vsel %vm472, 0, %v524
      %526 = vst [vmem:[#allocation2 + $0xd4] sm:$0x1] %v525
      %v527 = vpack.c.bf16 %v373, %v373
      %v528 = vpack.c.bf16 %v374, %v374
      %v529 = vpack.c.bf16 %v375, %v375
      %v530 = vpack.c.bf16 %v376, %v376
      %v531 = vpack.c.bf16 %v377, %v377
      %v532 = vpack.c.bf16 %v378, %v378
      %v533 = vpack.c.bf16 %v379, %v379
      %v534 = vpack.c.bf16 %v380, %v380
      %v535 = vpack.c.bf16 %v381, %v381
      %v536 = vpack.c.bf16 %v382, %v382
      %v537 = vpack.c.bf16 %v383, %v383
      %v538 = vpack.c.bf16 %v384, %v384
      %v539 = vpack.c.bf16 %v385, %v385
      %v540 = vpack.c.bf16 %v386, %v386
      %v541 = vpack.c.bf16 %v387, %v387
      %v542 = vpack.c.bf16 %v388, %v388
      %v543 = vpack.c.bf16 %v389, %v389
      %v544 = vpack.c.bf16 %v390, %v390
      %v545 = vpack.c.bf16 %v391, %v391
      %v546 = vpack.c.bf16 %v392, %v392
      %v547 = vpack.c.bf16 %v393, %v393
      %v548 = vpack.c.bf16 %v394, %v394
      %v549 = vpack.c.bf16 %v395, %v395
      %v550 = vpack.c.bf16 %v396, %v396
      %v551 = vpack.c.bf16 %v397, %v397
      %v552 = vpack.c.bf16 %v398, %v398
      %v553 = vpack.c.bf16 %v399, %v399
      %v554 = vpack.c.bf16 %v400, %v400
      %v555 = vpack.c.bf16 %v401, %v401
      %v556 = vpack.c.bf16 %v402, %v402
      %v557 = vpack.c.bf16 %v403, %v403
      %v558 = vpack.c.bf16 %v404, %v404
      %vm559 = vsmask.f32 4368
      %vm560 = vmor %vm415, %vm559
      %v562 = vshrl.u32 %v527, 16
      %v564 = vrot.slane %v562, 7
      %v565 = vshll.u32 %v527, 16
      %v567 = vor.u32 %v564, %v565
      %v568 = vrot.slane %v564, 4
      %v570 = vshrl.u32 %v528, 16
      %v572 = vrot.slane %v570, 7
      %v573 = vshll.u32 %v528, 16
      %v575 = vor.u32 %v572, %v573
      %v576 = vsel %vm560, %v568, %v575
      %v577 = vrot.slane %v572, 4
      %v579 = vshrl.u32 %v529, 16
      %v581 = vrot.slane %v579, 7
      %v582 = vshll.u32 %v529, 16
      %v584 = vor.u32 %v581, %v582
      %v585 = vrot.slane %v581, 4
      %v587 = vshrl.u32 %v530, 16
      %v589 = vrot.slane %v587, 7
      %v590 = vshll.u32 %v530, 16
      %v592 = vor.u32 %v589, %v590
      %v593 = vsel %vm560, %v585, %v592
      %v594 = vrot.slane %v589, 4
      %v596 = vshrl.u32 %v531, 16
      %v598 = vrot.slane %v596, 7
      %v599 = vshll.u32 %v531, 16
      %v601 = vor.u32 %v598, %v599
      %v602 = vrot.slane %v598, 4
      %v604 = vshrl.u32 %v532, 16
      %v606 = vrot.slane %v604, 7
      %v607 = vshll.u32 %v532, 16
      %v609 = vor.u32 %v606, %v607
      %v610 = vsel %vm560, %v602, %v609
      %v611 = vrot.slane %v606, 4
      %v613 = vshrl.u32 %v533, 16
      %v615 = vrot.slane %v613, 7
      %v616 = vshll.u32 %v533, 16
      %v618 = vor.u32 %v615, %v616
      %v619 = vrot.slane %v615, 4
      %v621 = vshrl.u32 %v534, 16
      %v623 = vrot.slane %v621, 7
      %v624 = vshll.u32 %v534, 16
      %v626 = vor.u32 %v623, %v624
      %v627 = vsel %vm560, %v619, %v626
      %v628 = vrot.slane %v623, 4
      %v630 = vshrl.u32 %v535, 16
      %v632 = vrot.slane %v630, 7
      %v633 = vshll.u32 %v535, 16
      %v635 = vor.u32 %v632, %v633
      %v636 = vrot.slane %v632, 4
      %v638 = vshrl.u32 %v536, 16
      %v640 = vrot.slane %v638, 7
      %v641 = vshll.u32 %v536, 16
      %v643 = vor.u32 %v640, %v641
      %v644 = vsel %vm560, %v636, %v643
      %v645 = vrot.slane %v640, 4
      %v647 = vshrl.u32 %v537, 16
      %v649 = vrot.slane %v647, 7
      %v650 = vshll.u32 %v537, 16
      %v652 = vor.u32 %v649, %v650
      %v653 = vrot.slane %v649, 4
      %v655 = vshrl.u32 %v538, 16
      %v657 = vrot.slane %v655, 7
      %v658 = vshll.u32 %v538, 16
      %v660 = vor.u32 %v657, %v658
      %v661 = vsel %vm560, %v653, %v660
      %v662 = vrot.slane %v657, 4
      %v664 = vshrl.u32 %v539, 16
      %v666 = vrot.slane %v664, 7
      %v667 = vshll.u32 %v539, 16
      %v669 = vor.u32 %v666, %v667
      %v670 = vrot.slane %v666, 4
      %v672 = vshrl.u32 %v540, 16
      %v674 = vrot.slane %v672, 7
      %v675 = vshll.u32 %v540, 16
      %v677 = vor.u32 %v674, %v675
      %v678 = vsel %vm560, %v670, %v677
      %v679 = vrot.slane %v674, 4
      %v681 = vshrl.u32 %v541, 16
      %v683 = vrot.slane %v681, 7
      %v684 = vshll.u32 %v541, 16
      %v686 = vor.u32 %v683, %v684
      %v687 = vrot.slane %v683, 4
      %v689 = vshrl.u32 %v542, 16
      %v691 = vrot.slane %v689, 7
      %v692 = vshll.u32 %v542, 16
      %v694 = vor.u32 %v691, %v692
      %v695 = vsel %vm560, %v687, %v694
      %v696 = vrot.slane %v691, 4
      %v698 = vshrl.u32 %v543, 16
      %v700 = vrot.slane %v698, 7
      %v701 = vshll.u32 %v543, 16
      %v703 = vor.u32 %v700, %v701
      %v704 = vrot.slane %v700, 4
      %v706 = vshrl.u32 %v544, 16
      %v708 = vrot.slane %v706, 7
      %v709 = vshll.u32 %v544, 16
      %v711 = vor.u32 %v708, %v709
      %v712 = vsel %vm560, %v704, %v711
      %v713 = vrot.slane %v708, 4
      %v715 = vshrl.u32 %v545, 16
      %v717 = vrot.slane %v715, 7
      %v718 = vshll.u32 %v545, 16
      %v720 = vor.u32 %v717, %v718
      %v721 = vrot.slane %v717, 4
      %v723 = vshrl.u32 %v546, 16
      %v725 = vrot.slane %v723, 7
      %v726 = vshll.u32 %v546, 16
      %v728 = vor.u32 %v725, %v726
      %v729 = vsel %vm560, %v721, %v728
      %v730 = vrot.slane %v725, 4
      %v732 = vshrl.u32 %v547, 16
      %v734 = vrot.slane %v732, 7
      %v735 = vshll.u32 %v547, 16
      %v737 = vor.u32 %v734, %v735
      %v738 = vrot.slane %v734, 4
      %v740 = vshrl.u32 %v548, 16
      %v742 = vrot.slane %v740, 7
      %v743 = vshll.u32 %v548, 16
      %v745 = vor.u32 %v742, %v743
      %v746 = vsel %vm560, %v738, %v745
      %v747 = vrot.slane %v742, 4
      %v749 = vshrl.u32 %v549, 16
      %v751 = vrot.slane %v749, 7
      %v752 = vshll.u32 %v549, 16
      %v754 = vor.u32 %v751, %v752
      %v755 = vrot.slane %v751, 4
      %v757 = vshrl.u32 %v550, 16
      %v759 = vrot.slane %v757, 7
      %v760 = vshll.u32 %v550, 16
      %v762 = vor.u32 %v759, %v760
      %v763 = vsel %vm560, %v755, %v762
      %v764 = vrot.slane %v759, 4
      %v766 = vshrl.u32 %v551, 16
      %v768 = vrot.slane %v766, 7
      %v769 = vshll.u32 %v551, 16
      %v771 = vor.u32 %v768, %v769
      %v772 = vrot.slane %v768, 4
      %v774 = vshrl.u32 %v552, 16
      %v776 = vrot.slane %v774, 7
      %v777 = vshll.u32 %v552, 16
      %v779 = vor.u32 %v776, %v777
      %v780 = vsel %vm560, %v772, %v779
      %v781 = vrot.slane %v776, 4
      %v783 = vshrl.u32 %v553, 16
      %v785 = vrot.slane %v783, 7
      %v786 = vshll.u32 %v553, 16
      %v788 = vor.u32 %v785, %v786
      %v789 = vrot.slane %v785, 4
      %v791 = vshrl.u32 %v554, 16
      %v793 = vrot.slane %v791, 7
      %v794 = vshll.u32 %v554, 16
      %v796 = vor.u32 %v793, %v794
      %v797 = vsel %vm560, %v789, %v796
      %v798 = vrot.slane %v793, 4
      %v800 = vshrl.u32 %v555, 16
      %v802 = vrot.slane %v800, 7
      %v803 = vshll.u32 %v555, 16
      %v805 = vor.u32 %v802, %v803
      %v806 = vrot.slane %v802, 4
      %v808 = vshrl.u32 %v556, 16
      %v810 = vrot.slane %v808, 7
      %v811 = vshll.u32 %v556, 16
      %v813 = vor.u32 %v810, %v811
      %v814 = vsel %vm560, %v806, %v813
      %v815 = vrot.slane %v810, 4
      %v817 = vshrl.u32 %v557, 16
      %v819 = vrot.slane %v817, 7
      %v820 = vshll.u32 %v557, 16
      %v822 = vor.u32 %v819, %v820
      %v823 = vrot.slane %v819, 4
      %v825 = vshrl.u32 %v558, 16
      %v827 = vrot.slane %v825, 7
      %v828 = vshll.u32 %v558, 16
      %v830 = vor.u32 %v827, %v828
      %v831 = vsel %vm560, %v823, %v830
      %v832 = vrot.slane %v827, 4
      %s881 = scalar_lea.vmem [#allocation2], 12
      %vm882 = vcmask 27648
      %vm883 = vmand %vm882, %vm471
      %v884 = vld [vmem:[%s881] sm:$0xf]
      %v885 = vsel %vm883, %v567, %v884
      %886 = vst [vmem:[%s881] sm:$0xf] %v885
      %887 = vst.msk [vmem:[%s881 + $0x4] sm:$0xf] %vm405, %v576
      %v888 = vld [vmem:[%s881 + $0x8] sm:$0x1]
      %v889 = vsel %vm416, %v577, %v888
      %890 = vst [vmem:[%s881 + $0x8] sm:$0x1] %v889
      %v891 = vld [vmem:[%s881 + $0xc] sm:$0xf]
      %v892 = vsel %vm883, %v584, %v891
      %893 = vst [vmem:[%s881 + $0xc] sm:$0xf] %v892
      %894 = vst.msk [vmem:[%s881 + $0x10] sm:$0xf] %vm405, %v593
      %v895 = vld [vmem:[%s881 + $0x14] sm:$0x1]
      %v896 = vsel %vm416, %v594, %v895
      %897 = vst [vmem:[%s881 + $0x14] sm:$0x1] %v896
      %v898 = vld [vmem:[%s881 + $0x18] sm:$0xf]
      %v899 = vsel %vm883, %v601, %v898
      %900 = vst [vmem:[%s881 + $0x18] sm:$0xf] %v899
      %901 = vst.msk [vmem:[%s881 + $0x1c] sm:$0xf] %vm405, %v610
      %v902 = vld [vmem:[%s881 + $0x20] sm:$0x1]
      %v903 = vsel %vm416, %v611, %v902
      %904 = vst [vmem:[%s881 + $0x20] sm:$0x1] %v903
      %v905 = vld [vmem:[%s881 + $0x24] sm:$0xf]
      %v906 = vsel %vm883, %v618, %v905
      %907 = vst [vmem:[%s881 + $0x24] sm:$0xf] %v906
      %908 = vst.msk [vmem:[%s881 + $0x28] sm:$0xf] %vm405, %v627
      %v909 = vld [vmem:[%s881 + $0x2c] sm:$0x1]
      %v910 = vsel %vm416, %v628, %v909
      %911 = vst [vmem:[%s881 + $0x2c] sm:$0x1] %v910
      %v912 = vld [vmem:[%s881 + $0x30] sm:$0xf]
      %v913 = vsel %vm883, %v635, %v912
      %914 = vst [vmem:[%s881 + $0x30] sm:$0xf] %v913
      %915 = vst.msk [vmem:[%s881 + $0x34] sm:$0xf] %vm405, %v644
      %v916 = vld [vmem:[%s881 + $0x38] sm:$0x1]
      %v917 = vsel %vm416, %v645, %v916
      %918 = vst [vmem:[%s881 + $0x38] sm:$0x1] %v917
      %v919 = vld [vmem:[%s881 + $0x3c] sm:$0xf]
      %v920 = vsel %vm883, %v652, %v919
      %921 = vst [vmem:[%s881 + $0x3c] sm:$0xf] %v920
      %922 = vst.msk [vmem:[%s881 + $0x40] sm:$0xf] %vm405, %v661
      %v923 = vld [vmem:[%s881 + $0x44] sm:$0x1]
      %v924 = vsel %vm416, %v662, %v923
      %925 = vst [vmem:[%s881 + $0x44] sm:$0x1] %v924
      %v926 = vld [vmem:[%s881 + $0x48] sm:$0xf]
      %v927 = vsel %vm883, %v669, %v926
      %928 = vst [vmem:[%s881 + $0x48] sm:$0xf] %v927
      %929 = vst.msk [vmem:[%s881 + $0x4c] sm:$0xf] %vm405, %v678
      %v930 = vld [vmem:[%s881 + $0x50] sm:$0x1]
      %v931 = vsel %vm416, %v679, %v930
      %932 = vst [vmem:[%s881 + $0x50] sm:$0x1] %v931
      %v933 = vld [vmem:[%s881 + $0x54] sm:$0xf]
      %v934 = vsel %vm883, %v686, %v933
      %935 = vst [vmem:[%s881 + $0x54] sm:$0xf] %v934
      %936 = vst.msk [vmem:[%s881 + $0x58] sm:$0xf] %vm405, %v695
      %v937 = vld [vmem:[%s881 + $0x5c] sm:$0x1]
      %v938 = vsel %vm416, %v696, %v937
      %939 = vst [vmem:[%s881 + $0x5c] sm:$0x1] %v938
      %v940 = vld [vmem:[%s881 + $0x60] sm:$0xf]
      %v941 = vsel %vm883, %v703, %v940
      %942 = vst [vmem:[%s881 + $0x60] sm:$0xf] %v941
      %943 = vst.msk [vmem:[%s881 + $0x64] sm:$0xf] %vm405, %v712
      %v944 = vld [vmem:[%s881 + $0x68] sm:$0x1]
      %v945 = vsel %vm416, %v713, %v944
      %946 = vst [vmem:[%s881 + $0x68] sm:$0x1] %v945
      %v947 = vld [vmem:[%s881 + $0x6c] sm:$0xf]
      %v948 = vsel %vm883, %v720, %v947
      %949 = vst [vmem:[%s881 + $0x6c] sm:$0xf] %v948
      %950 = vst.msk [vmem:[%s881 + $0x70] sm:$0xf] %vm405, %v729
      %v951 = vld [vmem:[%s881 + $0x74] sm:$0x1]
      %v952 = vsel %vm416, %v730, %v951
      %953 = vst [vmem:[%s881 + $0x74] sm:$0x1] %v952
      %v954 = vld [vmem:[%s881 + $0x78] sm:$0xf]
      %v955 = vsel %vm883, %v737, %v954
      %956 = vst [vmem:[%s881 + $0x78] sm:$0xf] %v955
      %957 = vst.msk [vmem:[%s881 + $0x7c] sm:$0xf] %vm405, %v746
      %v958 = vld [vmem:[%s881 + $0x80] sm:$0x1]
      %v959 = vsel %vm416, %v747, %v958
      %960 = vst [vmem:[%s881 + $0x80] sm:$0x1] %v959
      %v961 = vld [vmem:[%s881 + $0x84] sm:$0xf]
      %v962 = vsel %vm883, %v754, %v961
      %963 = vst [vmem:[%s881 + $0x84] sm:$0xf] %v962
      %964 = vst.msk [vmem:[%s881 + $0x88] sm:$0xf] %vm405, %v763
      %v965 = vld [vmem:[%s881 + $0x8c] sm:$0x1]
      %v966 = vsel %vm416, %v764, %v965
      %967 = vst [vmem:[%s881 + $0x8c] sm:$0x1] %v966
      %v968 = vld [vmem:[%s881 + $0x90] sm:$0xf]
      %v969 = vsel %vm883, %v771, %v968
      %970 = vst [vmem:[%s881 + $0x90] sm:$0xf] %v969
      %971 = vst.msk [vmem:[%s881 + $0x94] sm:$0xf] %vm405, %v780
      %v972 = vld [vmem:[%s881 + $0x98] sm:$0x1]
      %v973 = vsel %vm416, %v781, %v972
      %974 = vst [vmem:[%s881 + $0x98] sm:$0x1] %v973
      %v975 = vld [vmem:[%s881 + $0x9c] sm:$0xf]
      %v976 = vsel %vm883, %v788, %v975
      %977 = vst [vmem:[%s881 + $0x9c] sm:$0xf] %v976
      %978 = vst.msk [vmem:[%s881 + $0xa0] sm:$0xf] %vm405, %v797
      %v979 = vld [vmem:[%s881 + $0xa4] sm:$0x1]
      %v980 = vsel %vm416, %v798, %v979
      %981 = vst [vmem:[%s881 + $0xa4] sm:$0x1] %v980
      %v982 = vld [vmem:[%s881 + $0xa8] sm:$0xf]
      %v983 = vsel %vm883, %v805, %v982
      %984 = vst [vmem:[%s881 + $0xa8] sm:$0xf] %v983
      %985 = vst.msk [vmem:[%s881 + $0xac] sm:$0xf] %vm405, %v814
      %v986 = vld [vmem:[%s881 + $0xb0] sm:$0x1]
      %v987 = vsel %vm416, %v815, %v986
      %988 = vst [vmem:[%s881 + $0xb0] sm:$0x1] %v987
      %v989 = vld [vmem:[%s881 + $0xb4] sm:$0xf]
      %v990 = vsel %vm883, %v822, %v989
      %991 = vst [vmem:[%s881 + $0xb4] sm:$0xf] %v990
      %992 = vst.msk [vmem:[%s881 + $0xb8] sm:$0xf] %vm405, %v831
      %v993 = vld [vmem:[%s881 + $0xbc] sm:$0x1]
      %v994 = vsel %vm416, %v832, %v993
      %995 = vst [vmem:[%s881 + $0xbc] sm:$0x1] %v994
      %v996 = vld [vmem:[#allocation2] sm:$0xf]
      %v997 = vld [vmem:[#allocation2 + $0x4] sm:$0xf]
      %v998 = vld [vmem:[#allocation2 + $0xc] sm:$0xf]
      %v999 = vld [vmem:[#allocation2 + $0x10] sm:$0xf]
      %v1000 = vld [vmem:[#allocation2 + $0x18] sm:$0xf]
      %v1001 = vld [vmem:[#allocation2 + $0x1c] sm:$0xf]
      %v1002 = vld [vmem:[#allocation2 + $0x24] sm:$0xf]
      %v1003 = vld [vmem:[#allocation2 + $0x28] sm:$0xf]
      %v1004 = vld [vmem:[#allocation2 + $0x30] sm:$0xf]
      %v1005 = vld [vmem:[#allocation2 + $0x34] sm:$0xf]
      %v1006 = vld [vmem:[#allocation2 + $0x3c] sm:$0xf]
      %v1007 = vld [vmem:[#allocation2 + $0x40] sm:$0xf]
      %v1008 = vld [vmem:[#allocation2 + $0x48] sm:$0xf]
      %v1009 = vld [vmem:[#allocation2 + $0x4c] sm:$0xf]
      %v1010 = vld [vmem:[#allocation2 + $0x54] sm:$0xf]
      %v1011 = vld [vmem:[#allocation2 + $0x58] sm:$0xf]
      %v1012 = vld [vmem:[#allocation2 + $0x60] sm:$0xf]
      %v1013 = vld [vmem:[#allocation2 + $0x64] sm:$0xf]
      %v1014 = vld [vmem:[#allocation2 + $0x6c] sm:$0xf]
      %v1015 = vld [vmem:[#allocation2 + $0x70] sm:$0xf]
      %v1016 = vld [vmem:[#allocation2 + $0x78] sm:$0xf]
      %v1017 = vld [vmem:[#allocation2 + $0x7c] sm:$0xf]
      %v1018 = vld [vmem:[#allocation2 + $0x84] sm:$0xf]
      %v1019 = vld [vmem:[#allocation2 + $0x88] sm:$0xf]
      %v1020 = vld [vmem:[#allocation2 + $0x90] sm:$0xf]
      %v1021 = vld [vmem:[#allocation2 + $0x94] sm:$0xf]
      %v1022 = vld [vmem:[#allocation2 + $0x9c] sm:$0xf]
      %v1023 = vld [vmem:[#allocation2 + $0xa0] sm:$0xf]
      %v1024 = vld [vmem:[#allocation2 + $0xa8] sm:$0xf]
      %v1025 = vld [vmem:[#allocation2 + $0xac] sm:$0xf]
      %v1026 = vld [vmem:[#allocation2 + $0xb4] sm:$0xf]
      %v1027 = vld [vmem:[#allocation2 + $0xb8] sm:$0xf]
      %v1028 = vld [vmem:[%s3] sm:$0x3]
      %v1029 = vld [vmem:[#allocation2 + $0x8] sm:$0x1]
      %v1030 = vld [vmem:[#allocation2 + $0x14] sm:$0x1]
      %v1031 = vld [vmem:[#allocation2 + $0x20] sm:$0x1]
      %v1032 = vld [vmem:[#allocation2 + $0x2c] sm:$0x1]
      %v1033 = vld [vmem:[#allocation2 + $0x38] sm:$0x1]
      %v1034 = vld [vmem:[#allocation2 + $0x44] sm:$0x1]
      %v1035 = vld [vmem:[#allocation2 + $0x50] sm:$0x1]
      %v1036 = vld [vmem:[#allocation2 + $0x5c] sm:$0x1]
      %v1037 = vld [vmem:[#allocation2 + $0x68] sm:$0x1]
      %v1038 = vld [vmem:[#allocation2 + $0x74] sm:$0x1]
      %v1039 = vld [vmem:[#allocation2 + $0x80] sm:$0x1]
      %v1040 = vld [vmem:[#allocation2 + $0x8c] sm:$0x1]
      %v1041 = vld [vmem:[#allocation2 + $0x98] sm:$0x1]
      %v1042 = vld [vmem:[#allocation2 + $0xa4] sm:$0x1]
      %v1043 = vld [vmem:[#allocation2 + $0xb0] sm:$0x1]
      %v1044 = vld [vmem:[#allocation2 + $0xbc] sm:$0x1]
      %vm1045 = vsmask.f32 3328
      %vm1046 = vsmask.f32 7440
      %vm1047 = vmor %vm1045, %vm1046
      %v1049 = vshrl.u32 %v996, 16
      %v1051 = vrot.slane %v1049, 4
      %v1052 = vshll.u32 %v996, 16
      %v1054 = vrot.slane %v1052, 5
      %v1055 = vor.u32 %v1051, %v1054
      %v1056 = vrot.slane %v1055, 4
      %v1058 = vshll.u32 %v997, 16
      %v1060 = vrot.slane %v1058, 5
      %v1061 = vsel %vm1047, %v1056, %v1060
      %v1062 = vshrl.u32 %v997, 16
      %v1064 = vrot.slane %v1062, 4
      %v1065 = vor.u32 %v1064, %v1060
      %v1066 = vrot.slane %v1065, 4
      %v1068 = vshll.u32 %v1029, 16
      %v1070 = vrot.slane %v1068, 5
      %v1071 = vsel %vm1047, %v1066, %v1070
      %v1073 = vshrl.u32 %v998, 16
      %v1075 = vrot.slane %v1073, 4
      %v1076 = vshll.u32 %v998, 16
      %v1078 = vrot.slane %v1076, 5
      %v1079 = vor.u32 %v1075, %v1078
      %v1080 = vrot.slane %v1079, 4
      %v1082 = vshll.u32 %v999, 16
      %v1084 = vrot.slane %v1082, 5
      %v1085 = vsel %vm1047, %v1080, %v1084
      %v1086 = vshrl.u32 %v999, 16
      %v1088 = vrot.slane %v1086, 4
      %v1089 = vor.u32 %v1088, %v1084
      %v1090 = vrot.slane %v1089, 4
      %v1092 = vshll.u32 %v1030, 16
      %v1094 = vrot.slane %v1092, 5
      %v1095 = vsel %vm1047, %v1090, %v1094
      %v1097 = vshrl.u32 %v1000, 16
      %v1099 = vrot.slane %v1097, 4
      %v1100 = vshll.u32 %v1000, 16
      %v1102 = vrot.slane %v1100, 5
      %v1103 = vor.u32 %v1099, %v1102
      %v1104 = vrot.slane %v1103, 4
      %v1106 = vshll.u32 %v1001, 16
      %v1108 = vrot.slane %v1106, 5
      %v1109 = vsel %vm1047, %v1104, %v1108
      %v1110 = vshrl.u32 %v1001, 16
      %v1112 = vrot.slane %v1110, 4
      %v1113 = vor.u32 %v1112, %v1108
      %v1114 = vrot.slane %v1113, 4
      %v1116 = vshll.u32 %v1031, 16
      %v1118 = vrot.slane %v1116, 5
      %v1119 = vsel %vm1047, %v1114, %v1118
      %v1121 = vshrl.u32 %v1002, 16
      %v1123 = vrot.slane %v1121, 4
      %v1124 = vshll.u32 %v1002, 16
      %v1126 = vrot.slane %v1124, 5
      %v1127 = vor.u32 %v1123, %v1126
      %v1128 = vrot.slane %v1127, 4
      %v1130 = vshll.u32 %v1003, 16
      %v1132 = vrot.slane %v1130, 5
      %v1133 = vsel %vm1047, %v1128, %v1132
      %v1134 = vshrl.u32 %v1003, 16
      %v1136 = vrot.slane %v1134, 4
      %v1137 = vor.u32 %v1136, %v1132
      %v1138 = vrot.slane %v1137, 4
      %v1140 = vshll.u32 %v1032, 16
      %v1142 = vrot.slane %v1140, 5
      %v1143 = vsel %vm1047, %v1138, %v1142
      %v1145 = vshrl.u32 %v1004, 16
      %v1147 = vrot.slane %v1145, 4
      %v1148 = vshll.u32 %v1004, 16
      %v1150 = vrot.slane %v1148, 5
      %v1151 = vor.u32 %v1147, %v1150
      %v1152 = vrot.slane %v1151, 4
      %v1154 = vshll.u32 %v1005, 16
      %v1156 = vrot.slane %v1154, 5
      %v1157 = vsel %vm1047, %v1152, %v1156
      %v1158 = vshrl.u32 %v1005, 16
      %v1160 = vrot.slane %v1158, 4
      %v1161 = vor.u32 %v1160, %v1156
      %v1162 = vrot.slane %v1161, 4
      %v1164 = vshll.u32 %v1033, 16
      %v1166 = vrot.slane %v1164, 5
      %v1167 = vsel %vm1047, %v1162, %v1166
      %v1169 = vshrl.u32 %v1006, 16
      %v1171 = vrot.slane %v1169, 4
      %v1172 = vshll.u32 %v1006, 16
      %v1174 = vrot.slane %v1172, 5
      %v1175 = vor.u32 %v1171, %v1174
      %v1176 = vrot.slane %v1175, 4
      %v1178 = vshll.u32 %v1007, 16
      %v1180 = vrot.slane %v1178, 5
      %v1181 = vsel %vm1047, %v1176, %v1180
      %v1182 = vshrl.u32 %v1007, 16
      %v1184 = vrot.slane %v1182, 4
      %v1185 = vor.u32 %v1184, %v1180
      %v1186 = vrot.slane %v1185, 4
      %v1188 = vshll.u32 %v1034, 16
      %v1190 = vrot.slane %v1188, 5
      %v1191 = vsel %vm1047, %v1186, %v1190
      %v1193 = vshrl.u32 %v1008, 16
      %v1195 = vrot.slane %v1193, 4
      %v1196 = vshll.u32 %v1008, 16
      %v1198 = vrot.slane %v1196, 5
      %v1199 = vor.u32 %v1195, %v1198
      %v1200 = vrot.slane %v1199, 4
      %v1202 = vshll.u32 %v1009, 16
      %v1204 = vrot.slane %v1202, 5
      %v1205 = vsel %vm1047, %v1200, %v1204
      %v1206 = vshrl.u32 %v1009, 16
      %v1208 = vrot.slane %v1206, 4
      %v1209 = vor.u32 %v1208, %v1204
      %v1210 = vrot.slane %v1209, 4
      %v1212 = vshll.u32 %v1035, 16
      %v1214 = vrot.slane %v1212, 5
      %v1215 = vsel %vm1047, %v1210, %v1214
      %v1217 = vshrl.u32 %v1010, 16
      %v1219 = vrot.slane %v1217, 4
      %v1220 = vshll.u32 %v1010, 16
      %v1222 = vrot.slane %v1220, 5
      %v1223 = vor.u32 %v1219, %v1222
      %v1224 = vrot.slane %v1223, 4
      %v1226 = vshll.u32 %v1011, 16
      %v1228 = vrot.slane %v1226, 5
      %v1229 = vsel %vm1047, %v1224, %v1228
      %v1230 = vshrl.u32 %v1011, 16
      %v1232 = vrot.slane %v1230, 4
      %v1233 = vor.u32 %v1232, %v1228
      %v1234 = vrot.slane %v1233, 4
      %v1236 = vshll.u32 %v1036, 16
      %v1238 = vrot.slane %v1236, 5
      %v1239 = vsel %vm1047, %v1234, %v1238
      %v1241 = vshrl.u32 %v1012, 16
      %v1243 = vrot.slane %v1241, 4
      %v1244 = vshll.u32 %v1012, 16
      %v1246 = vrot.slane %v1244, 5
      %v1247 = vor.u32 %v1243, %v1246
      %v1248 = vrot.slane %v1247, 4
      %v1250 = vshll.u32 %v1013, 16
      %v1252 = vrot.slane %v1250, 5
      %v1253 = vsel %vm1047, %v1248, %v1252
      %v1254 = vshrl.u32 %v1013, 16
      %v1256 = vrot.slane %v1254, 4
      %v1257 = vor.u32 %v1256, %v1252
      %v1258 = vrot.slane %v1257, 4
      %v1260 = vshll.u32 %v1037, 16
      %v1262 = vrot.slane %v1260, 5
      %v1263 = vsel %vm1047, %v1258, %v1262
      %v1265 = vshrl.u32 %v1014, 16
      %v1267 = vrot.slane %v1265, 4
      %v1268 = vshll.u32 %v1014, 16
      %v1270 = vrot.slane %v1268, 5
      %v1271 = vor.u32 %v1267, %v1270
      %v1272 = vrot.slane %v1271, 4
      %v1274 = vshll.u32 %v1015, 16
      %v1276 = vrot.slane %v1274, 5
      %v1277 = vsel %vm1047, %v1272, %v1276
      %v1278 = vshrl.u32 %v1015, 16
      %v1280 = vrot.slane %v1278, 4
      %v1281 = vor.u32 %v1280, %v1276
      %v1282 = vrot.slane %v1281, 4
      %v1284 = vshll.u32 %v1038, 16
      %v1286 = vrot.slane %v1284, 5
      %v1287 = vsel %vm1047, %v1282, %v1286
      %v1289 = vshrl.u32 %v1016, 16
      %v1291 = vrot.slane %v1289, 4
      %v1292 = vshll.u32 %v1016, 16
      %v1294 = vrot.slane %v1292, 5
      %v1295 = vor.u32 %v1291, %v1294
      %v1296 = vrot.slane %v1295, 4
      %v1298 = vshll.u32 %v1017, 16
      %v1300 = vrot.slane %v1298, 5
      %v1301 = vsel %vm1047, %v1296, %v1300
      %v1302 = vshrl.u32 %v1017, 16
      %v1304 = vrot.slane %v1302, 4
      %v1305 = vor.u32 %v1304, %v1300
      %v1306 = vrot.slane %v1305, 4
      %v1308 = vshll.u32 %v1039, 16
      %v1310 = vrot.slane %v1308, 5
      %v1311 = vsel %vm1047, %v1306, %v1310
      %v1313 = vshrl.u32 %v1018, 16
      %v1315 = vrot.slane %v1313, 4
      %v1316 = vshll.u32 %v1018, 16
      %v1318 = vrot.slane %v1316, 5
      %v1319 = vor.u32 %v1315, %v1318
      %v1320 = vrot.slane %v1319, 4
      %v1322 = vshll.u32 %v1019, 16
      %v1324 = vrot.slane %v1322, 5
      %v1325 = vsel %vm1047, %v1320, %v1324
      %v1326 = vshrl.u32 %v1019, 16
      %v1328 = vrot.slane %v1326, 4
      %v1329 = vor.u32 %v1328, %v1324
      %v1330 = vrot.slane %v1329, 4
      %v1332 = vshll.u32 %v1040, 16
      %v1334 = vrot.slane %v1332, 5
      %v1335 = vsel %vm1047, %v1330, %v1334
      %v1337 = vshrl.u32 %v1020, 16
      %v1339 = vrot.slane %v1337, 4
      %v1340 = vshll.u32 %v1020, 16
      %v1342 = vrot.slane %v1340, 5
      %v1343 = vor.u32 %v1339, %v1342
      %v1344 = vrot.slane %v1343, 4
      %v1346 = vshll.u32 %v1021, 16
      %v1348 = vrot.slane %v1346, 5
      %v1349 = vsel %vm1047, %v1344, %v1348
      %v1350 = vshrl.u32 %v1021, 16
      %v1352 = vrot.slane %v1350, 4
      %v1353 = vor.u32 %v1352, %v1348
      %v1354 = vrot.slane %v1353, 4
      %v1356 = vshll.u32 %v1041, 16
      %v1358 = vrot.slane %v1356, 5
      %v1359 = vsel %vm1047, %v1354, %v1358
      %v1361 = vshrl.u32 %v1022, 16
      %v1363 = vrot.slane %v1361, 4
      %v1364 = vshll.u32 %v1022, 16
      %v1366 = vrot.slane %v1364, 5
      %v1367 = vor.u32 %v1363, %v1366
      %v1368 = vrot.slane %v1367, 4
      %v1370 = vshll.u32 %v1023, 16
      %v1372 = vrot.slane %v1370, 5
      %v1373 = vsel %vm1047, %v1368, %v1372
      %v1374 = vshrl.u32 %v1023, 16
      %v1376 = vrot.slane %v1374, 4
      %v1377 = vor.u32 %v1376, %v1372
      %v1378 = vrot.slane %v1377, 4
      %v1380 = vshll.u32 %v1042, 16
      %v1382 = vrot.slane %v1380, 5
      %v1383 = vsel %vm1047, %v1378, %v1382
      %v1385 = vshrl.u32 %v1024, 16
      %v1387 = vrot.slane %v1385, 4
      %v1388 = vshll.u32 %v1024, 16
      %v1390 = vrot.slane %v1388, 5
      %v1391 = vor.u32 %v1387, %v1390
      %v1392 = vrot.slane %v1391, 4
      %v1394 = vshll.u32 %v1025, 16
      %v1396 = vrot.slane %v1394, 5
      %v1397 = vsel %vm1047, %v1392, %v1396
      %v1398 = vshrl.u32 %v1025, 16
      %v1400 = vrot.slane %v1398, 4
      %v1401 = vor.u32 %v1400, %v1396
      %v1402 = vrot.slane %v1401, 4
      %v1404 = vshll.u32 %v1043, 16
      %v1406 = vrot.slane %v1404, 5
      %v1407 = vsel %vm1047, %v1402, %v1406
      %v1409 = vshrl.u32 %v1026, 16
      %v1411 = vrot.slane %v1409, 4
      %v1412 = vshll.u32 %v1026, 16
      %v1414 = vrot.slane %v1412, 5
      %v1415 = vor.u32 %v1411, %v1414
      %v1416 = vrot.slane %v1415, 4
      %v1418 = vshll.u32 %v1027, 16
      %v1420 = vrot.slane %v1418, 5
      %v1421 = vsel %vm1047, %v1416, %v1420
      %v1422 = vshrl.u32 %v1027, 16
      %v1424 = vrot.slane %v1422, 4
      %v1425 = vor.u32 %v1424, %v1420
      %v1426 = vrot.slane %v1425, 4
      %v1428 = vshll.u32 %v1044, 16
      %v1430 = vrot.slane %v1428, 5
      %v1431 = vsel %vm1047, %v1426, %v1430
      %s1432 = scalar_lea.vmem %s3, 2
      %v1433 = vld [vmem:[%s1432] sm:$0x3]
      %v1434 = vunpack.c.l.b16 %v1061
      %v1435 = vunpack.c.l.b16 %v1071
      %v1436 = vunpack.c.l.b16 %v1085
      %v1437 = vunpack.c.l.b16 %v1095
      %v1438 = vunpack.c.l.b16 %v1109
      %v1439 = vunpack.c.l.b16 %v1119
      %v1440 = vunpack.c.l.b16 %v1133
      %v1441 = vunpack.c.l.b16 %v1143
      %v1442 = vunpack.c.l.b16 %v1157
      %v1443 = vunpack.c.l.b16 %v1167
      %v1444 = vunpack.c.l.b16 %v1181
      %v1445 = vunpack.c.l.b16 %v1191
      %v1446 = vunpack.c.l.b16 %v1205
      %v1447 = vunpack.c.l.b16 %v1215
      %v1448 = vunpack.c.l.b16 %v1229
      %v1449 = vunpack.c.l.b16 %v1239
      %v1450 = vunpack.c.l.b16 %v1253
      %v1451 = vunpack.c.l.b16 %v1263
      %v1452 = vunpack.c.l.b16 %v1277
      %v1453 = vunpack.c.l.b16 %v1287
      %v1454 = vunpack.c.l.b16 %v1301
      %v1455 = vunpack.c.l.b16 %v1311
      %v1456 = vunpack.c.l.b16 %v1325
      %v1457 = vunpack.c.l.b16 %v1335
      %v1458 = vunpack.c.l.b16 %v1349
      %v1459 = vunpack.c.l.b16 %v1359
      %v1460 = vunpack.c.l.b16 %v1373
      %v1461 = vunpack.c.l.b16 %v1383
      %v1462 = vunpack.c.l.b16 %v1397
      %v1463 = vunpack.c.l.b16 %v1407
      %v1464 = vunpack.c.l.b16 %v1421
      %v1465 = vunpack.c.l.b16 %v1431
      %v1466 = vpack.c.b16 %v1435, %v1434
      %v1467 = vpack.c.b16 %v1437, %v1436
      %v1468 = vpack.c.b16 %v1439, %v1438
      %v1469 = vpack.c.b16 %v1441, %v1440
      %v1470 = vpack.c.b16 %v1443, %v1442
      %v1471 = vpack.c.b16 %v1445, %v1444
      %v1472 = vpack.c.b16 %v1447, %v1446
      %v1473 = vpack.c.b16 %v1449, %v1448
      %v1474 = vpack.c.b16 %v1451, %v1450
      %v1475 = vpack.c.b16 %v1453, %v1452
      %v1476 = vpack.c.b16 %v1455, %v1454
      %v1477 = vpack.c.b16 %v1457, %v1456
      %v1478 = vpack.c.b16 %v1459, %v1458
      %v1479 = vpack.c.b16 %v1461, %v1460
      %v1480 = vpack.c.b16 %v1463, %v1462
      %v1481 = vpack.c.b16 %v1465, %v1464
      %vm1482 = vcmask 31744
      %v1484 = vsel %vm1482, %v1466, 0
      %v1487 = vsel %vm1482, %v1467, 0
      %v1490 = vsel %vm1482, %v1468, 0
      %v1493 = vsel %vm1482, %v1469, 0
      %v1496 = vsel %vm1482, %v1470, 0
      %v1499 = vsel %vm1482, %v1471, 0
      %v1502 = vsel %vm1482, %v1472, 0
      %v1505 = vsel %vm1482, %v1473, 0
      %v1508 = vsel %vm1482, %v1474, 0
      %v1511 = vsel %vm1482, %v1475, 0
      %v1514 = vsel %vm1482, %v1476, 0
      %v1517 = vsel %vm1482, %v1477, 0
      %v1520 = vsel %vm1482, %v1478, 0
      %v1523 = vsel %vm1482, %v1479, 0
      %v1526 = vsel %vm1482, %v1480, 0
      %v1529 = vsel %vm1482, %v1481, 0
      %vm1531 = vcmask 1041408
      %v1533 = vsel %vm1531, %v1433, 0
      %1535 = vmatpush.bf16.msra.mxu0 0
      %1536 = vmatpush.bf16.msra.mxu0 0
      %1537 = vmatpush.bf16.msra.mxu0 0
      %1538 = vmatpush.bf16.msra.mxu0 0
      %1539 = vmatpush.bf16.msra.mxu0 0
      %1540 = vmatpush.bf16.msra.mxu0 0
      %1541 = vmatpush.bf16.msra.mxu0 0
      %1542 = vmatpush.bf16.msra.mxu0 %v1533
      %1543 = vmatmul.bf16.gmra.mxu0 %v1484
      %v1544 = vpop.f32.mrf.mxu0
      %v1545 = vadd.f32 0.0, %v1544
      %v1546 = vpop.f32.mrf.mxu0
      %v1547 = vadd.f32 0.0, %v1546
      %1548 = vmatmul.bf16.gmra.mxu0 %v1487
      %v1549 = vpop.f32.mrf.mxu0
      %v1550 = vadd.f32 0.0, %v1549
      %v1551 = vpop.f32.mrf.mxu0
      %v1552 = vadd.f32 0.0, %v1551
      %1553 = vmatmul.bf16.gmra.mxu0 %v1490
      %v1554 = vpop.f32.mrf.mxu0
      %v1555 = vadd.f32 0.0, %v1554
      %v1556 = vpop.f32.mrf.mxu0
      %v1557 = vadd.f32 0.0, %v1556
      %1558 = vmatmul.bf16.gmra.mxu0 %v1493
      %v1559 = vpop.f32.mrf.mxu0
      %v1560 = vadd.f32 0.0, %v1559
      %v1561 = vpop.f32.mrf.mxu0
      %v1562 = vadd.f32 0.0, %v1561
      %1563 = vmatmul.bf16.gmra.mxu0 %v1496
      %v1564 = vpop.f32.mrf.mxu0
      %v1565 = vadd.f32 0.0, %v1564
      %v1566 = vpop.f32.mrf.mxu0
      %v1567 = vadd.f32 0.0, %v1566
      %1568 = vmatmul.bf16.gmra.mxu0 %v1499
      %v1569 = vpop.f32.mrf.mxu0
      %v1570 = vadd.f32 0.0, %v1569
      %v1571 = vpop.f32.mrf.mxu0
      %v1572 = vadd.f32 0.0, %v1571
      %1573 = vmatmul.bf16.gmra.mxu0 %v1502
      %v1574 = vpop.f32.mrf.mxu0
      %v1575 = vadd.f32 0.0, %v1574
      %v1576 = vpop.f32.mrf.mxu0
      %v1577 = vadd.f32 0.0, %v1576
      %1578 = vmatmul.bf16.gmra.mxu0 %v1505
      %v1579 = vpop.f32.mrf.mxu0
      %v1580 = vadd.f32 0.0, %v1579
      %v1581 = vpop.f32.mrf.mxu0
      %v1582 = vadd.f32 0.0, %v1581
      %1583 = vmatmul.bf16.gmra.mxu0 %v1508
      %v1584 = vpop.f32.mrf.mxu0
      %v1585 = vadd.f32 0.0, %v1584
      %v1586 = vpop.f32.mrf.mxu0
      %v1587 = vadd.f32 0.0, %v1586
      %1588 = vmatmul.bf16.gmra.mxu0 %v1511
      %v1589 = vpop.f32.mrf.mxu0
      %v1590 = vadd.f32 0.0, %v1589
      %v1591 = vpop.f32.mrf.mxu0
      %v1592 = vadd.f32 0.0, %v1591
      %1593 = vmatmul.bf16.gmra.mxu0 %v1514
      %v1594 = vpop.f32.mrf.mxu0
      %v1595 = vadd.f32 0.0, %v1594
      %v1596 = vpop.f32.mrf.mxu0
      %v1597 = vadd.f32 0.0, %v1596
      %1598 = vmatmul.bf16.gmra.mxu0 %v1517
      %v1599 = vpop.f32.mrf.mxu0
      %v1600 = vadd.f32 0.0, %v1599
      %v1601 = vpop.f32.mrf.mxu0
      %v1602 = vadd.f32 0.0, %v1601
      %1603 = vmatmul.bf16.gmra.mxu0 %v1520
      %v1604 = vpop.f32.mrf.mxu0
      %v1605 = vadd.f32 0.0, %v1604
      %v1606 = vpop.f32.mrf.mxu0
      %v1607 = vadd.f32 0.0, %v1606
      %1608 = vmatmul.bf16.gmra.mxu0 %v1523
      %v1609 = vpop.f32.mrf.mxu0
      %v1610 = vadd.f32 0.0, %v1609
      %v1611 = vpop.f32.mrf.mxu0
      %v1612 = vadd.f32 0.0, %v1611
      %1613 = vmatmul.bf16.gmra.mxu0 %v1526
      %v1614 = vpop.f32.mrf.mxu0
      %v1615 = vadd.f32 0.0, %v1614
      %v1616 = vpop.f32.mrf.mxu0
      %v1617 = vadd.f32 0.0, %v1616
      %1618 = vmatmul.bf16.gmra.mxu0 %v1529
      %v1619 = vpop.f32.mrf.mxu0
      %v1620 = vadd.f32 0.0, %v1619
      %v1621 = vpop.f32.mrf.mxu0
      %v1622 = vadd.f32 0.0, %v1621
      %1623 = vdwg.mxu0
      %v1656 = vunpack.c.l.b16 %v996
      %v1657 = vunpack.c.l.b16 %v997
      %v1658 = vunpack.c.l.b16 %v998
      %v1659 = vunpack.c.l.b16 %v999
      %v1660 = vunpack.c.l.b16 %v1000
      %v1661 = vunpack.c.l.b16 %v1001
      %v1662 = vunpack.c.l.b16 %v1002
      %v1663 = vunpack.c.l.b16 %v1003
      %v1664 = vunpack.c.l.b16 %v1004
      %v1665 = vunpack.c.l.b16 %v1005
      %v1666 = vunpack.c.l.b16 %v1006
      %v1667 = vunpack.c.l.b16 %v1007
      %v1668 = vunpack.c.l.b16 %v1008
      %v1669 = vunpack.c.l.b16 %v1009
      %v1670 = vunpack.c.l.b16 %v1010
      %v1671 = vunpack.c.l.b16 %v1011
      %v1672 = vunpack.c.l.b16 %v1012
      %v1673 = vunpack.c.l.b16 %v1013
      %v1674 = vunpack.c.l.b16 %v1014
      %v1675 = vunpack.c.l.b16 %v1015
      %v1676 = vunpack.c.l.b16 %v1016
      %v1677 = vunpack.c.l.b16 %v1017
      %v1678 = vunpack.c.l.b16 %v1018
      %v1679 = vunpack.c.l.b16 %v1019
      %v1680 = vunpack.c.l.b16 %v1020
      %v1681 = vunpack.c.l.b16 %v1021
      %v1682 = vunpack.c.l.b16 %v1022
      %v1683 = vunpack.c.l.b16 %v1023
      %v1684 = vunpack.c.l.b16 %v1024
      %v1685 = vunpack.c.l.b16 %v1025
      %v1686 = vunpack.c.l.b16 %v1026
      %v1687 = vunpack.c.l.b16 %v1027
      %v1688 = vpack.c.b16 %v1657, %v1656
      %v1689 = vpack.c.b16 %v1659, %v1658
      %v1690 = vpack.c.b16 %v1661, %v1660
      %v1691 = vpack.c.b16 %v1663, %v1662
      %v1692 = vpack.c.b16 %v1665, %v1664
      %v1693 = vpack.c.b16 %v1667, %v1666
      %v1694 = vpack.c.b16 %v1669, %v1668
      %v1695 = vpack.c.b16 %v1671, %v1670
      %v1696 = vpack.c.b16 %v1673, %v1672
      %v1697 = vpack.c.b16 %v1675, %v1674
      %v1698 = vpack.c.b16 %v1677, %v1676
      %v1699 = vpack.c.b16 %v1679, %v1678
      %v1700 = vpack.c.b16 %v1681, %v1680
      %v1701 = vpack.c.b16 %v1683, %v1682
      %v1702 = vpack.c.b16 %v1685, %v1684
      %v1703 = vpack.c.b16 %v1687, %v1686
      %v1705 = vsel %vm1482, %v1688, 0
      %v1708 = vsel %vm1482, %v1689, 0
      %v1711 = vsel %vm1482, %v1690, 0
      %v1714 = vsel %vm1482, %v1691, 0
      %v1717 = vsel %vm1482, %v1692, 0
      %v1720 = vsel %vm1482, %v1693, 0
      %v1723 = vsel %vm1482, %v1694, 0
      %v1726 = vsel %vm1482, %v1695, 0
      %v1729 = vsel %vm1482, %v1696, 0
      %v1732 = vsel %vm1482, %v1697, 0
      %v1735 = vsel %vm1482, %v1698, 0
      %v1738 = vsel %vm1482, %v1699, 0
      %v1741 = vsel %vm1482, %v1700, 0
      %v1744 = vsel %vm1482, %v1701, 0
      %v1747 = vsel %vm1482, %v1702, 0
      %v1750 = vsel %vm1482, %v1703, 0
      %v1753 = vsel %vm1531, %v1028, 0
      %1755 = vmatpush.bf16.msra.mxu0 0
      %1756 = vmatpush.bf16.msra.mxu0 0
      %1757 = vmatpush.bf16.msra.mxu0 0
      %1758 = vmatpush.bf16.msra.mxu0 0
      %1759 = vmatpush.bf16.msra.mxu0 0
      %1760 = vmatpush.bf16.msra.mxu0 0
      %1761 = vmatpush.bf16.msra.mxu0 0
      %1762 = vmatpush.bf16.msra.mxu0 %v1753
      %1763 = vmatmul.bf16.gmra.mxu0 %v1705
      %v1764 = vpop.f32.mrf.mxu0
      %v1765 = vadd.f32 %v1545, %v1764
      %v1766 = vpop.f32.mrf.mxu0
      %v1767 = vadd.f32 %v1547, %v1766
      %1768 = vmatmul.bf16.gmra.mxu0 %v1708
      %v1769 = vpop.f32.mrf.mxu0
      %v1770 = vadd.f32 %v1550, %v1769
      %v1771 = vpop.f32.mrf.mxu0
      %v1772 = vadd.f32 %v1552, %v1771
      %1773 = vmatmul.bf16.gmra.mxu0 %v1711
      %v1774 = vpop.f32.mrf.mxu0
      %v1775 = vadd.f32 %v1555, %v1774
      %v1776 = vpop.f32.mrf.mxu0
      %v1777 = vadd.f32 %v1557, %v1776
      %1778 = vmatmul.bf16.gmra.mxu0 %v1714
      %v1779 = vpop.f32.mrf.mxu0
      %v1780 = vadd.f32 %v1560, %v1779
      %v1781 = vpop.f32.mrf.mxu0
      %v1782 = vadd.f32 %v1562, %v1781
      %1783 = vmatmul.bf16.gmra.mxu0 %v1717
      %v1784 = vpop.f32.mrf.mxu0
      %v1785 = vadd.f32 %v1565, %v1784
      %v1786 = vpop.f32.mrf.mxu0
      %v1787 = vadd.f32 %v1567, %v1786
      %1788 = vmatmul.bf16.gmra.mxu0 %v1720
      %v1789 = vpop.f32.mrf.mxu0
      %v1790 = vadd.f32 %v1570, %v1789
      %v1791 = vpop.f32.mrf.mxu0
      %v1792 = vadd.f32 %v1572, %v1791
      %1793 = vmatmul.bf16.gmra.mxu0 %v1723
      %v1794 = vpop.f32.mrf.mxu0
      %v1795 = vadd.f32 %v1575, %v1794
      %v1796 = vpop.f32.mrf.mxu0
      %v1797 = vadd.f32 %v1577, %v1796
      %1798 = vmatmul.bf16.gmra.mxu0 %v1726
      %v1799 = vpop.f32.mrf.mxu0
      %v1800 = vadd.f32 %v1580, %v1799
      %v1801 = vpop.f32.mrf.mxu0
      %v1802 = vadd.f32 %v1582, %v1801
      %1803 = vmatmul.bf16.gmra.mxu0 %v1729
      %v1804 = vpop.f32.mrf.mxu0
      %v1805 = vadd.f32 %v1585, %v1804
      %v1806 = vpop.f32.mrf.mxu0
      %v1807 = vadd.f32 %v1587, %v1806
      %1808 = vmatmul.bf16.gmra.mxu0 %v1732
      %v1809 = vpop.f32.mrf.mxu0
      %v1810 = vadd.f32 %v1590, %v1809
      %v1811 = vpop.f32.mrf.mxu0
      %v1812 = vadd.f32 %v1592, %v1811
      %1813 = vmatmul.bf16.gmra.mxu0 %v1735
      %v1814 = vpop.f32.mrf.mxu0
      %v1815 = vadd.f32 %v1595, %v1814
      %v1816 = vpop.f32.mrf.mxu0
      %v1817 = vadd.f32 %v1597, %v1816
      %1818 = vmatmul.bf16.gmra.mxu0 %v1738
      %v1819 = vpop.f32.mrf.mxu0
      %v1820 = vadd.f32 %v1600, %v1819
      %v1821 = vpop.f32.mrf.mxu0
      %v1822 = vadd.f32 %v1602, %v1821
      %1823 = vmatmul.bf16.gmra.mxu0 %v1741
      %v1824 = vpop.f32.mrf.mxu0
      %v1825 = vadd.f32 %v1605, %v1824
      %v1826 = vpop.f32.mrf.mxu0
      %v1827 = vadd.f32 %v1607, %v1826
      %1828 = vmatmul.bf16.gmra.mxu0 %v1744
      %v1829 = vpop.f32.mrf.mxu0
      %v1830 = vadd.f32 %v1610, %v1829
      %v1831 = vpop.f32.mrf.mxu0
      %v1832 = vadd.f32 %v1612, %v1831
      %1833 = vmatmul.bf16.gmra.mxu0 %v1747
      %v1834 = vpop.f32.mrf.mxu0
      %v1835 = vadd.f32 %v1615, %v1834
      %v1836 = vpop.f32.mrf.mxu0
      %v1837 = vadd.f32 %v1617, %v1836
      %1838 = vmatmul.bf16.gmra.mxu0 %v1750
      %v1839 = vpop.f32.mrf.mxu0
      %v1840 = vadd.f32 %v1620, %v1839
      %v1841 = vpop.f32.mrf.mxu0
      %v1842 = vadd.f32 %v1622, %v1841
      %1843 = vdwg.mxu0
      %v1844 = vld [vmem:[#allocation2] sm:$0xe]
      %v1845 = vld [vmem:[#allocation2 + $0xc] sm:$0xe]
      %v1846 = vld [vmem:[#allocation2 + $0x18] sm:$0xe]
      %v1847 = vld [vmem:[#allocation2 + $0x24] sm:$0xe]
      %v1848 = vld [vmem:[#allocation2 + $0x30] sm:$0xe]
      %v1849 = vld [vmem:[#allocation2 + $0x3c] sm:$0xe]
      %v1850 = vld [vmem:[#allocation2 + $0x48] sm:$0xe]
      %v1851 = vld [vmem:[#allocation2 + $0x54] sm:$0xe]
      %v1852 = vld [vmem:[#allocation2 + $0x60] sm:$0xe]
      %v1853 = vld [vmem:[#allocation2 + $0x6c] sm:$0xe]
      %v1854 = vld [vmem:[#allocation2 + $0x78] sm:$0xe]
      %v1855 = vld [vmem:[#allocation2 + $0x84] sm:$0xe]
      %v1856 = vld [vmem:[#allocation2 + $0x90] sm:$0xe]
      %v1857 = vld [vmem:[#allocation2 + $0x9c] sm:$0xe]
      %v1858 = vld [vmem:[#allocation2 + $0xa8] sm:$0xe]
      %v1859 = vld [vmem:[#allocation2 + $0xb4] sm:$0xe]
      %vm1892 = vcmask 1042432
      %vm1893 = vcmask 1046532
      %vm1894 = vmor %vm1892, %vm1893
      %v1895 = vrot.slane %v1844, 5
      %v1896 = vrot.slane %v1895, 4
      %v1897 = vrot.slane %v997, 5
      %v1898 = vsel %vm1894, %v1896, %v1897
      %v1899 = vrot.slane %v1897, 4
      %v1900 = vrot.slane %v1029, 5
      %v1901 = vsel %vm1894, %v1899, %v1900
      %v1902 = vrot.slane %v1845, 5
      %v1903 = vrot.slane %v1902, 4
      %v1904 = vrot.slane %v999, 5
      %v1905 = vsel %vm1894, %v1903, %v1904
      %v1906 = vrot.slane %v1904, 4
      %v1907 = vrot.slane %v1030, 5
      %v1908 = vsel %vm1894, %v1906, %v1907
      %v1909 = vrot.slane %v1846, 5
      %v1910 = vrot.slane %v1909, 4
      %v1911 = vrot.slane %v1001, 5
      %v1912 = vsel %vm1894, %v1910, %v1911
      %v1913 = vrot.slane %v1911, 4
      %v1914 = vrot.slane %v1031, 5
      %v1915 = vsel %vm1894, %v1913, %v1914
      %v1916 = vrot.slane %v1847, 5
      %v1917 = vrot.slane %v1916, 4
      %v1918 = vrot.slane %v1003, 5
      %v1919 = vsel %vm1894, %v1917, %v1918
      %v1920 = vrot.slane %v1918, 4
      %v1921 = vrot.slane %v1032, 5
      %v1922 = vsel %vm1894, %v1920, %v1921
      %v1923 = vrot.slane %v1848, 5
      %v1924 = vrot.slane %v1923, 4
      %v1925 = vrot.slane %v1005, 5
      %v1926 = vsel %vm1894, %v1924, %v1925
      %v1927 = vrot.slane %v1925, 4
      %v1928 = vrot.slane %v1033, 5
      %v1929 = vsel %vm1894, %v1927, %v1928
      %v1930 = vrot.slane %v1849, 5
      %v1931 = vrot.slane %v1930, 4
      %v1932 = vrot.slane %v1007, 5
      %v1933 = vsel %vm1894, %v1931, %v1932
      %v1934 = vrot.slane %v1932, 4
      %v1935 = vrot.slane %v1034, 5
      %v1936 = vsel %vm1894, %v1934, %v1935
      %v1937 = vrot.slane %v1850, 5
      %v1938 = vrot.slane %v1937, 4
      %v1939 = vrot.slane %v1009, 5
      %v1940 = vsel %vm1894, %v1938, %v1939
      %v1941 = vrot.slane %v1939, 4
      %v1942 = vrot.slane %v1035, 5
      %v1943 = vsel %vm1894, %v1941, %v1942
      %v1944 = vrot.slane %v1851, 5
      %v1945 = vrot.slane %v1944, 4
      %v1946 = vrot.slane %v1011, 5
      %v1947 = vsel %vm1894, %v1945, %v1946
      %v1948 = vrot.slane %v1946, 4
      %v1949 = vrot.slane %v1036, 5
      %v1950 = vsel %vm1894, %v1948, %v1949
      %v1951 = vrot.slane %v1852, 5
      %v1952 = vrot.slane %v1951, 4
      %v1953 = vrot.slane %v1013, 5
      %v1954 = vsel %vm1894, %v1952, %v1953
      %v1955 = vrot.slane %v1953, 4
      %v1956 = vrot.slane %v1037, 5
      %v1957 = vsel %vm1894, %v1955, %v1956
      %v1958 = vrot.slane %v1853, 5
      %v1959 = vrot.slane %v1958, 4
      %v1960 = vrot.slane %v1015, 5
      %v1961 = vsel %vm1894, %v1959, %v1960
      %v1962 = vrot.slane %v1960, 4
      %v1963 = vrot.slane %v1038, 5
      %v1964 = vsel %vm1894, %v1962, %v1963
      %v1965 = vrot.slane %v1854, 5
      %v1966 = vrot.slane %v1965, 4
      %v1967 = vrot.slane %v1017, 5
      %v1968 = vsel %vm1894, %v1966, %v1967
      %v1969 = vrot.slane %v1967, 4
      %v1970 = vrot.slane %v1039, 5
      %v1971 = vsel %vm1894, %v1969, %v1970
      %v1972 = vrot.slane %v1855, 5
      %v1973 = vrot.slane %v1972, 4
      %v1974 = vrot.slane %v1019, 5
      %v1975 = vsel %vm1894, %v1973, %v1974
      %v1976 = vrot.slane %v1974, 4
      %v1977 = vrot.slane %v1040, 5
      %v1978 = vsel %vm1894, %v1976, %v1977
      %v1979 = vrot.slane %v1856, 5
      %v1980 = vrot.slane %v1979, 4
      %v1981 = vrot.slane %v1021, 5
      %v1982 = vsel %vm1894, %v1980, %v1981
      %v1983 = vrot.slane %v1981, 4
      %v1984 = vrot.slane %v1041, 5
      %v1985 = vsel %vm1894, %v1983, %v1984
      %v1986 = vrot.slane %v1857, 5
      %v1987 = vrot.slane %v1986, 4
      %v1988 = vrot.slane %v1023, 5
      %v1989 = vsel %vm1894, %v1987, %v1988
      %v1990 = vrot.slane %v1988, 4
      %v1991 = vrot.slane %v1042, 5
      %v1992 = vsel %vm1894, %v1990, %v1991
      %v1993 = vrot.slane %v1858, 5
      %v1994 = vrot.slane %v1993, 4
      %v1995 = vrot.slane %v1025, 5
      %v1996 = vsel %vm1894, %v1994, %v1995
      %v1997 = vrot.slane %v1995, 4
      %v1998 = vrot.slane %v1043, 5
      %v1999 = vsel %vm1894, %v1997, %v1998
      %v2000 = vrot.slane %v1859, 5
      %v2001 = vrot.slane %v2000, 4
      %v2002 = vrot.slane %v1027, 5
      %v2003 = vsel %vm1894, %v2001, %v2002
      %v2004 = vrot.slane %v2002, 4
      %v2005 = vrot.slane %v1044, 5
      %v2006 = vsel %vm1894, %v2004, %v2005
      %s2007 = scalar_lea.vmem %s3, 4
      %v2008 = vld [vmem:[%s2007] sm:$0x3]
      %v2009 = vunpack.c.l.b16 %v1898
      %v2010 = vunpack.c.l.b16 %v1901
      %v2011 = vunpack.c.l.b16 %v1905
      %v2012 = vunpack.c.l.b16 %v1908
      %v2013 = vunpack.c.l.b16 %v1912
      %v2014 = vunpack.c.l.b16 %v1915
      %v2015 = vunpack.c.l.b16 %v1919
      %v2016 = vunpack.c.l.b16 %v1922
      %v2017 = vunpack.c.l.b16 %v1926
      %v2018 = vunpack.c.l.b16 %v1929
      %v2019 = vunpack.c.l.b16 %v1933
      %v2020 = vunpack.c.l.b16 %v1936
      %v2021 = vunpack.c.l.b16 %v1940
      %v2022 = vunpack.c.l.b16 %v1943
      %v2023 = vunpack.c.l.b16 %v1947
      %v2024 = vunpack.c.l.b16 %v1950
      %v2025 = vunpack.c.l.b16 %v1954
      %v2026 = vunpack.c.l.b16 %v1957
      %v2027 = vunpack.c.l.b16 %v1961
      %v2028 = vunpack.c.l.b16 %v1964
      %v2029 = vunpack.c.l.b16 %v1968
      %v2030 = vunpack.c.l.b16 %v1971
      %v2031 = vunpack.c.l.b16 %v1975
      %v2032 = vunpack.c.l.b16 %v1978
      %v2033 = vunpack.c.l.b16 %v1982
      %v2034 = vunpack.c.l.b16 %v1985
      %v2035 = vunpack.c.l.b16 %v1989
      %v2036 = vunpack.c.l.b16 %v1992
      %v2037 = vunpack.c.l.b16 %v1996
      %v2038 = vunpack.c.l.b16 %v1999
      %v2039 = vunpack.c.l.b16 %v2003
      %v2040 = vunpack.c.l.b16 %v2006
      %v2041 = vpack.c.b16 %v2010, %v2009
      %v2042 = vpack.c.b16 %v2012, %v2011
      %v2043 = vpack.c.b16 %v2014, %v2013
      %v2044 = vpack.c.b16 %v2016, %v2015
      %v2045 = vpack.c.b16 %v2018, %v2017
      %v2046 = vpack.c.b16 %v2020, %v2019
      %v2047 = vpack.c.b16 %v2022, %v2021
      %v2048 = vpack.c.b16 %v2024, %v2023
      %v2049 = vpack.c.b16 %v2026, %v2025
      %v2050 = vpack.c.b16 %v2028, %v2027
      %v2051 = vpack.c.b16 %v2030, %v2029
      %v2052 = vpack.c.b16 %v2032, %v2031
      %v2053 = vpack.c.b16 %v2034, %v2033
      %v2054 = vpack.c.b16 %v2036, %v2035
      %v2055 = vpack.c.b16 %v2038, %v2037
      %v2056 = vpack.c.b16 %v2040, %v2039
      %v2058 = vsel %vm1482, %v2041, 0
      %v2061 = vsel %vm1482, %v2042, 0
      %v2064 = vsel %vm1482, %v2043, 0
      %v2067 = vsel %vm1482, %v2044, 0
      %v2070 = vsel %vm1482, %v2045, 0
      %v2073 = vsel %vm1482, %v2046, 0
      %v2076 = vsel %vm1482, %v2047, 0
      %v2079 = vsel %vm1482, %v2048, 0
      %v2082 = vsel %vm1482, %v2049, 0
      %v2085 = vsel %vm1482, %v2050, 0
      %v2088 = vsel %vm1482, %v2051, 0
      %v2091 = vsel %vm1482, %v2052, 0
      %v2094 = vsel %vm1482, %v2053, 0
      %v2097 = vsel %vm1482, %v2054, 0
      %v2100 = vsel %vm1482, %v2055, 0
      %v2103 = vsel %vm1482, %v2056, 0
      %v2106 = vsel %vm1531, %v2008, 0
      %2108 = vmatpush.bf16.msra.mxu0 0
      %2109 = vmatpush.bf16.msra.mxu0 0
      %2110 = vmatpush.bf16.msra.mxu0 0
      %2111 = vmatpush.bf16.msra.mxu0 0
      %2112 = vmatpush.bf16.msra.mxu0 0
      %2113 = vmatpush.bf16.msra.mxu0 0
      %2114 = vmatpush.bf16.msra.mxu0 0
      %2115 = vmatpush.bf16.msra.mxu0 %v2106
      %2116 = vmatmul.bf16.gmra.mxu0 %v2058
      %v2117 = vpop.f32.mrf.mxu0
      %v2118 = vadd.f32 0.0, %v2117
      %v2119 = vpop.f32.mrf.mxu0
      %v2120 = vadd.f32 0.0, %v2119
      %2121 = vmatmul.bf16.gmra.mxu0 %v2061
      %v2122 = vpop.f32.mrf.mxu0
      %v2123 = vadd.f32 0.0, %v2122
      %v2124 = vpop.f32.mrf.mxu0
      %v2125 = vadd.f32 0.0, %v2124
      %2126 = vmatmul.bf16.gmra.mxu0 %v2064
      %v2127 = vpop.f32.mrf.mxu0
      %v2128 = vadd.f32 0.0, %v2127
      %v2129 = vpop.f32.mrf.mxu0
      %v2130 = vadd.f32 0.0, %v2129
      %2131 = vmatmul.bf16.gmra.mxu0 %v2067
      %v2132 = vpop.f32.mrf.mxu0
      %v2133 = vadd.f32 0.0, %v2132
      %v2134 = vpop.f32.mrf.mxu0
      %v2135 = vadd.f32 0.0, %v2134
      %2136 = vmatmul.bf16.gmra.mxu0 %v2070
      %v2137 = vpop.f32.mrf.mxu0
      %v2138 = vadd.f32 0.0, %v2137
      %v2139 = vpop.f32.mrf.mxu0
      %v2140 = vadd.f32 0.0, %v2139
      %2141 = vmatmul.bf16.gmra.mxu0 %v2073
      %v2142 = vpop.f32.mrf.mxu0
      %v2143 = vadd.f32 0.0, %v2142
      %v2144 = vpop.f32.mrf.mxu0
      %v2145 = vadd.f32 0.0, %v2144
      %2146 = vmatmul.bf16.gmra.mxu0 %v2076
      %v2147 = vpop.f32.mrf.mxu0
      %v2148 = vadd.f32 0.0, %v2147
      %v2149 = vpop.f32.mrf.mxu0
      %v2150 = vadd.f32 0.0, %v2149
      %2151 = vmatmul.bf16.gmra.mxu0 %v2079
      %v2152 = vpop.f32.mrf.mxu0
      %v2153 = vadd.f32 0.0, %v2152
      %v2154 = vpop.f32.mrf.mxu0
      %v2155 = vadd.f32 0.0, %v2154
      %2156 = vmatmul.bf16.gmra.mxu0 %v2082
      %v2157 = vpop.f32.mrf.mxu0
      %v2158 = vadd.f32 0.0, %v2157
      %v2159 = vpop.f32.mrf.mxu0
      %v2160 = vadd.f32 0.0, %v2159
      %2161 = vmatmul.bf16.gmra.mxu0 %v2085
      %v2162 = vpop.f32.mrf.mxu0
      %v2163 = vadd.f32 0.0, %v2162
      %v2164 = vpop.f32.mrf.mxu0
      %v2165 = vadd.f32 0.0, %v2164
      %2166 = vmatmul.bf16.gmra.mxu0 %v2088
      %v2167 = vpop.f32.mrf.mxu0
      %v2168 = vadd.f32 0.0, %v2167
      %v2169 = vpop.f32.mrf.mxu0
      %v2170 = vadd.f32 0.0, %v2169
      %2171 = vmatmul.bf16.gmra.mxu0 %v2091
      %v2172 = vpop.f32.mrf.mxu0
      %v2173 = vadd.f32 0.0, %v2172
      %v2174 = vpop.f32.mrf.mxu0
      %v2175 = vadd.f32 0.0, %v2174
      %2176 = vmatmul.bf16.gmra.mxu0 %v2094
      %v2177 = vpop.f32.mrf.mxu0
      %v2178 = vadd.f32 0.0, %v2177
      %v2179 = vpop.f32.mrf.mxu0
      %v2180 = vadd.f32 0.0, %v2179
      %2181 = vmatmul.bf16.gmra.mxu0 %v2097
      %v2182 = vpop.f32.mrf.mxu0
      %v2183 = vadd.f32 0.0, %v2182
      %v2184 = vpop.f32.mrf.mxu0
      %v2185 = vadd.f32 0.0, %v2184
      %2186 = vmatmul.bf16.gmra.mxu0 %v2100
      %v2187 = vpop.f32.mrf.mxu0
      %v2188 = vadd.f32 0.0, %v2187
      %v2189 = vpop.f32.mrf.mxu0
      %v2190 = vadd.f32 0.0, %v2189
      %2191 = vmatmul.bf16.gmra.mxu0 %v2103
      %v2192 = vpop.f32.mrf.mxu0
      %v2193 = vadd.f32 0.0, %v2192
      %v2194 = vpop.f32.mrf.mxu0
      %v2195 = vadd.f32 0.0, %v2194
      %2196 = vdwg.mxu0
      %v2197 = vadd.f32 %v1765, %v2118
      %v2198 = vadd.f32 %v1767, %v2120
      %v2199 = vadd.f32 %v1770, %v2123
      %v2200 = vadd.f32 %v1772, %v2125
      %v2201 = vadd.f32 %v1775, %v2128
      %v2202 = vadd.f32 %v1777, %v2130
      %v2203 = vadd.f32 %v1780, %v2133
      %v2204 = vadd.f32 %v1782, %v2135
      %v2205 = vadd.f32 %v1785, %v2138
      %v2206 = vadd.f32 %v1787, %v2140
      %v2207 = vadd.f32 %v1790, %v2143
      %v2208 = vadd.f32 %v1792, %v2145
      %v2209 = vadd.f32 %v1795, %v2148
      %v2210 = vadd.f32 %v1797, %v2150
      %v2211 = vadd.f32 %v1800, %v2153
      %v2212 = vadd.f32 %v1802, %v2155
      %v2213 = vadd.f32 %v1805, %v2158
      %v2214 = vadd.f32 %v1807, %v2160
      %v2215 = vadd.f32 %v1810, %v2163
      %v2216 = vadd.f32 %v1812, %v2165
      %v2217 = vadd.f32 %v1815, %v2168
      %v2218 = vadd.f32 %v1817, %v2170
      %v2219 = vadd.f32 %v1820, %v2173
      %v2220 = vadd.f32 %v1822, %v2175
      %v2221 = vadd.f32 %v1825, %v2178
      %v2222 = vadd.f32 %v1827, %v2180
      %v2223 = vadd.f32 %v1830, %v2183
      %v2224 = vadd.f32 %v1832, %v2185
      %v2225 = vadd.f32 %v1835, %v2188
      %v2226 = vadd.f32 %v1837, %v2190
      %v2227 = vadd.f32 %v1840, %v2193
      %v2228 = vadd.f32 %v1842, %v2195
      %v2229 = vld [vmem:[%s881] sm:$0xf]
      %v2230 = vld [vmem:[%s881 + $0x4] sm:$0xf]
      %v2231 = vld [vmem:[%s881 + $0xc] sm:$0xf]
      %v2232 = vld [vmem:[%s881 + $0x10] sm:$0xf]
      %v2233 = vld [vmem:[%s881 + $0x18] sm:$0xf]
      %v2234 = vld [vmem:[%s881 + $0x1c] sm:$0xf]
      %v2235 = vld [vmem:[%s881 + $0x24] sm:$0xf]
      %v2236 = vld [vmem:[%s881 + $0x28] sm:$0xf]
      %v2237 = vld [vmem:[%s881 + $0x30] sm:$0xf]
      %v2238 = vld [vmem:[%s881 + $0x34] sm:$0xf]
      %v2239 = vld [vmem:[%s881 + $0x3c] sm:$0xf]
      %v2240 = vld [vmem:[%s881 + $0x40] sm:$0xf]
      %v2241 = vld [vmem:[%s881 + $0x48] sm:$0xf]
      %v2242 = vld [vmem:[%s881 + $0x4c] sm:$0xf]
      %v2243 = vld [vmem:[%s881 + $0x54] sm:$0xf]
      %v2244 = vld [vmem:[%s881 + $0x58] sm:$0xf]
      %v2245 = vld [vmem:[%s881 + $0x60] sm:$0xf]
      %v2246 = vld [vmem:[%s881 + $0x64] sm:$0xf]
      %v2247 = vld [vmem:[%s881 + $0x6c] sm:$0xf]
      %v2248 = vld [vmem:[%s881 + $0x70] sm:$0xf]
      %v2249 = vld [vmem:[%s881 + $0x78] sm:$0xf]
      %v2250 = vld [vmem:[%s881 + $0x7c] sm:$0xf]
      %v2251 = vld [vmem:[%s881 + $0x84] sm:$0xf]
      %v2252 = vld [vmem:[%s881 + $0x88] sm:$0xf]
      %v2253 = vld [vmem:[%s881 + $0x90] sm:$0xf]
      %v2254 = vld [vmem:[%s881 + $0x94] sm:$0xf]
      %v2255 = vld [vmem:[%s881 + $0x9c] sm:$0xf]
      %v2256 = vld [vmem:[%s881 + $0xa0] sm:$0xf]
      %v2257 = vld [vmem:[%s881 + $0xa8] sm:$0xf]
      %v2258 = vld [vmem:[%s881 + $0xac] sm:$0xf]
      %v2259 = vld [vmem:[%s881 + $0xb4] sm:$0xf]
      %v2260 = vld [vmem:[%s881 + $0xb8] sm:$0xf]
      %s2261 = scalar_lea.vmem %s3, 6
      %v2262 = vld [vmem:[%s2261] sm:$0x3]
      %v2295 = vunpack.c.l.b16 %v2229
      %v2296 = vunpack.c.l.b16 %v2230
      %v2297 = vunpack.c.l.b16 %v2231
      %v2298 = vunpack.c.l.b16 %v2232
      %v2299 = vunpack.c.l.b16 %v2233
      %v2300 = vunpack.c.l.b16 %v2234
      %v2301 = vunpack.c.l.b16 %v2235
      %v2302 = vunpack.c.l.b16 %v2236
      %v2303 = vunpack.c.l.b16 %v2237
      %v2304 = vunpack.c.l.b16 %v2238
      %v2305 = vunpack.c.l.b16 %v2239
      %v2306 = vunpack.c.l.b16 %v2240
      %v2307 = vunpack.c.l.b16 %v2241
      %v2308 = vunpack.c.l.b16 %v2242
      %v2309 = vunpack.c.l.b16 %v2243
      %v2310 = vunpack.c.l.b16 %v2244
      %v2311 = vunpack.c.l.b16 %v2245
      %v2312 = vunpack.c.l.b16 %v2246
      %v2313 = vunpack.c.l.b16 %v2247
      %v2314 = vunpack.c.l.b16 %v2248
      %v2315 = vunpack.c.l.b16 %v2249
      %v2316 = vunpack.c.l.b16 %v2250
      %v2317 = vunpack.c.l.b16 %v2251
      %v2318 = vunpack.c.l.b16 %v2252
      %v2319 = vunpack.c.l.b16 %v2253
      %v2320 = vunpack.c.l.b16 %v2254
      %v2321 = vunpack.c.l.b16 %v2255
      %v2322 = vunpack.c.l.b16 %v2256
      %v2323 = vunpack.c.l.b16 %v2257
      %v2324 = vunpack.c.l.b16 %v2258
      %v2325 = vunpack.c.l.b16 %v2259
      %v2326 = vunpack.c.l.b16 %v2260
      %v2327 = vpack.c.b16 %v2296, %v2295
      %v2328 = vpack.c.b16 %v2298, %v2297
      %v2329 = vpack.c.b16 %v2300, %v2299
      %v2330 = vpack.c.b16 %v2302, %v2301
      %v2331 = vpack.c.b16 %v2304, %v2303
      %v2332 = vpack.c.b16 %v2306, %v2305
      %v2333 = vpack.c.b16 %v2308, %v2307
      %v2334 = vpack.c.b16 %v2310, %v2309
      %v2335 = vpack.c.b16 %v2312, %v2311
      %v2336 = vpack.c.b16 %v2314, %v2313
      %v2337 = vpack.c.b16 %v2316, %v2315
      %v2338 = vpack.c.b16 %v2318, %v2317
      %v2339 = vpack.c.b16 %v2320, %v2319
      %v2340 = vpack.c.b16 %v2322, %v2321
      %v2341 = vpack.c.b16 %v2324, %v2323
      %v2342 = vpack.c.b16 %v2326, %v2325
      %v2344 = vsel %vm1482, %v2327, 0
      %v2347 = vsel %vm1482, %v2328, 0
      %v2350 = vsel %vm1482, %v2329, 0
      %v2353 = vsel %vm1482, %v2330, 0
      %v2356 = vsel %vm1482, %v2331, 0
      %v2359 = vsel %vm1482, %v2332, 0
      %v2362 = vsel %vm1482, %v2333, 0
      %v2365 = vsel %vm1482, %v2334, 0
      %v2368 = vsel %vm1482, %v2335, 0
      %v2371 = vsel %vm1482, %v2336, 0
      %v2374 = vsel %vm1482, %v2337, 0
      %v2377 = vsel %vm1482, %v2338, 0
      %v2380 = vsel %vm1482, %v2339, 0
      %v2383 = vsel %vm1482, %v2340, 0
      %v2386 = vsel %vm1482, %v2341, 0
      %v2389 = vsel %vm1482, %v2342, 0
      %v2392 = vsel %vm1531, %v2262, 0
      %2394 = vmatpush.bf16.msra.mxu0 0
      %2395 = vmatpush.bf16.msra.mxu0 0
      %2396 = vmatpush.bf16.msra.mxu0 0
      %2397 = vmatpush.bf16.msra.mxu0 0
      %2398 = vmatpush.bf16.msra.mxu0 0
      %2399 = vmatpush.bf16.msra.mxu0 0
      %2400 = vmatpush.bf16.msra.mxu0 0
      %2401 = vmatpush.bf16.msra.mxu0 %v2392
      %2402 = vmatmul.bf16.gmra.mxu0 %v2344
      %v2403 = vpop.f32.mrf.mxu0
      %v2404 = vadd.f32 0.0, %v2403
      %v2405 = vpop.f32.mrf.mxu0
      %v2406 = vadd.f32 0.0, %v2405
      %2407 = vmatmul.bf16.gmra.mxu0 %v2347
      %v2408 = vpop.f32.mrf.mxu0
      %v2409 = vadd.f32 0.0, %v2408
      %v2410 = vpop.f32.mrf.mxu0
      %v2411 = vadd.f32 0.0, %v2410
      %2412 = vmatmul.bf16.gmra.mxu0 %v2350
      %v2413 = vpop.f32.mrf.mxu0
      %v2414 = vadd.f32 0.0, %v2413
      %v2415 = vpop.f32.mrf.mxu0
      %v2416 = vadd.f32 0.0, %v2415
      %2417 = vmatmul.bf16.gmra.mxu0 %v2353
      %v2418 = vpop.f32.mrf.mxu0
      %v2419 = vadd.f32 0.0, %v2418
      %v2420 = vpop.f32.mrf.mxu0
      %v2421 = vadd.f32 0.0, %v2420
      %2422 = vmatmul.bf16.gmra.mxu0 %v2356
      %v2423 = vpop.f32.mrf.mxu0
      %v2424 = vadd.f32 0.0, %v2423
      %v2425 = vpop.f32.mrf.mxu0
      %v2426 = vadd.f32 0.0, %v2425
      %2427 = vmatmul.bf16.gmra.mxu0 %v2359
      %v2428 = vpop.f32.mrf.mxu0
      %v2429 = vadd.f32 0.0, %v2428
      %v2430 = vpop.f32.mrf.mxu0
      %v2431 = vadd.f32 0.0, %v2430
      %2432 = vmatmul.bf16.gmra.mxu0 %v2362
      %v2433 = vpop.f32.mrf.mxu0
      %v2434 = vadd.f32 0.0, %v2433
      %v2435 = vpop.f32.mrf.mxu0
      %v2436 = vadd.f32 0.0, %v2435
      %2437 = vmatmul.bf16.gmra.mxu0 %v2365
      %v2438 = vpop.f32.mrf.mxu0
      %v2439 = vadd.f32 0.0, %v2438
      %v2440 = vpop.f32.mrf.mxu0
      %v2441 = vadd.f32 0.0, %v2440
      %2442 = vmatmul.bf16.gmra.mxu0 %v2368
      %v2443 = vpop.f32.mrf.mxu0
      %v2444 = vadd.f32 0.0, %v2443
      %v2445 = vpop.f32.mrf.mxu0
      %v2446 = vadd.f32 0.0, %v2445
      %2447 = vmatmul.bf16.gmra.mxu0 %v2371
      %v2448 = vpop.f32.mrf.mxu0
      %v2449 = vadd.f32 0.0, %v2448
      %v2450 = vpop.f32.mrf.mxu0
      %v2451 = vadd.f32 0.0, %v2450
      %2452 = vmatmul.bf16.gmra.mxu0 %v2374
      %v2453 = vpop.f32.mrf.mxu0
      %v2454 = vadd.f32 0.0, %v2453
      %v2455 = vpop.f32.mrf.mxu0
      %v2456 = vadd.f32 0.0, %v2455
      %2457 = vmatmul.bf16.gmra.mxu0 %v2377
      %v2458 = vpop.f32.mrf.mxu0
      %v2459 = vadd.f32 0.0, %v2458
      %v2460 = vpop.f32.mrf.mxu0
      %v2461 = vadd.f32 0.0, %v2460
      %2462 = vmatmul.bf16.gmra.mxu0 %v2380
      %v2463 = vpop.f32.mrf.mxu0
      %v2464 = vadd.f32 0.0, %v2463
      %v2465 = vpop.f32.mrf.mxu0
      %v2466 = vadd.f32 0.0, %v2465
      %2467 = vmatmul.bf16.gmra.mxu0 %v2383
      %v2468 = vpop.f32.mrf.mxu0
      %v2469 = vadd.f32 0.0, %v2468
      %v2470 = vpop.f32.mrf.mxu0
      %v2471 = vadd.f32 0.0, %v2470
      %2472 = vmatmul.bf16.gmra.mxu0 %v2386
      %v2473 = vpop.f32.mrf.mxu0
      %v2474 = vadd.f32 0.0, %v2473
      %v2475 = vpop.f32.mrf.mxu0
      %v2476 = vadd.f32 0.0, %v2475
      %2477 = vmatmul.bf16.gmra.mxu0 %v2389
      %v2478 = vpop.f32.mrf.mxu0
      %v2479 = vadd.f32 0.0, %v2478
      %v2480 = vpop.f32.mrf.mxu0
      %v2481 = vadd.f32 0.0, %v2480
      %2482 = vdwg.mxu0
      %v2483 = vadd.f32 %v2197, %v2404
      %v2484 = vadd.f32 %v2198, %v2406
      %v2485 = vadd.f32 %v2199, %v2409
      %v2486 = vadd.f32 %v2200, %v2411
      %v2487 = vadd.f32 %v2201, %v2414
      %v2488 = vadd.f32 %v2202, %v2416
      %v2489 = vadd.f32 %v2203, %v2419
      %v2490 = vadd.f32 %v2204, %v2421
      %v2491 = vadd.f32 %v2205, %v2424
      %v2492 = vadd.f32 %v2206, %v2426
      %v2493 = vadd.f32 %v2207, %v2429
      %v2494 = vadd.f32 %v2208, %v2431
      %v2495 = vadd.f32 %v2209, %v2434
      %v2496 = vadd.f32 %v2210, %v2436
      %v2497 = vadd.f32 %v2211, %v2439
      %v2498 = vadd.f32 %v2212, %v2441
      %v2499 = vadd.f32 %v2213, %v2444
      %v2500 = vadd.f32 %v2214, %v2446
      %v2501 = vadd.f32 %v2215, %v2449
      %v2502 = vadd.f32 %v2216, %v2451
      %v2503 = vadd.f32 %v2217, %v2454
      %v2504 = vadd.f32 %v2218, %v2456
      %v2505 = vadd.f32 %v2219, %v2459
      %v2506 = vadd.f32 %v2220, %v2461
      %v2507 = vadd.f32 %v2221, %v2464
      %v2508 = vadd.f32 %v2222, %v2466
      %v2509 = vadd.f32 %v2223, %v2469
      %v2510 = vadd.f32 %v2224, %v2471
      %v2511 = vadd.f32 %v2225, %v2474
      %v2512 = vadd.f32 %v2226, %v2476
      %v2513 = vadd.f32 %v2227, %v2479
      %v2514 = vadd.f32 %v2228, %v2481
      %v2515 = vld [vmem:[%s881] sm:$0xf]
      %v2516 = vld [vmem:[%s881 + $0x4] sm:$0xf]
      %v2517 = vld [vmem:[%s881 + $0x8] sm:$0x1]
      %v2518 = vld [vmem:[%s881 + $0xc] sm:$0xf]
      %v2519 = vld [vmem:[%s881 + $0x10] sm:$0xf]
      %v2520 = vld [vmem:[%s881 + $0x14] sm:$0x1]
      %v2521 = vld [vmem:[%s881 + $0x18] sm:$0xf]
      %v2522 = vld [vmem:[%s881 + $0x1c] sm:$0xf]
      %v2523 = vld [vmem:[%s881 + $0x20] sm:$0x1]
      %v2524 = vld [vmem:[%s881 + $0x24] sm:$0xf]
      %v2525 = vld [vmem:[%s881 + $0x28] sm:$0xf]
      %v2526 = vld [vmem:[%s881 + $0x2c] sm:$0x1]
      %v2527 = vld [vmem:[%s881 + $0x30] sm:$0xf]
      %v2528 = vld [vmem:[%s881 + $0x34] sm:$0xf]
      %v2529 = vld [vmem:[%s881 + $0x38] sm:$0x1]
      %v2530 = vld [vmem:[%s881 + $0x3c] sm:$0xf]
      %v2531 = vld [vmem:[%s881 + $0x40] sm:$0xf]
      %v2532 = vld [vmem:[%s881 + $0x44] sm:$0x1]
      %v2533 = vld [vmem:[%s881 + $0x48] sm:$0xf]
      %v2534 = vld [vmem:[%s881 + $0x4c] sm:$0xf]
      %v2535 = vld [vmem:[%s881 + $0x50] sm:$0x1]
      %v2536 = vld [vmem:[%s881 + $0x54] sm:$0xf]
      %v2537 = vld [vmem:[%s881 + $0x58] sm:$0xf]
      %v2538 = vld [vmem:[%s881 + $0x5c] sm:$0x1]
      %v2539 = vld [vmem:[%s881 + $0x60] sm:$0xf]
      %v2540 = vld [vmem:[%s881 + $0x64] sm:$0xf]
      %v2541 = vld [vmem:[%s881 + $0x68] sm:$0x1]
      %v2542 = vld [vmem:[%s881 + $0x6c] sm:$0xf]
      %v2543 = vld [vmem:[%s881 + $0x70] sm:$0xf]
      %v2544 = vld [vmem:[%s881 + $0x74] sm:$0x1]
      %v2545 = vld [vmem:[%s881 + $0x78] sm:$0xf]
      %v2546 = vld [vmem:[%s881 + $0x7c] sm:$0xf]
      %v2547 = vld [vmem:[%s881 + $0x80] sm:$0x1]
      %v2548 = vld [vmem:[%s881 + $0x84] sm:$0xf]
      %v2549 = vld [vmem:[%s881 + $0x88] sm:$0xf]
      %v2550 = vld [vmem:[%s881 + $0x8c] sm:$0x1]
      %v2551 = vld [vmem:[%s881 + $0x90] sm:$0xf]
      %v2552 = vld [vmem:[%s881 + $0x94] sm:$0xf]
      %v2553 = vld [vmem:[%s881 + $0x98] sm:$0x1]
      %v2554 = vld [vmem:[%s881 + $0x9c] sm:$0xf]
      %v2555 = vld [vmem:[%s881 + $0xa0] sm:$0xf]
      %v2556 = vld [vmem:[%s881 + $0xa4] sm:$0x1]
      %v2557 = vld [vmem:[%s881 + $0xa8] sm:$0xf]
      %v2558 = vld [vmem:[%s881 + $0xac] sm:$0xf]
      %v2559 = vld [vmem:[%s881 + $0xb0] sm:$0x1]
      %v2560 = vld [vmem:[%s881 + $0xb4] sm:$0xf]
      %v2561 = vld [vmem:[%s881 + $0xb8] sm:$0xf]
      %v2562 = vld [vmem:[%s881 + $0xbc] sm:$0x1]
      %v2564 = vshrl.u32 %v2515, 16
      %v2566 = vrot.slane %v2564, 4
      %v2567 = vshll.u32 %v2515, 16
      %v2569 = vrot.slane %v2567, 5
      %v2570 = vor.u32 %v2566, %v2569
      %v2571 = vrot.slane %v2570, 4
      %v2573 = vshll.u32 %v2516, 16
      %v2575 = vrot.slane %v2573, 5
      %v2576 = vsel %vm1047, %v2571, %v2575
      %v2577 = vshrl.u32 %v2516, 16
      %v2579 = vrot.slane %v2577, 4
      %v2580 = vor.u32 %v2579, %v2575
      %v2581 = vrot.slane %v2580, 4
      %v2583 = vshll.u32 %v2517, 16
      %v2585 = vrot.slane %v2583, 5
      %v2586 = vsel %vm1047, %v2581, %v2585
      %v2588 = vshrl.u32 %v2518, 16
      %v2590 = vrot.slane %v2588, 4
      %v2591 = vshll.u32 %v2518, 16
      %v2593 = vrot.slane %v2591, 5
      %v2594 = vor.u32 %v2590, %v2593
      %v2595 = vrot.slane %v2594, 4
      %v2597 = vshll.u32 %v2519, 16
      %v2599 = vrot.slane %v2597, 5
      %v2600 = vsel %vm1047, %v2595, %v2599
      %v2601 = vshrl.u32 %v2519, 16
      %v2603 = vrot.slane %v2601, 4
      %v2604 = vor.u32 %v2603, %v2599
      %v2605 = vrot.slane %v2604, 4
      %v2607 = vshll.u32 %v2520, 16
      %v2609 = vrot.slane %v2607, 5
      %v2610 = vsel %vm1047, %v2605, %v2609
      %v2612 = vshrl.u32 %v2521, 16
      %v2614 = vrot.slane %v2612, 4
      %v2615 = vshll.u32 %v2521, 16
      %v2617 = vrot.slane %v2615, 5
      %v2618 = vor.u32 %v2614, %v2617
      %v2619 = vrot.slane %v2618, 4
      %v2621 = vshll.u32 %v2522, 16
      %v2623 = vrot.slane %v2621, 5
      %v2624 = vsel %vm1047, %v2619, %v2623
      %v2625 = vshrl.u32 %v2522, 16
      %v2627 = vrot.slane %v2625, 4
      %v2628 = vor.u32 %v2627, %v2623
      %v2629 = vrot.slane %v2628, 4
      %v2631 = vshll.u32 %v2523, 16
      %v2633 = vrot.slane %v2631, 5
      %v2634 = vsel %vm1047, %v2629, %v2633
      %v2636 = vshrl.u32 %v2524, 16
      %v2638 = vrot.slane %v2636, 4
      %v2639 = vshll.u32 %v2524, 16
      %v2641 = vrot.slane %v2639, 5
      %v2642 = vor.u32 %v2638, %v2641
      %v2643 = vrot.slane %v2642, 4
      %v2645 = vshll.u32 %v2525, 16
      %v2647 = vrot.slane %v2645, 5
      %v2648 = vsel %vm1047, %v2643, %v2647
      %v2649 = vshrl.u32 %v2525, 16
      %v2651 = vrot.slane %v2649, 4
      %v2652 = vor.u32 %v2651, %v2647
      %v2653 = vrot.slane %v2652, 4
      %v2655 = vshll.u32 %v2526, 16
      %v2657 = vrot.slane %v2655, 5
      %v2658 = vsel %vm1047, %v2653, %v2657
      %v2660 = vshrl.u32 %v2527, 16
      %v2662 = vrot.slane %v2660, 4
      %v2663 = vshll.u32 %v2527, 16
      %v2665 = vrot.slane %v2663, 5
      %v2666 = vor.u32 %v2662, %v2665
      %v2667 = vrot.slane %v2666, 4
      %v2669 = vshll.u32 %v2528, 16
      %v2671 = vrot.slane %v2669, 5
      %v2672 = vsel %vm1047, %v2667, %v2671
      %v2673 = vshrl.u32 %v2528, 16
      %v2675 = vrot.slane %v2673, 4
      %v2676 = vor.u32 %v2675, %v2671
      %v2677 = vrot.slane %v2676, 4
      %v2679 = vshll.u32 %v2529, 16
      %v2681 = vrot.slane %v2679, 5
      %v2682 = vsel %vm1047, %v2677, %v2681
      %v2684 = vshrl.u32 %v2530, 16
      %v2686 = vrot.slane %v2684, 4
      %v2687 = vshll.u32 %v2530, 16
      %v2689 = vrot.slane %v2687, 5
      %v2690 = vor.u32 %v2686, %v2689
      %v2691 = vrot.slane %v2690, 4
      %v2693 = vshll.u32 %v2531, 16
      %v2695 = vrot.slane %v2693, 5
      %v2696 = vsel %vm1047, %v2691, %v2695
      %v2697 = vshrl.u32 %v2531, 16
      %v2699 = vrot.slane %v2697, 4
      %v2700 = vor.u32 %v2699, %v2695
      %v2701 = vrot.slane %v2700, 4
      %v2703 = vshll.u32 %v2532, 16
      %v2705 = vrot.slane %v2703, 5
      %v2706 = vsel %vm1047, %v2701, %v2705
      %v2708 = vshrl.u32 %v2533, 16
      %v2710 = vrot.slane %v2708, 4
      %v2711 = vshll.u32 %v2533, 16
      %v2713 = vrot.slane %v2711, 5
      %v2714 = vor.u32 %v2710, %v2713
      %v2715 = vrot.slane %v2714, 4
      %v2717 = vshll.u32 %v2534, 16
      %v2719 = vrot.slane %v2717, 5
      %v2720 = vsel %vm1047, %v2715, %v2719
      %v2721 = vshrl.u32 %v2534, 16
      %v2723 = vrot.slane %v2721, 4
      %v2724 = vor.u32 %v2723, %v2719
      %v2725 = vrot.slane %v2724, 4
      %v2727 = vshll.u32 %v2535, 16
      %v2729 = vrot.slane %v2727, 5
      %v2730 = vsel %vm1047, %v2725, %v2729
      %v2732 = vshrl.u32 %v2536, 16
      %v2734 = vrot.slane %v2732, 4
      %v2735 = vshll.u32 %v2536, 16
      %v2737 = vrot.slane %v2735, 5
      %v2738 = vor.u32 %v2734, %v2737
      %v2739 = vrot.slane %v2738, 4
      %v2741 = vshll.u32 %v2537, 16
      %v2743 = vrot.slane %v2741, 5
      %v2744 = vsel %vm1047, %v2739, %v2743
      %v2745 = vshrl.u32 %v2537, 16
      %v2747 = vrot.slane %v2745, 4
      %v2748 = vor.u32 %v2747, %v2743
      %v2749 = vrot.slane %v2748, 4
      %v2751 = vshll.u32 %v2538, 16
      %v2753 = vrot.slane %v2751, 5
      %v2754 = vsel %vm1047, %v2749, %v2753
      %v2756 = vshrl.u32 %v2539, 16
      %v2758 = vrot.slane %v2756, 4
      %v2759 = vshll.u32 %v2539, 16
      %v2761 = vrot.slane %v2759, 5
      %v2762 = vor.u32 %v2758, %v2761
      %v2763 = vrot.slane %v2762, 4
      %v2765 = vshll.u32 %v2540, 16
      %v2767 = vrot.slane %v2765, 5
      %v2768 = vsel %vm1047, %v2763, %v2767
      %v2769 = vshrl.u32 %v2540, 16
      %v2771 = vrot.slane %v2769, 4
      %v2772 = vor.u32 %v2771, %v2767
      %v2773 = vrot.slane %v2772, 4
      %v2775 = vshll.u32 %v2541, 16
      %v2777 = vrot.slane %v2775, 5
      %v2778 = vsel %vm1047, %v2773, %v2777
      %v2780 = vshrl.u32 %v2542, 16
      %v2782 = vrot.slane %v2780, 4
      %v2783 = vshll.u32 %v2542, 16
      %v2785 = vrot.slane %v2783, 5
      %v2786 = vor.u32 %v2782, %v2785
      %v2787 = vrot.slane %v2786, 4
      %v2789 = vshll.u32 %v2543, 16
      %v2791 = vrot.slane %v2789, 5
      %v2792 = vsel %vm1047, %v2787, %v2791
      %v2793 = vshrl.u32 %v2543, 16
      %v2795 = vrot.slane %v2793, 4
      %v2796 = vor.u32 %v2795, %v2791
      %v2797 = vrot.slane %v2796, 4
      %v2799 = vshll.u32 %v2544, 16
      %v2801 = vrot.slane %v2799, 5
      %v2802 = vsel %vm1047, %v2797, %v2801
      %v2804 = vshrl.u32 %v2545, 16
      %v2806 = vrot.slane %v2804, 4
      %v2807 = vshll.u32 %v2545, 16
      %v2809 = vrot.slane %v2807, 5
      %v2810 = vor.u32 %v2806, %v2809
      %v2811 = vrot.slane %v2810, 4
      %v2813 = vshll.u32 %v2546, 16
      %v2815 = vrot.slane %v2813, 5
      %v2816 = vsel %vm1047, %v2811, %v2815
      %v2817 = vshrl.u32 %v2546, 16
      %v2819 = vrot.slane %v2817, 4
      %v2820 = vor.u32 %v2819, %v2815
      %v2821 = vrot.slane %v2820, 4
      %v2823 = vshll.u32 %v2547, 16
      %v2825 = vrot.slane %v2823, 5
      %v2826 = vsel %vm1047, %v2821, %v2825
      %v2828 = vshrl.u32 %v2548, 16
      %v2830 = vrot.slane %v2828, 4
      %v2831 = vshll.u32 %v2548, 16
      %v2833 = vrot.slane %v2831, 5
      %v2834 = vor.u32 %v2830, %v2833
      %v2835 = vrot.slane %v2834, 4
      %v2837 = vshll.u32 %v2549, 16
      %v2839 = vrot.slane %v2837, 5
      %v2840 = vsel %vm1047, %v2835, %v2839
      %v2841 = vshrl.u32 %v2549, 16
      %v2843 = vrot.slane %v2841, 4
      %v2844 = vor.u32 %v2843, %v2839
      %v2845 = vrot.slane %v2844, 4
      %v2847 = vshll.u32 %v2550, 16
      %v2849 = vrot.slane %v2847, 5
      %v2850 = vsel %vm1047, %v2845, %v2849
      %v2852 = vshrl.u32 %v2551, 16
      %v2854 = vrot.slane %v2852, 4
      %v2855 = vshll.u32 %v2551, 16
      %v2857 = vrot.slane %v2855, 5
      %v2858 = vor.u32 %v2854, %v2857
      %v2859 = vrot.slane %v2858, 4
      %v2861 = vshll.u32 %v2552, 16
      %v2863 = vrot.slane %v2861, 5
      %v2864 = vsel %vm1047, %v2859, %v2863
      %v2865 = vshrl.u32 %v2552, 16
      %v2867 = vrot.slane %v2865, 4
      %v2868 = vor.u32 %v2867, %v2863
      %v2869 = vrot.slane %v2868, 4
      %v2871 = vshll.u32 %v2553, 16
      %v2873 = vrot.slane %v2871, 5
      %v2874 = vsel %vm1047, %v2869, %v2873
      %v2876 = vshrl.u32 %v2554, 16
      %v2878 = vrot.slane %v2876, 4
      %v2879 = vshll.u32 %v2554, 16
      %v2881 = vrot.slane %v2879, 5
      %v2882 = vor.u32 %v2878, %v2881
      %v2883 = vrot.slane %v2882, 4
      %v2885 = vshll.u32 %v2555, 16
      %v2887 = vrot.slane %v2885, 5
      %v2888 = vsel %vm1047, %v2883, %v2887
      %v2889 = vshrl.u32 %v2555, 16
      %v2891 = vrot.slane %v2889, 4
      %v2892 = vor.u32 %v2891, %v2887
      %v2893 = vrot.slane %v2892, 4
      %v2895 = vshll.u32 %v2556, 16
      %v2897 = vrot.slane %v2895, 5
      %v2898 = vsel %vm1047, %v2893, %v2897
      %v2900 = vshrl.u32 %v2557, 16
      %v2902 = vrot.slane %v2900, 4
      %v2903 = vshll.u32 %v2557, 16
      %v2905 = vrot.slane %v2903, 5
      %v2906 = vor.u32 %v2902, %v2905
      %v2907 = vrot.slane %v2906, 4
      %v2909 = vshll.u32 %v2558, 16
      %v2911 = vrot.slane %v2909, 5
      %v2912 = vsel %vm1047, %v2907, %v2911
      %v2913 = vshrl.u32 %v2558, 16
      %v2915 = vrot.slane %v2913, 4
      %v2916 = vor.u32 %v2915, %v2911
      %v2917 = vrot.slane %v2916, 4
      %v2919 = vshll.u32 %v2559, 16
      %v2921 = vrot.slane %v2919, 5
      %v2922 = vsel %vm1047, %v2917, %v2921
      %v2924 = vshrl.u32 %v2560, 16
      %v2926 = vrot.slane %v2924, 4
      %v2927 = vshll.u32 %v2560, 16
      %v2929 = vrot.slane %v2927, 5
      %v2930 = vor.u32 %v2926, %v2929
      %v2931 = vrot.slane %v2930, 4
      %v2933 = vshll.u32 %v2561, 16
      %v2935 = vrot.slane %v2933, 5
      %v2936 = vsel %vm1047, %v2931, %v2935
      %v2937 = vshrl.u32 %v2561, 16
      %v2939 = vrot.slane %v2937, 4
      %v2940 = vor.u32 %v2939, %v2935
      %v2941 = vrot.slane %v2940, 4
      %v2943 = vshll.u32 %v2562, 16
      %v2945 = vrot.slane %v2943, 5
      %v2946 = vsel %vm1047, %v2941, %v2945
      %s2947 = scalar_lea.vmem %s3, 8
      %v2948 = vld [vmem:[%s2947] sm:$0x3]
      %v2949 = vunpack.c.l.b16 %v2576
      %v2950 = vunpack.c.l.b16 %v2586
      %v2951 = vunpack.c.l.b16 %v2600
      %v2952 = vunpack.c.l.b16 %v2610
      %v2953 = vunpack.c.l.b16 %v2624
      %v2954 = vunpack.c.l.b16 %v2634
      %v2955 = vunpack.c.l.b16 %v2648
      %v2956 = vunpack.c.l.b16 %v2658
      %v2957 = vunpack.c.l.b16 %v2672
      %v2958 = vunpack.c.l.b16 %v2682
      %v2959 = vunpack.c.l.b16 %v2696
      %v2960 = vunpack.c.l.b16 %v2706
      %v2961 = vunpack.c.l.b16 %v2720
      %v2962 = vunpack.c.l.b16 %v2730
      %v2963 = vunpack.c.l.b16 %v2744
      %v2964 = vunpack.c.l.b16 %v2754
      %v2965 = vunpack.c.l.b16 %v2768
      %v2966 = vunpack.c.l.b16 %v2778
      %v2967 = vunpack.c.l.b16 %v2792
      %v2968 = vunpack.c.l.b16 %v2802
      %v2969 = vunpack.c.l.b16 %v2816
      %v2970 = vunpack.c.l.b16 %v2826
      %v2971 = vunpack.c.l.b16 %v2840
      %v2972 = vunpack.c.l.b16 %v2850
      %v2973 = vunpack.c.l.b16 %v2864
      %v2974 = vunpack.c.l.b16 %v2874
      %v2975 = vunpack.c.l.b16 %v2888
      %v2976 = vunpack.c.l.b16 %v2898
      %v2977 = vunpack.c.l.b16 %v2912
      %v2978 = vunpack.c.l.b16 %v2922
      %v2979 = vunpack.c.l.b16 %v2936
      %v2980 = vunpack.c.l.b16 %v2946
      %v2981 = vpack.c.b16 %v2950, %v2949
      %v2982 = vpack.c.b16 %v2952, %v2951
      %v2983 = vpack.c.b16 %v2954, %v2953
      %v2984 = vpack.c.b16 %v2956, %v2955
      %v2985 = vpack.c.b16 %v2958, %v2957
      %v2986 = vpack.c.b16 %v2960, %v2959
      %v2987 = vpack.c.b16 %v2962, %v2961
      %v2988 = vpack.c.b16 %v2964, %v2963
      %v2989 = vpack.c.b16 %v2966, %v2965
      %v2990 = vpack.c.b16 %v2968, %v2967
      %v2991 = vpack.c.b16 %v2970, %v2969
      %v2992 = vpack.c.b16 %v2972, %v2971
      %v2993 = vpack.c.b16 %v2974, %v2973
      %v2994 = vpack.c.b16 %v2976, %v2975
      %v2995 = vpack.c.b16 %v2978, %v2977
      %v2996 = vpack.c.b16 %v2980, %v2979
      %v2998 = vsel %vm1482, %v2981, 0
      %v3001 = vsel %vm1482, %v2982, 0
      %v3004 = vsel %vm1482, %v2983, 0
      %v3007 = vsel %vm1482, %v2984, 0
      %v3010 = vsel %vm1482, %v2985, 0
      %v3013 = vsel %vm1482, %v2986, 0
      %v3016 = vsel %vm1482, %v2987, 0
      %v3019 = vsel %vm1482, %v2988, 0
      %v3022 = vsel %vm1482, %v2989, 0
      %v3025 = vsel %vm1482, %v2990, 0
      %v3028 = vsel %vm1482, %v2991, 0
      %v3031 = vsel %vm1482, %v2992, 0
      %v3034 = vsel %vm1482, %v2993, 0
      %v3037 = vsel %vm1482, %v2994, 0
      %v3040 = vsel %vm1482, %v2995, 0
      %v3043 = vsel %vm1482, %v2996, 0
      %v3046 = vsel %vm1531, %v2948, 0
      %3048 = vmatpush.bf16.msra.mxu0 0
      %3049 = vmatpush.bf16.msra.mxu0 0
      %3050 = vmatpush.bf16.msra.mxu0 0
      %3051 = vmatpush.bf16.msra.mxu0 0
      %3052 = vmatpush.bf16.msra.mxu0 0
      %3053 = vmatpush.bf16.msra.mxu0 0
      %3054 = vmatpush.bf16.msra.mxu0 0
      %3055 = vmatpush.bf16.msra.mxu0 %v3046
      %3056 = vmatmul.bf16.gmra.mxu0 %v2998
      %v3057 = vpop.f32.mrf.mxu0
      %v3058 = vadd.f32 0.0, %v3057
      %v3059 = vpop.f32.mrf.mxu0
      %v3060 = vadd.f32 0.0, %v3059
      %3061 = vmatmul.bf16.gmra.mxu0 %v3001
      %v3062 = vpop.f32.mrf.mxu0
      %v3063 = vadd.f32 0.0, %v3062
      %v3064 = vpop.f32.mrf.mxu0
      %v3065 = vadd.f32 0.0, %v3064
      %3066 = vmatmul.bf16.gmra.mxu0 %v3004
      %v3067 = vpop.f32.mrf.mxu0
      %v3068 = vadd.f32 0.0, %v3067
      %v3069 = vpop.f32.mrf.mxu0
      %v3070 = vadd.f32 0.0, %v3069
      %3071 = vmatmul.bf16.gmra.mxu0 %v3007
      %v3072 = vpop.f32.mrf.mxu0
      %v3073 = vadd.f32 0.0, %v3072
      %v3074 = vpop.f32.mrf.mxu0
      %v3075 = vadd.f32 0.0, %v3074
      %3076 = vmatmul.bf16.gmra.mxu0 %v3010
      %v3077 = vpop.f32.mrf.mxu0
      %v3078 = vadd.f32 0.0, %v3077
      %v3079 = vpop.f32.mrf.mxu0
      %v3080 = vadd.f32 0.0, %v3079
      %3081 = vmatmul.bf16.gmra.mxu0 %v3013
      %v3082 = vpop.f32.mrf.mxu0
      %v3083 = vadd.f32 0.0, %v3082
      %v3084 = vpop.f32.mrf.mxu0
      %v3085 = vadd.f32 0.0, %v3084
      %3086 = vmatmul.bf16.gmra.mxu0 %v3016
      %v3087 = vpop.f32.mrf.mxu0
      %v3088 = vadd.f32 0.0, %v3087
      %v3089 = vpop.f32.mrf.mxu0
      %v3090 = vadd.f32 0.0, %v3089
      %3091 = vmatmul.bf16.gmra.mxu0 %v3019
      %v3092 = vpop.f32.mrf.mxu0
      %v3093 = vadd.f32 0.0, %v3092
      %v3094 = vpop.f32.mrf.mxu0
      %v3095 = vadd.f32 0.0, %v3094
      %3096 = vmatmul.bf16.gmra.mxu0 %v3022
      %v3097 = vpop.f32.mrf.mxu0
      %v3098 = vadd.f32 0.0, %v3097
      %v3099 = vpop.f32.mrf.mxu0
      %v3100 = vadd.f32 0.0, %v3099
      %3101 = vmatmul.bf16.gmra.mxu0 %v3025
      %v3102 = vpop.f32.mrf.mxu0
      %v3103 = vadd.f32 0.0, %v3102
      %v3104 = vpop.f32.mrf.mxu0
      %v3105 = vadd.f32 0.0, %v3104
      %3106 = vmatmul.bf16.gmra.mxu0 %v3028
      %v3107 = vpop.f32.mrf.mxu0
      %v3108 = vadd.f32 0.0, %v3107
      %v3109 = vpop.f32.mrf.mxu0
      %v3110 = vadd.f32 0.0, %v3109
      %3111 = vmatmul.bf16.gmra.mxu0 %v3031
      %v3112 = vpop.f32.mrf.mxu0
      %v3113 = vadd.f32 0.0, %v3112
      %v3114 = vpop.f32.mrf.mxu0
      %v3115 = vadd.f32 0.0, %v3114
      %3116 = vmatmul.bf16.gmra.mxu0 %v3034
      %v3117 = vpop.f32.mrf.mxu0
      %v3118 = vadd.f32 0.0, %v3117
      %v3119 = vpop.f32.mrf.mxu0
      %v3120 = vadd.f32 0.0, %v3119
      %3121 = vmatmul.bf16.gmra.mxu0 %v3037
      %v3122 = vpop.f32.mrf.mxu0
      %v3123 = vadd.f32 0.0, %v3122
      %v3124 = vpop.f32.mrf.mxu0
      %v3125 = vadd.f32 0.0, %v3124
      %3126 = vmatmul.bf16.gmra.mxu0 %v3040
      %v3127 = vpop.f32.mrf.mxu0
      %v3128 = vadd.f32 0.0, %v3127
      %v3129 = vpop.f32.mrf.mxu0
      %v3130 = vadd.f32 0.0, %v3129
      %3131 = vmatmul.bf16.gmra.mxu0 %v3043
      %v3132 = vpop.f32.mrf.mxu0
      %v3133 = vadd.f32 0.0, %v3132
      %v3134 = vpop.f32.mrf.mxu0
      %v3135 = vadd.f32 0.0, %v3134
      %3136 = vdwg.mxu0
      %v3137 = vadd.f32 %v2483, %v3058
      %v3138 = vadd.f32 %v2484, %v3060
      %v3139 = vadd.f32 %v2485, %v3063
      %v3140 = vadd.f32 %v2486, %v3065
      %v3141 = vadd.f32 %v2487, %v3068
      %v3142 = vadd.f32 %v2488, %v3070
      %v3143 = vadd.f32 %v2489, %v3073
      %v3144 = vadd.f32 %v2490, %v3075
      %v3145 = vadd.f32 %v2491, %v3078
      %v3146 = vadd.f32 %v2492, %v3080
      %v3147 = vadd.f32 %v2493, %v3083
      %v3148 = vadd.f32 %v2494, %v3085
      %v3149 = vadd.f32 %v2495, %v3088
      %v3150 = vadd.f32 %v2496, %v3090
      %v3151 = vadd.f32 %v2497, %v3093
      %v3152 = vadd.f32 %v2498, %v3095
      %v3153 = vadd.f32 %v2499, %v3098
      %v3154 = vadd.f32 %v2500, %v3100
      %v3155 = vadd.f32 %v2501, %v3103
      %v3156 = vadd.f32 %v2502, %v3105
      %v3157 = vadd.f32 %v2503, %v3108
      %v3158 = vadd.f32 %v2504, %v3110
      %v3159 = vadd.f32 %v2505, %v3113
      %v3160 = vadd.f32 %v2506, %v3115
      %v3161 = vadd.f32 %v2507, %v3118
      %v3162 = vadd.f32 %v2508, %v3120
      %v3163 = vadd.f32 %v2509, %v3123
      %v3164 = vadd.f32 %v2510, %v3125
      %v3165 = vadd.f32 %v2511, %v3128
      %v3166 = vadd.f32 %v2512, %v3130
      %v3167 = vadd.f32 %v2513, %v3133
      %v3168 = vadd.f32 %v2514, %v3135
      %v3169 = vld [vmem:[%s881] sm:$0xe]
      %v3170 = vld [vmem:[%s881 + $0xc] sm:$0xe]
      %v3171 = vld [vmem:[%s881 + $0x18] sm:$0xe]
      %v3172 = vld [vmem:[%s881 + $0x24] sm:$0xe]
      %v3173 = vld [vmem:[%s881 + $0x30] sm:$0xe]
      %v3174 = vld [vmem:[%s881 + $0x3c] sm:$0xe]
      %v3175 = vld [vmem:[%s881 + $0x48] sm:$0xe]
      %v3176 = vld [vmem:[%s881 + $0x54] sm:$0xe]
      %v3177 = vld [vmem:[%s881 + $0x60] sm:$0xe]
      %v3178 = vld [vmem:[%s881 + $0x6c] sm:$0xe]
      %v3179 = vld [vmem:[%s881 + $0x78] sm:$0xe]
      %v3180 = vld [vmem:[%s881 + $0x84] sm:$0xe]
      %v3181 = vld [vmem:[%s881 + $0x90] sm:$0xe]
      %v3182 = vld [vmem:[%s881 + $0x9c] sm:$0xe]
      %v3183 = vld [vmem:[%s881 + $0xa8] sm:$0xe]
      %v3184 = vld [vmem:[%s881 + $0xb4] sm:$0xe]
      %v3233 = vrot.slane %v3169, 5
      %v3234 = vrot.slane %v3233, 4
      %v3235 = vrot.slane %v2516, 5
      %v3236 = vsel %vm1894, %v3234, %v3235
      %v3237 = vrot.slane %v3235, 4
      %v3238 = vrot.slane %v2517, 5
      %v3239 = vsel %vm1894, %v3237, %v3238
      %v3240 = vrot.slane %v3170, 5
      %v3241 = vrot.slane %v3240, 4
      %v3242 = vrot.slane %v2519, 5
      %v3243 = vsel %vm1894, %v3241, %v3242
      %v3244 = vrot.slane %v3242, 4
      %v3245 = vrot.slane %v2520, 5
      %v3246 = vsel %vm1894, %v3244, %v3245
      %v3247 = vrot.slane %v3171, 5
      %v3248 = vrot.slane %v3247, 4
      %v3249 = vrot.slane %v2522, 5
      %v3250 = vsel %vm1894, %v3248, %v3249
      %v3251 = vrot.slane %v3249, 4
      %v3252 = vrot.slane %v2523, 5
      %v3253 = vsel %vm1894, %v3251, %v3252
      %v3254 = vrot.slane %v3172, 5
      %v3255 = vrot.slane %v3254, 4
      %v3256 = vrot.slane %v2525, 5
      %v3257 = vsel %vm1894, %v3255, %v3256
      %v3258 = vrot.slane %v3256, 4
      %v3259 = vrot.slane %v2526, 5
      %v3260 = vsel %vm1894, %v3258, %v3259
      %v3261 = vrot.slane %v3173, 5
      %v3262 = vrot.slane %v3261, 4
      %v3263 = vrot.slane %v2528, 5
      %v3264 = vsel %vm1894, %v3262, %v3263
      %v3265 = vrot.slane %v3263, 4
      %v3266 = vrot.slane %v2529, 5
      %v3267 = vsel %vm1894, %v3265, %v3266
      %v3268 = vrot.slane %v3174, 5
      %v3269 = vrot.slane %v3268, 4
      %v3270 = vrot.slane %v2531, 5
      %v3271 = vsel %vm1894, %v3269, %v3270
      %v3272 = vrot.slane %v3270, 4
      %v3273 = vrot.slane %v2532, 5
      %v3274 = vsel %vm1894, %v3272, %v3273
      %v3275 = vrot.slane %v3175, 5
      %v3276 = vrot.slane %v3275, 4
      %v3277 = vrot.slane %v2534, 5
      %v3278 = vsel %vm1894, %v3276, %v3277
      %v3279 = vrot.slane %v3277, 4
      %v3280 = vrot.slane %v2535, 5
      %v3281 = vsel %vm1894, %v3279, %v3280
      %v3282 = vrot.slane %v3176, 5
      %v3283 = vrot.slane %v3282, 4
      %v3284 = vrot.slane %v2537, 5
      %v3285 = vsel %vm1894, %v3283, %v3284
      %v3286 = vrot.slane %v3284, 4
      %v3287 = vrot.slane %v2538, 5
      %v3288 = vsel %vm1894, %v3286, %v3287
      %v3289 = vrot.slane %v3177, 5
      %v3290 = vrot.slane %v3289, 4
      %v3291 = vrot.slane %v2540, 5
      %v3292 = vsel %vm1894, %v3290, %v3291
      %v3293 = vrot.slane %v3291, 4
      %v3294 = vrot.slane %v2541, 5
      %v3295 = vsel %vm1894, %v3293, %v3294
      %v3296 = vrot.slane %v3178, 5
      %v3297 = vrot.slane %v3296, 4
      %v3298 = vrot.slane %v2543, 5
      %v3299 = vsel %vm1894, %v3297, %v3298
      %v3300 = vrot.slane %v3298, 4
      %v3301 = vrot.slane %v2544, 5
      %v3302 = vsel %vm1894, %v3300, %v3301
      %v3303 = vrot.slane %v3179, 5
      %v3304 = vrot.slane %v3303, 4
      %v3305 = vrot.slane %v2546, 5
      %v3306 = vsel %vm1894, %v3304, %v3305
      %v3307 = vrot.slane %v3305, 4
      %v3308 = vrot.slane %v2547, 5
      %v3309 = vsel %vm1894, %v3307, %v3308
      %v3310 = vrot.slane %v3180, 5
      %v3311 = vrot.slane %v3310, 4
      %v3312 = vrot.slane %v2549, 5
      %v3313 = vsel %vm1894, %v3311, %v3312
      %v3314 = vrot.slane %v3312, 4
      %v3315 = vrot.slane %v2550, 5
      %v3316 = vsel %vm1894, %v3314, %v3315
      %v3317 = vrot.slane %v3181, 5
      %v3318 = vrot.slane %v3317, 4
      %v3319 = vrot.slane %v2552, 5
      %v3320 = vsel %vm1894, %v3318, %v3319
      %v3321 = vrot.slane %v3319, 4
      %v3322 = vrot.slane %v2553, 5
      %v3323 = vsel %vm1894, %v3321, %v3322
      %v3324 = vrot.slane %v3182, 5
      %v3325 = vrot.slane %v3324, 4
      %v3326 = vrot.slane %v2555, 5
      %v3327 = vsel %vm1894, %v3325, %v3326
      %v3328 = vrot.slane %v3326, 4
      %v3329 = vrot.slane %v2556, 5
      %v3330 = vsel %vm1894, %v3328, %v3329
      %v3331 = vrot.slane %v3183, 5
      %v3332 = vrot.slane %v3331, 4
      %v3333 = vrot.slane %v2558, 5
      %v3334 = vsel %vm1894, %v3332, %v3333
      %v3335 = vrot.slane %v3333, 4
      %v3336 = vrot.slane %v2559, 5
      %v3337 = vsel %vm1894, %v3335, %v3336
      %v3338 = vrot.slane %v3184, 5
      %v3339 = vrot.slane %v3338, 4
      %v3340 = vrot.slane %v2561, 5
      %v3341 = vsel %vm1894, %v3339, %v3340
      %v3342 = vrot.slane %v3340, 4
      %v3343 = vrot.slane %v2562, 5
      %v3344 = vsel %vm1894, %v3342, %v3343
      %s3345 = scalar_lea.vmem %s3, 10
      %v3346 = vld [vmem:[%s3345] sm:$0x3]
      %v3347 = vunpack.c.l.b16 %v3236
      %v3348 = vunpack.c.l.b16 %v3239
      %v3349 = vunpack.c.l.b16 %v3243
      %v3350 = vunpack.c.l.b16 %v3246
      %v3351 = vunpack.c.l.b16 %v3250
      %v3352 = vunpack.c.l.b16 %v3253
      %v3353 = vunpack.c.l.b16 %v3257
      %v3354 = vunpack.c.l.b16 %v3260
      %v3355 = vunpack.c.l.b16 %v3264
      %v3356 = vunpack.c.l.b16 %v3267
      %v3357 = vunpack.c.l.b16 %v3271
      %v3358 = vunpack.c.l.b16 %v3274
      %v3359 = vunpack.c.l.b16 %v3278
      %v3360 = vunpack.c.l.b16 %v3281
      %v3361 = vunpack.c.l.b16 %v3285
      %v3362 = vunpack.c.l.b16 %v3288
      %v3363 = vunpack.c.l.b16 %v3292
      %v3364 = vunpack.c.l.b16 %v3295
      %v3365 = vunpack.c.l.b16 %v3299
      %v3366 = vunpack.c.l.b16 %v3302
      %v3367 = vunpack.c.l.b16 %v3306
      %v3368 = vunpack.c.l.b16 %v3309
      %v3369 = vunpack.c.l.b16 %v3313
      %v3370 = vunpack.c.l.b16 %v3316
      %v3371 = vunpack.c.l.b16 %v3320
      %v3372 = vunpack.c.l.b16 %v3323
      %v3373 = vunpack.c.l.b16 %v3327
      %v3374 = vunpack.c.l.b16 %v3330
      %v3375 = vunpack.c.l.b16 %v3334
      %v3376 = vunpack.c.l.b16 %v3337
      %v3377 = vunpack.c.l.b16 %v3341
      %v3378 = vunpack.c.l.b16 %v3344
      %v3379 = vpack.c.b16 %v3348, %v3347
      %v3380 = vpack.c.b16 %v3350, %v3349
      %v3381 = vpack.c.b16 %v3352, %v3351
      %v3382 = vpack.c.b16 %v3354, %v3353
      %v3383 = vpack.c.b16 %v3356, %v3355
      %v3384 = vpack.c.b16 %v3358, %v3357
      %v3385 = vpack.c.b16 %v3360, %v3359
      %v3386 = vpack.c.b16 %v3362, %v3361
      %v3387 = vpack.c.b16 %v3364, %v3363
      %v3388 = vpack.c.b16 %v3366, %v3365
      %v3389 = vpack.c.b16 %v3368, %v3367
      %v3390 = vpack.c.b16 %v3370, %v3369
      %v3391 = vpack.c.b16 %v3372, %v3371
      %v3392 = vpack.c.b16 %v3374, %v3373
      %v3393 = vpack.c.b16 %v3376, %v3375
      %v3394 = vpack.c.b16 %v3378, %v3377
      %v3396 = vsel %vm1482, %v3379, 0
      %v3399 = vsel %vm1482, %v3380, 0
      %v3402 = vsel %vm1482, %v3381, 0
      %v3405 = vsel %vm1482, %v3382, 0
      %v3408 = vsel %vm1482, %v3383, 0
      %v3411 = vsel %vm1482, %v3384, 0
      %v3414 = vsel %vm1482, %v3385, 0
      %v3417 = vsel %vm1482, %v3386, 0
      %v3420 = vsel %vm1482, %v3387, 0
      %v3423 = vsel %vm1482, %v3388, 0
      %v3426 = vsel %vm1482, %v3389, 0
      %v3429 = vsel %vm1482, %v3390, 0
      %v3432 = vsel %vm1482, %v3391, 0
      %v3435 = vsel %vm1482, %v3392, 0
      %v3438 = vsel %vm1482, %v3393, 0
      %v3441 = vsel %vm1482, %v3394, 0
      %v3444 = vsel %vm1531, %v3346, 0
      %3446 = vmatpush.bf16.msra.mxu0 0
      %3447 = vmatpush.bf16.msra.mxu0 0
      %3448 = vmatpush.bf16.msra.mxu0 0
      %3449 = vmatpush.bf16.msra.mxu0 0
      %3450 = vmatpush.bf16.msra.mxu0 0
      %3451 = vmatpush.bf16.msra.mxu0 0
      %3452 = vmatpush.bf16.msra.mxu0 0
      %3453 = vmatpush.bf16.msra.mxu0 %v3444
      %3454 = vmatmul.bf16.gmra.mxu0 %v3396
      %v3455 = vpop.f32.mrf.mxu0
      %v3456 = vadd.f32 0.0, %v3455
      %v3457 = vpop.f32.mrf.mxu0
      %v3458 = vadd.f32 0.0, %v3457
      %3459 = vmatmul.bf16.gmra.mxu0 %v3399
      %v3460 = vpop.f32.mrf.mxu0
      %v3461 = vadd.f32 0.0, %v3460
      %v3462 = vpop.f32.mrf.mxu0
      %v3463 = vadd.f32 0.0, %v3462
      %3464 = vmatmul.bf16.gmra.mxu0 %v3402
      %v3465 = vpop.f32.mrf.mxu0
      %v3466 = vadd.f32 0.0, %v3465
      %v3467 = vpop.f32.mrf.mxu0
      %v3468 = vadd.f32 0.0, %v3467
      %3469 = vmatmul.bf16.gmra.mxu0 %v3405
      %v3470 = vpop.f32.mrf.mxu0
      %v3471 = vadd.f32 0.0, %v3470
      %v3472 = vpop.f32.mrf.mxu0
      %v3473 = vadd.f32 0.0, %v3472
      %3474 = vmatmul.bf16.gmra.mxu0 %v3408
      %v3475 = vpop.f32.mrf.mxu0
      %v3476 = vadd.f32 0.0, %v3475
      %v3477 = vpop.f32.mrf.mxu0
      %v3478 = vadd.f32 0.0, %v3477
      %3479 = vmatmul.bf16.gmra.mxu0 %v3411
      %v3480 = vpop.f32.mrf.mxu0
      %v3481 = vadd.f32 0.0, %v3480
      %v3482 = vpop.f32.mrf.mxu0
      %v3483 = vadd.f32 0.0, %v3482
      %3484 = vmatmul.bf16.gmra.mxu0 %v3414
      %v3485 = vpop.f32.mrf.mxu0
      %v3486 = vadd.f32 0.0, %v3485
      %v3487 = vpop.f32.mrf.mxu0
      %v3488 = vadd.f32 0.0, %v3487
      %3489 = vmatmul.bf16.gmra.mxu0 %v3417
      %v3490 = vpop.f32.mrf.mxu0
      %v3491 = vadd.f32 0.0, %v3490
      %v3492 = vpop.f32.mrf.mxu0
      %v3493 = vadd.f32 0.0, %v3492
      %3494 = vmatmul.bf16.gmra.mxu0 %v3420
      %v3495 = vpop.f32.mrf.mxu0
      %v3496 = vadd.f32 0.0, %v3495
      %v3497 = vpop.f32.mrf.mxu0
      %v3498 = vadd.f32 0.0, %v3497
      %3499 = vmatmul.bf16.gmra.mxu0 %v3423
      %v3500 = vpop.f32.mrf.mxu0
      %v3501 = vadd.f32 0.0, %v3500
      %v3502 = vpop.f32.mrf.mxu0
      %v3503 = vadd.f32 0.0, %v3502
      %3504 = vmatmul.bf16.gmra.mxu0 %v3426
      %v3505 = vpop.f32.mrf.mxu0
      %v3506 = vadd.f32 0.0, %v3505
      %v3507 = vpop.f32.mrf.mxu0
      %v3508 = vadd.f32 0.0, %v3507
      %3509 = vmatmul.bf16.gmra.mxu0 %v3429
      %v3510 = vpop.f32.mrf.mxu0
      %v3511 = vadd.f32 0.0, %v3510
      %v3512 = vpop.f32.mrf.mxu0
      %v3513 = vadd.f32 0.0, %v3512
      %3514 = vmatmul.bf16.gmra.mxu0 %v3432
      %v3515 = vpop.f32.mrf.mxu0
      %v3516 = vadd.f32 0.0, %v3515
      %v3517 = vpop.f32.mrf.mxu0
      %v3518 = vadd.f32 0.0, %v3517
      %3519 = vmatmul.bf16.gmra.mxu0 %v3435
      %v3520 = vpop.f32.mrf.mxu0
      %v3521 = vadd.f32 0.0, %v3520
      %v3522 = vpop.f32.mrf.mxu0
      %v3523 = vadd.f32 0.0, %v3522
      %3524 = vmatmul.bf16.gmra.mxu0 %v3438
      %v3525 = vpop.f32.mrf.mxu0
      %v3526 = vadd.f32 0.0, %v3525
      %v3527 = vpop.f32.mrf.mxu0
      %v3528 = vadd.f32 0.0, %v3527
      %3529 = vmatmul.bf16.gmra.mxu0 %v3441
      %v3530 = vpop.f32.mrf.mxu0
      %v3531 = vadd.f32 0.0, %v3530
      %v3532 = vpop.f32.mrf.mxu0
      %v3533 = vadd.f32 0.0, %v3532
      %3534 = vdwg.mxu0
      %v3535 = vadd.f32 %v3137, %v3456
      %v3536 = vadd.f32 %v3138, %v3458
      %v3537 = vadd.f32 %v3139, %v3461
      %v3538 = vadd.f32 %v3140, %v3463
      %v3539 = vadd.f32 %v3141, %v3466
      %v3540 = vadd.f32 %v3142, %v3468
      %v3541 = vadd.f32 %v3143, %v3471
      %v3542 = vadd.f32 %v3144, %v3473
      %v3543 = vadd.f32 %v3145, %v3476
      %v3544 = vadd.f32 %v3146, %v3478
      %v3545 = vadd.f32 %v3147, %v3481
      %v3546 = vadd.f32 %v3148, %v3483
      %v3547 = vadd.f32 %v3149, %v3486
      %v3548 = vadd.f32 %v3150, %v3488
      %v3549 = vadd.f32 %v3151, %v3491
      %v3550 = vadd.f32 %v3152, %v3493
      %v3551 = vadd.f32 %v3153, %v3496
      %v3552 = vadd.f32 %v3154, %v3498
      %v3553 = vadd.f32 %v3155, %v3501
      %v3554 = vadd.f32 %v3156, %v3503
      %v3555 = vadd.f32 %v3157, %v3506
      %v3556 = vadd.f32 %v3158, %v3508
      %v3557 = vadd.f32 %v3159, %v3511
      %v3558 = vadd.f32 %v3160, %v3513
      %v3559 = vadd.f32 %v3161, %v3516
      %v3560 = vadd.f32 %v3162, %v3518
      %v3561 = vadd.f32 %v3163, %v3521
      %v3562 = vadd.f32 %v3164, %v3523
      %v3563 = vadd.f32 %v3165, %v3526
      %v3564 = vadd.f32 %v3166, %v3528
      %v3565 = vadd.f32 %v3167, %v3531
      %v3566 = vadd.f32 %v3168, %v3533
      %s3567 = scalar_lea.vmem [#allocation2], 24
      %v3568 = vld [vmem:[%s3567] sm:$0xf]
      %v3569 = vld [vmem:[%s3567 + $0x4] sm:$0xf]
      %v3570 = vld [vmem:[%s3567 + $0xc] sm:$0xf]
      %v3571 = vld [vmem:[%s3567 + $0x10] sm:$0xf]
      %v3572 = vld [vmem:[%s3567 + $0x18] sm:$0xf]
      %v3573 = vld [vmem:[%s3567 + $0x1c] sm:$0xf]
      %v3574 = vld [vmem:[%s3567 + $0x24] sm:$0xf]
      %v3575 = vld [vmem:[%s3567 + $0x28] sm:$0xf]
      %v3576 = vld [vmem:[%s3567 + $0x30] sm:$0xf]
      %v3577 = vld [vmem:[%s3567 + $0x34] sm:$0xf]
      %v3578 = vld [vmem:[%s3567 + $0x3c] sm:$0xf]
      %v3579 = vld [vmem:[%s3567 + $0x40] sm:$0xf]
      %v3580 = vld [vmem:[%s3567 + $0x48] sm:$0xf]
      %v3581 = vld [vmem:[%s3567 + $0x4c] sm:$0xf]
      %v3582 = vld [vmem:[%s3567 + $0x54] sm:$0xf]
      %v3583 = vld [vmem:[%s3567 + $0x58] sm:$0xf]
      %v3584 = vld [vmem:[%s3567 + $0x60] sm:$0xf]
      %v3585 = vld [vmem:[%s3567 + $0x64] sm:$0xf]
      %v3586 = vld [vmem:[%s3567 + $0x6c] sm:$0xf]
      %v3587 = vld [vmem:[%s3567 + $0x70] sm:$0xf]
      %v3588 = vld [vmem:[%s3567 + $0x78] sm:$0xf]
      %v3589 = vld [vmem:[%s3567 + $0x7c] sm:$0xf]
      %v3590 = vld [vmem:[%s3567 + $0x84] sm:$0xf]
      %v3591 = vld [vmem:[%s3567 + $0x88] sm:$0xf]
      %v3592 = vld [vmem:[%s3567 + $0x90] sm:$0xf]
      %v3593 = vld [vmem:[%s3567 + $0x94] sm:$0xf]
      %v3594 = vld [vmem:[%s3567 + $0x9c] sm:$0xf]
      %v3595 = vld [vmem:[%s3567 + $0xa0] sm:$0xf]
      %v3596 = vld [vmem:[%s3567 + $0xa8] sm:$0xf]
      %v3597 = vld [vmem:[%s3567 + $0xac] sm:$0xf]
      %v3598 = vld [vmem:[%s3567 + $0xb4] sm:$0xf]
      %v3599 = vld [vmem:[%s3567 + $0xb8] sm:$0xf]
      %s3600 = scalar_lea.vmem %s3, 12
      %v3601 = vld [vmem:[%s3600] sm:$0x3]
      %v3634 = vunpack.c.l.b16 %v3568
      %v3635 = vunpack.c.l.b16 %v3569
      %v3636 = vunpack.c.l.b16 %v3570
      %v3637 = vunpack.c.l.b16 %v3571
      %v3638 = vunpack.c.l.b16 %v3572
      %v3639 = vunpack.c.l.b16 %v3573
      %v3640 = vunpack.c.l.b16 %v3574
      %v3641 = vunpack.c.l.b16 %v3575
      %v3642 = vunpack.c.l.b16 %v3576
      %v3643 = vunpack.c.l.b16 %v3577
      %v3644 = vunpack.c.l.b16 %v3578
      %v3645 = vunpack.c.l.b16 %v3579
      %v3646 = vunpack.c.l.b16 %v3580
      %v3647 = vunpack.c.l.b16 %v3581
      %v3648 = vunpack.c.l.b16 %v3582
      %v3649 = vunpack.c.l.b16 %v3583
      %v3650 = vunpack.c.l.b16 %v3584
      %v3651 = vunpack.c.l.b16 %v3585
      %v3652 = vunpack.c.l.b16 %v3586
      %v3653 = vunpack.c.l.b16 %v3587
      %v3654 = vunpack.c.l.b16 %v3588
      %v3655 = vunpack.c.l.b16 %v3589
      %v3656 = vunpack.c.l.b16 %v3590
      %v3657 = vunpack.c.l.b16 %v3591
      %v3658 = vunpack.c.l.b16 %v3592
      %v3659 = vunpack.c.l.b16 %v3593
      %v3660 = vunpack.c.l.b16 %v3594
      %v3661 = vunpack.c.l.b16 %v3595
      %v3662 = vunpack.c.l.b16 %v3596
      %v3663 = vunpack.c.l.b16 %v3597
      %v3664 = vunpack.c.l.b16 %v3598
      %v3665 = vunpack.c.l.b16 %v3599
      %v3666 = vpack.c.b16 %v3635, %v3634
      %v3667 = vpack.c.b16 %v3637, %v3636
      %v3668 = vpack.c.b16 %v3639, %v3638
      %v3669 = vpack.c.b16 %v3641, %v3640
      %v3670 = vpack.c.b16 %v3643, %v3642
      %v3671 = vpack.c.b16 %v3645, %v3644
      %v3672 = vpack.c.b16 %v3647, %v3646
      %v3673 = vpack.c.b16 %v3649, %v3648
      %v3674 = vpack.c.b16 %v3651, %v3650
      %v3675 = vpack.c.b16 %v3653, %v3652
      %v3676 = vpack.c.b16 %v3655, %v3654
      %v3677 = vpack.c.b16 %v3657, %v3656
      %v3678 = vpack.c.b16 %v3659, %v3658
      %v3679 = vpack.c.b16 %v3661, %v3660
      %v3680 = vpack.c.b16 %v3663, %v3662
      %v3681 = vpack.c.b16 %v3665, %v3664
      %v3683 = vsel %vm1482, %v3666, 0
      %v3686 = vsel %vm1482, %v3667, 0
      %v3689 = vsel %vm1482, %v3668, 0
      %v3692 = vsel %vm1482, %v3669, 0
      %v3695 = vsel %vm1482, %v3670, 0
      %v3698 = vsel %vm1482, %v3671, 0
      %v3701 = vsel %vm1482, %v3672, 0
      %v3704 = vsel %vm1482, %v3673, 0
      %v3707 = vsel %vm1482, %v3674, 0
      %v3710 = vsel %vm1482, %v3675, 0
      %v3713 = vsel %vm1482, %v3676, 0
      %v3716 = vsel %vm1482, %v3677, 0
      %v3719 = vsel %vm1482, %v3678, 0
      %v3722 = vsel %vm1482, %v3679, 0
      %v3725 = vsel %vm1482, %v3680, 0
      %v3728 = vsel %vm1482, %v3681, 0
      %v3731 = vsel %vm1531, %v3601, 0
      %3733 = vmatpush.bf16.msra.mxu0 0
      %3734 = vmatpush.bf16.msra.mxu0 0
      %3735 = vmatpush.bf16.msra.mxu0 0
      %3736 = vmatpush.bf16.msra.mxu0 0
      %3737 = vmatpush.bf16.msra.mxu0 0
      %3738 = vmatpush.bf16.msra.mxu0 0
      %3739 = vmatpush.bf16.msra.mxu0 0
      %3740 = vmatpush.bf16.msra.mxu0 %v3731
      %3741 = vmatmul.bf16.gmra.mxu0 %v3683
      %v3742 = vpop.f32.mrf.mxu0
      %v3743 = vadd.f32 0.0, %v3742
      %v3744 = vpop.f32.mrf.mxu0
      %v3745 = vadd.f32 0.0, %v3744
      %3746 = vmatmul.bf16.gmra.mxu0 %v3686
      %v3747 = vpop.f32.mrf.mxu0
      %v3748 = vadd.f32 0.0, %v3747
      %v3749 = vpop.f32.mrf.mxu0
      %v3750 = vadd.f32 0.0, %v3749
      %3751 = vmatmul.bf16.gmra.mxu0 %v3689
      %v3752 = vpop.f32.mrf.mxu0
      %v3753 = vadd.f32 0.0, %v3752
      %v3754 = vpop.f32.mrf.mxu0
      %v3755 = vadd.f32 0.0, %v3754
      %3756 = vmatmul.bf16.gmra.mxu0 %v3692
      %v3757 = vpop.f32.mrf.mxu0
      %v3758 = vadd.f32 0.0, %v3757
      %v3759 = vpop.f32.mrf.mxu0
      %v3760 = vadd.f32 0.0, %v3759
      %3761 = vmatmul.bf16.gmra.mxu0 %v3695
      %v3762 = vpop.f32.mrf.mxu0
      %v3763 = vadd.f32 0.0, %v3762
      %v3764 = vpop.f32.mrf.mxu0
      %v3765 = vadd.f32 0.0, %v3764
      %3766 = vmatmul.bf16.gmra.mxu0 %v3698
      %v3767 = vpop.f32.mrf.mxu0
      %v3768 = vadd.f32 0.0, %v3767
      %v3769 = vpop.f32.mrf.mxu0
      %v3770 = vadd.f32 0.0, %v3769
      %3771 = vmatmul.bf16.gmra.mxu0 %v3701
      %v3772 = vpop.f32.mrf.mxu0
      %v3773 = vadd.f32 0.0, %v3772
      %v3774 = vpop.f32.mrf.mxu0
      %v3775 = vadd.f32 0.0, %v3774
      %3776 = vmatmul.bf16.gmra.mxu0 %v3704
      %v3777 = vpop.f32.mrf.mxu0
      %v3778 = vadd.f32 0.0, %v3777
      %v3779 = vpop.f32.mrf.mxu0
      %v3780 = vadd.f32 0.0, %v3779
      %3781 = vmatmul.bf16.gmra.mxu0 %v3707
      %v3782 = vpop.f32.mrf.mxu0
      %v3783 = vadd.f32 0.0, %v3782
      %v3784 = vpop.f32.mrf.mxu0
      %v3785 = vadd.f32 0.0, %v3784
      %3786 = vmatmul.bf16.gmra.mxu0 %v3710
      %v3787 = vpop.f32.mrf.mxu0
      %v3788 = vadd.f32 0.0, %v3787
      %v3789 = vpop.f32.mrf.mxu0
      %v3790 = vadd.f32 0.0, %v3789
      %3791 = vmatmul.bf16.gmra.mxu0 %v3713
      %v3792 = vpop.f32.mrf.mxu0
      %v3793 = vadd.f32 0.0, %v3792
      %v3794 = vpop.f32.mrf.mxu0
      %v3795 = vadd.f32 0.0, %v3794
      %3796 = vmatmul.bf16.gmra.mxu0 %v3716
      %v3797 = vpop.f32.mrf.mxu0
      %v3798 = vadd.f32 0.0, %v3797
      %v3799 = vpop.f32.mrf.mxu0
      %v3800 = vadd.f32 0.0, %v3799
      %3801 = vmatmul.bf16.gmra.mxu0 %v3719
      %v3802 = vpop.f32.mrf.mxu0
      %v3803 = vadd.f32 0.0, %v3802
      %v3804 = vpop.f32.mrf.mxu0
      %v3805 = vadd.f32 0.0, %v3804
      %3806 = vmatmul.bf16.gmra.mxu0 %v3722
      %v3807 = vpop.f32.mrf.mxu0
      %v3808 = vadd.f32 0.0, %v3807
      %v3809 = vpop.f32.mrf.mxu0
      %v3810 = vadd.f32 0.0, %v3809
      %3811 = vmatmul.bf16.gmra.mxu0 %v3725
      %v3812 = vpop.f32.mrf.mxu0
      %v3813 = vadd.f32 0.0, %v3812
      %v3814 = vpop.f32.mrf.mxu0
      %v3815 = vadd.f32 0.0, %v3814
      %3816 = vmatmul.bf16.gmra.mxu0 %v3728
      %v3817 = vpop.f32.mrf.mxu0
      %v3818 = vadd.f32 0.0, %v3817
      %v3819 = vpop.f32.mrf.mxu0
      %v3820 = vadd.f32 0.0, %v3819
      %3821 = vdwg.mxu0
      %v3822 = vadd.f32 %v3535, %v3743
      %v3823 = vadd.f32 %v3536, %v3745
      %v3824 = vadd.f32 %v3537, %v3748
      %v3825 = vadd.f32 %v3538, %v3750
      %v3826 = vadd.f32 %v3539, %v3753
      %v3827 = vadd.f32 %v3540, %v3755
      %v3828 = vadd.f32 %v3541, %v3758
      %v3829 = vadd.f32 %v3542, %v3760
      %v3830 = vadd.f32 %v3543, %v3763
      %v3831 = vadd.f32 %v3544, %v3765
      %v3832 = vadd.f32 %v3545, %v3768
      %v3833 = vadd.f32 %v3546, %v3770
      %v3834 = vadd.f32 %v3547, %v3773
      %v3835 = vadd.f32 %v3548, %v3775
      %v3836 = vadd.f32 %v3549, %v3778
      %v3837 = vadd.f32 %v3550, %v3780
      %v3838 = vadd.f32 %v3551, %v3783
      %v3839 = vadd.f32 %v3552, %v3785
      %v3840 = vadd.f32 %v3553, %v3788
      %v3841 = vadd.f32 %v3554, %v3790
      %v3842 = vadd.f32 %v3555, %v3793
      %v3843 = vadd.f32 %v3556, %v3795
      %v3844 = vadd.f32 %v3557, %v3798
      %v3845 = vadd.f32 %v3558, %v3800
      %v3846 = vadd.f32 %v3559, %v3803
      %v3847 = vadd.f32 %v3560, %v3805
      %v3848 = vadd.f32 %v3561, %v3808
      %v3849 = vadd.f32 %v3562, %v3810
      %v3850 = vadd.f32 %v3563, %v3813
      %v3851 = vadd.f32 %v3564, %v3815
      %v3852 = vadd.f32 %v3565, %v3818
      %v3853 = vadd.f32 %v3566, %v3820
      %v3854 = vld [vmem:[%s3567] sm:$0xf]
      %v3855 = vld [vmem:[%s3567 + $0x4] sm:$0xf]
      %v3856 = vld [vmem:[%s3567 + $0x8] sm:$0x1]
      %v3857 = vld [vmem:[%s3567 + $0xc] sm:$0xf]
      %v3858 = vld [vmem:[%s3567 + $0x10] sm:$0xf]
      %v3859 = vld [vmem:[%s3567 + $0x14] sm:$0x1]
      %v3860 = vld [vmem:[%s3567 + $0x18] sm:$0xf]
      %v3861 = vld [vmem:[%s3567 + $0x1c] sm:$0xf]
      %v3862 = vld [vmem:[%s3567 + $0x20] sm:$0x1]
      %v3863 = vld [vmem:[%s3567 + $0x24] sm:$0xf]
      %v3864 = vld [vmem:[%s3567 + $0x28] sm:$0xf]
      %v3865 = vld [vmem:[%s3567 + $0x2c] sm:$0x1]
      %v3866 = vld [vmem:[%s3567 + $0x30] sm:$0xf]
      %v3867 = vld [vmem:[%s3567 + $0x34] sm:$0xf]
      %v3868 = vld [vmem:[%s3567 + $0x38] sm:$0x1]
      %v3869 = vld [vmem:[%s3567 + $0x3c] sm:$0xf]
      %v3870 = vld [vmem:[%s3567 + $0x40] sm:$0xf]
      %v3871 = vld [vmem:[%s3567 + $0x44] sm:$0x1]
      %v3872 = vld [vmem:[%s3567 + $0x48] sm:$0xf]
      %v3873 = vld [vmem:[%s3567 + $0x4c] sm:$0xf]
      %v3874 = vld [vmem:[%s3567 + $0x50] sm:$0x1]
      %v3875 = vld [vmem:[%s3567 + $0x54] sm:$0xf]
      %v3876 = vld [vmem:[%s3567 + $0x58] sm:$0xf]
      %v3877 = vld [vmem:[%s3567 + $0x5c] sm:$0x1]
      %v3878 = vld [vmem:[%s3567 + $0x60] sm:$0xf]
      %v3879 = vld [vmem:[%s3567 + $0x64] sm:$0xf]
      %v3880 = vld [vmem:[%s3567 + $0x68] sm:$0x1]
      %v3881 = vld [vmem:[%s3567 + $0x6c] sm:$0xf]
      %v3882 = vld [vmem:[%s3567 + $0x70] sm:$0xf]
      %v3883 = vld [vmem:[%s3567 + $0x74] sm:$0x1]
      %v3884 = vld [vmem:[%s3567 + $0x78] sm:$0xf]
      %v3885 = vld [vmem:[%s3567 + $0x7c] sm:$0xf]
      %v3886 = vld [vmem:[%s3567 + $0x80] sm:$0x1]
      %v3887 = vld [vmem:[%s3567 + $0x84] sm:$0xf]
      %v3888 = vld [vmem:[%s3567 + $0x88] sm:$0xf]
      %v3889 = vld [vmem:[%s3567 + $0x8c] sm:$0x1]
      %v3890 = vld [vmem:[%s3567 + $0x90] sm:$0xf]
      %v3891 = vld [vmem:[%s3567 + $0x94] sm:$0xf]
      %v3892 = vld [vmem:[%s3567 + $0x98] sm:$0x1]
      %v3893 = vld [vmem:[%s3567 + $0x9c] sm:$0xf]
      %v3894 = vld [vmem:[%s3567 + $0xa0] sm:$0xf]
      %v3895 = vld [vmem:[%s3567 + $0xa4] sm:$0x1]
      %v3896 = vld [vmem:[%s3567 + $0xa8] sm:$0xf]
      %v3897 = vld [vmem:[%s3567 + $0xac] sm:$0xf]
      %v3898 = vld [vmem:[%s3567 + $0xb0] sm:$0x1]
      %v3899 = vld [vmem:[%s3567 + $0xb4] sm:$0xf]
      %v3900 = vld [vmem:[%s3567 + $0xb8] sm:$0xf]
      %v3901 = vld [vmem:[%s3567 + $0xbc] sm:$0x1]
      %v3903 = vshrl.u32 %v3854, 16
      %v3905 = vrot.slane %v3903, 4
      %v3906 = vshll.u32 %v3854, 16
      %v3908 = vrot.slane %v3906, 5
      %v3909 = vor.u32 %v3905, %v3908
      %v3910 = vrot.slane %v3909, 4
      %v3912 = vshll.u32 %v3855, 16
      %v3914 = vrot.slane %v3912, 5
      %v3915 = vsel %vm1047, %v3910, %v3914
      %v3916 = vshrl.u32 %v3855, 16
      %v3918 = vrot.slane %v3916, 4
      %v3919 = vor.u32 %v3918, %v3914
      %v3920 = vrot.slane %v3919, 4
      %v3922 = vshll.u32 %v3856, 16
      %v3924 = vrot.slane %v3922, 5
      %v3925 = vsel %vm1047, %v3920, %v3924
      %v3927 = vshrl.u32 %v3857, 16
      %v3929 = vrot.slane %v3927, 4
      %v3930 = vshll.u32 %v3857, 16
      %v3932 = vrot.slane %v3930, 5
      %v3933 = vor.u32 %v3929, %v3932
      %v3934 = vrot.slane %v3933, 4
      %v3936 = vshll.u32 %v3858, 16
      %v3938 = vrot.slane %v3936, 5
      %v3939 = vsel %vm1047, %v3934, %v3938
      %v3940 = vshrl.u32 %v3858, 16
      %v3942 = vrot.slane %v3940, 4
      %v3943 = vor.u32 %v3942, %v3938
      %v3944 = vrot.slane %v3943, 4
      %v3946 = vshll.u32 %v3859, 16
      %v3948 = vrot.slane %v3946, 5
      %v3949 = vsel %vm1047, %v3944, %v3948
      %v3951 = vshrl.u32 %v3860, 16
      %v3953 = vrot.slane %v3951, 4
      %v3954 = vshll.u32 %v3860, 16
      %v3956 = vrot.slane %v3954, 5
      %v3957 = vor.u32 %v3953, %v3956
      %v3958 = vrot.slane %v3957, 4
      %v3960 = vshll.u32 %v3861, 16
      %v3962 = vrot.slane %v3960, 5
      %v3963 = vsel %vm1047, %v3958, %v3962
      %v3964 = vshrl.u32 %v3861, 16
      %v3966 = vrot.slane %v3964, 4
      %v3967 = vor.u32 %v3966, %v3962
      %v3968 = vrot.slane %v3967, 4
      %v3970 = vshll.u32 %v3862, 16
      %v3972 = vrot.slane %v3970, 5
      %v3973 = vsel %vm1047, %v3968, %v3972
      %v3975 = vshrl.u32 %v3863, 16
      %v3977 = vrot.slane %v3975, 4
      %v3978 = vshll.u32 %v3863, 16
      %v3980 = vrot.slane %v3978, 5
      %v3981 = vor.u32 %v3977, %v3980
      %v3982 = vrot.slane %v3981, 4
      %v3984 = vshll.u32 %v3864, 16
      %v3986 = vrot.slane %v3984, 5
      %v3987 = vsel %vm1047, %v3982, %v3986
      %v3988 = vshrl.u32 %v3864, 16
      %v3990 = vrot.slane %v3988, 4
      %v3991 = vor.u32 %v3990, %v3986
      %v3992 = vrot.slane %v3991, 4
      %v3994 = vshll.u32 %v3865, 16
      %v3996 = vrot.slane %v3994, 5
      %v3997 = vsel %vm1047, %v3992, %v3996
      %v3999 = vshrl.u32 %v3866, 16
      %v4001 = vrot.slane %v3999, 4
      %v4002 = vshll.u32 %v3866, 16
      %v4004 = vrot.slane %v4002, 5
      %v4005 = vor.u32 %v4001, %v4004
      %v4006 = vrot.slane %v4005, 4
      %v4008 = vshll.u32 %v3867, 16
      %v4010 = vrot.slane %v4008, 5
      %v4011 = vsel %vm1047, %v4006, %v4010
      %v4012 = vshrl.u32 %v3867, 16
      %v4014 = vrot.slane %v4012, 4
      %v4015 = vor.u32 %v4014, %v4010
      %v4016 = vrot.slane %v4015, 4
      %v4018 = vshll.u32 %v3868, 16
      %v4020 = vrot.slane %v4018, 5
      %v4021 = vsel %vm1047, %v4016, %v4020
      %v4023 = vshrl.u32 %v3869, 16
      %v4025 = vrot.slane %v4023, 4
      %v4026 = vshll.u32 %v3869, 16
      %v4028 = vrot.slane %v4026, 5
      %v4029 = vor.u32 %v4025, %v4028
      %v4030 = vrot.slane %v4029, 4
      %v4032 = vshll.u32 %v3870, 16
      %v4034 = vrot.slane %v4032, 5
      %v4035 = vsel %vm1047, %v4030, %v4034
      %v4036 = vshrl.u32 %v3870, 16
      %v4038 = vrot.slane %v4036, 4
      %v4039 = vor.u32 %v4038, %v4034
      %v4040 = vrot.slane %v4039, 4
      %v4042 = vshll.u32 %v3871, 16
      %v4044 = vrot.slane %v4042, 5
      %v4045 = vsel %vm1047, %v4040, %v4044
      %v4047 = vshrl.u32 %v3872, 16
      %v4049 = vrot.slane %v4047, 4
      %v4050 = vshll.u32 %v3872, 16
      %v4052 = vrot.slane %v4050, 5
      %v4053 = vor.u32 %v4049, %v4052
      %v4054 = vrot.slane %v4053, 4
      %v4056 = vshll.u32 %v3873, 16
      %v4058 = vrot.slane %v4056, 5
      %v4059 = vsel %vm1047, %v4054, %v4058
      %v4060 = vshrl.u32 %v3873, 16
      %v4062 = vrot.slane %v4060, 4
      %v4063 = vor.u32 %v4062, %v4058
      %v4064 = vrot.slane %v4063, 4
      %v4066 = vshll.u32 %v3874, 16
      %v4068 = vrot.slane %v4066, 5
      %v4069 = vsel %vm1047, %v4064, %v4068
      %v4071 = vshrl.u32 %v3875, 16
      %v4073 = vrot.slane %v4071, 4
      %v4074 = vshll.u32 %v3875, 16
      %v4076 = vrot.slane %v4074, 5
      %v4077 = vor.u32 %v4073, %v4076
      %v4078 = vrot.slane %v4077, 4
      %v4080 = vshll.u32 %v3876, 16
      %v4082 = vrot.slane %v4080, 5
      %v4083 = vsel %vm1047, %v4078, %v4082
      %v4084 = vshrl.u32 %v3876, 16
      %v4086 = vrot.slane %v4084, 4
      %v4087 = vor.u32 %v4086, %v4082
      %v4088 = vrot.slane %v4087, 4
      %v4090 = vshll.u32 %v3877, 16
      %v4092 = vrot.slane %v4090, 5
      %v4093 = vsel %vm1047, %v4088, %v4092
      %v4095 = vshrl.u32 %v3878, 16
      %v4097 = vrot.slane %v4095, 4
      %v4098 = vshll.u32 %v3878, 16
      %v4100 = vrot.slane %v4098, 5
      %v4101 = vor.u32 %v4097, %v4100
      %v4102 = vrot.slane %v4101, 4
      %v4104 = vshll.u32 %v3879, 16
      %v4106 = vrot.slane %v4104, 5
      %v4107 = vsel %vm1047, %v4102, %v4106
      %v4108 = vshrl.u32 %v3879, 16
      %v4110 = vrot.slane %v4108, 4
      %v4111 = vor.u32 %v4110, %v4106
      %v4112 = vrot.slane %v4111, 4
      %v4114 = vshll.u32 %v3880, 16
      %v4116 = vrot.slane %v4114, 5
      %v4117 = vsel %vm1047, %v4112, %v4116
      %v4119 = vshrl.u32 %v3881, 16
      %v4121 = vrot.slane %v4119, 4
      %v4122 = vshll.u32 %v3881, 16
      %v4124 = vrot.slane %v4122, 5
      %v4125 = vor.u32 %v4121, %v4124
      %v4126 = vrot.slane %v4125, 4
      %v4128 = vshll.u32 %v3882, 16
      %v4130 = vrot.slane %v4128, 5
      %v4131 = vsel %vm1047, %v4126, %v4130
      %v4132 = vshrl.u32 %v3882, 16
      %v4134 = vrot.slane %v4132, 4
      %v4135 = vor.u32 %v4134, %v4130
      %v4136 = vrot.slane %v4135, 4
      %v4138 = vshll.u32 %v3883, 16
      %v4140 = vrot.slane %v4138, 5
      %v4141 = vsel %vm1047, %v4136, %v4140
      %v4143 = vshrl.u32 %v3884, 16
      %v4145 = vrot.slane %v4143, 4
      %v4146 = vshll.u32 %v3884, 16
      %v4148 = vrot.slane %v4146, 5
      %v4149 = vor.u32 %v4145, %v4148
      %v4150 = vrot.slane %v4149, 4
      %v4152 = vshll.u32 %v3885, 16
      %v4154 = vrot.slane %v4152, 5
      %v4155 = vsel %vm1047, %v4150, %v4154
      %v4156 = vshrl.u32 %v3885, 16
      %v4158 = vrot.slane %v4156, 4
      %v4159 = vor.u32 %v4158, %v4154
      %v4160 = vrot.slane %v4159, 4
      %v4162 = vshll.u32 %v3886, 16
      %v4164 = vrot.slane %v4162, 5
      %v4165 = vsel %vm1047, %v4160, %v4164
      %v4167 = vshrl.u32 %v3887, 16
      %v4169 = vrot.slane %v4167, 4
      %v4170 = vshll.u32 %v3887, 16
      %v4172 = vrot.slane %v4170, 5
      %v4173 = vor.u32 %v4169, %v4172
      %v4174 = vrot.slane %v4173, 4
      %v4176 = vshll.u32 %v3888, 16
      %v4178 = vrot.slane %v4176, 5
      %v4179 = vsel %vm1047, %v4174, %v4178
      %v4180 = vshrl.u32 %v3888, 16
      %v4182 = vrot.slane %v4180, 4
      %v4183 = vor.u32 %v4182, %v4178
      %v4184 = vrot.slane %v4183, 4
      %v4186 = vshll.u32 %v3889, 16
      %v4188 = vrot.slane %v4186, 5
      %v4189 = vsel %vm1047, %v4184, %v4188
      %v4191 = vshrl.u32 %v3890, 16
      %v4193 = vrot.slane %v4191, 4
      %v4194 = vshll.u32 %v3890, 16
      %v4196 = vrot.slane %v4194, 5
      %v4197 = vor.u32 %v4193, %v4196
      %v4198 = vrot.slane %v4197, 4
      %v4200 = vshll.u32 %v3891, 16
      %v4202 = vrot.slane %v4200, 5
      %v4203 = vsel %vm1047, %v4198, %v4202
      %v4204 = vshrl.u32 %v3891, 16
      %v4206 = vrot.slane %v4204, 4
      %v4207 = vor.u32 %v4206, %v4202
      %v4208 = vrot.slane %v4207, 4
      %v4210 = vshll.u32 %v3892, 16
      %v4212 = vrot.slane %v4210, 5
      %v4213 = vsel %vm1047, %v4208, %v4212
      %v4215 = vshrl.u32 %v3893, 16
      %v4217 = vrot.slane %v4215, 4
      %v4218 = vshll.u32 %v3893, 16
      %v4220 = vrot.slane %v4218, 5
      %v4221 = vor.u32 %v4217, %v4220
      %v4222 = vrot.slane %v4221, 4
      %v4224 = vshll.u32 %v3894, 16
      %v4226 = vrot.slane %v4224, 5
      %v4227 = vsel %vm1047, %v4222, %v4226
      %v4228 = vshrl.u32 %v3894, 16
      %v4230 = vrot.slane %v4228, 4
      %v4231 = vor.u32 %v4230, %v4226
      %v4232 = vrot.slane %v4231, 4
      %v4234 = vshll.u32 %v3895, 16
      %v4236 = vrot.slane %v4234, 5
      %v4237 = vsel %vm1047, %v4232, %v4236
      %v4239 = vshrl.u32 %v3896, 16
      %v4241 = vrot.slane %v4239, 4
      %v4242 = vshll.u32 %v3896, 16
      %v4244 = vrot.slane %v4242, 5
      %v4245 = vor.u32 %v4241, %v4244
      %v4246 = vrot.slane %v4245, 4
      %v4248 = vshll.u32 %v3897, 16
      %v4250 = vrot.slane %v4248, 5
      %v4251 = vsel %vm1047, %v4246, %v4250
      %v4252 = vshrl.u32 %v3897, 16
      %v4254 = vrot.slane %v4252, 4
      %v4255 = vor.u32 %v4254, %v4250
      %v4256 = vrot.slane %v4255, 4
      %v4258 = vshll.u32 %v3898, 16
      %v4260 = vrot.slane %v4258, 5
      %v4261 = vsel %vm1047, %v4256, %v4260
      %v4263 = vshrl.u32 %v3899, 16
      %v4265 = vrot.slane %v4263, 4
      %v4266 = vshll.u32 %v3899, 16
      %v4268 = vrot.slane %v4266, 5
      %v4269 = vor.u32 %v4265, %v4268
      %v4270 = vrot.slane %v4269, 4
      %v4272 = vshll.u32 %v3900, 16
      %v4274 = vrot.slane %v4272, 5
      %v4275 = vsel %vm1047, %v4270, %v4274
      %v4276 = vshrl.u32 %v3900, 16
      %v4278 = vrot.slane %v4276, 4
      %v4279 = vor.u32 %v4278, %v4274
      %v4280 = vrot.slane %v4279, 4
      %v4282 = vshll.u32 %v3901, 16
      %v4284 = vrot.slane %v4282, 5
      %v4285 = vsel %vm1047, %v4280, %v4284
      %s4286 = scalar_lea.vmem %s3, 14
      %v4287 = vld [vmem:[%s4286] sm:$0x3]
      %v4288 = vunpack.c.l.b16 %v3915
      %v4289 = vunpack.c.l.b16 %v3925
      %v4290 = vunpack.c.l.b16 %v3939
      %v4291 = vunpack.c.l.b16 %v3949
      %v4292 = vunpack.c.l.b16 %v3963
      %v4293 = vunpack.c.l.b16 %v3973
      %v4294 = vunpack.c.l.b16 %v3987
      %v4295 = vunpack.c.l.b16 %v3997
      %v4296 = vunpack.c.l.b16 %v4011
      %v4297 = vunpack.c.l.b16 %v4021
      %v4298 = vunpack.c.l.b16 %v4035
      %v4299 = vunpack.c.l.b16 %v4045
      %v4300 = vunpack.c.l.b16 %v4059
      %v4301 = vunpack.c.l.b16 %v4069
      %v4302 = vunpack.c.l.b16 %v4083
      %v4303 = vunpack.c.l.b16 %v4093
      %v4304 = vunpack.c.l.b16 %v4107
      %v4305 = vunpack.c.l.b16 %v4117
      %v4306 = vunpack.c.l.b16 %v4131
      %v4307 = vunpack.c.l.b16 %v4141
      %v4308 = vunpack.c.l.b16 %v4155
      %v4309 = vunpack.c.l.b16 %v4165
      %v4310 = vunpack.c.l.b16 %v4179
      %v4311 = vunpack.c.l.b16 %v4189
      %v4312 = vunpack.c.l.b16 %v4203
      %v4313 = vunpack.c.l.b16 %v4213
      %v4314 = vunpack.c.l.b16 %v4227
      %v4315 = vunpack.c.l.b16 %v4237
      %v4316 = vunpack.c.l.b16 %v4251
      %v4317 = vunpack.c.l.b16 %v4261
      %v4318 = vunpack.c.l.b16 %v4275
      %v4319 = vunpack.c.l.b16 %v4285
      %v4320 = vpack.c.b16 %v4289, %v4288
      %v4321 = vpack.c.b16 %v4291, %v4290
      %v4322 = vpack.c.b16 %v4293, %v4292
      %v4323 = vpack.c.b16 %v4295, %v4294
      %v4324 = vpack.c.b16 %v4297, %v4296
      %v4325 = vpack.c.b16 %v4299, %v4298
      %v4326 = vpack.c.b16 %v4301, %v4300
      %v4327 = vpack.c.b16 %v4303, %v4302
      %v4328 = vpack.c.b16 %v4305, %v4304
      %v4329 = vpack.c.b16 %v4307, %v4306
      %v4330 = vpack.c.b16 %v4309, %v4308
      %v4331 = vpack.c.b16 %v4311, %v4310
      %v4332 = vpack.c.b16 %v4313, %v4312
      %v4333 = vpack.c.b16 %v4315, %v4314
      %v4334 = vpack.c.b16 %v4317, %v4316
      %v4335 = vpack.c.b16 %v4319, %v4318
      %v4337 = vsel %vm1482, %v4320, 0
      %v4340 = vsel %vm1482, %v4321, 0
      %v4343 = vsel %vm1482, %v4322, 0
      %v4346 = vsel %vm1482, %v4323, 0
      %v4349 = vsel %vm1482, %v4324, 0
      %v4352 = vsel %vm1482, %v4325, 0
      %v4355 = vsel %vm1482, %v4326, 0
      %v4358 = vsel %vm1482, %v4327, 0
      %v4361 = vsel %vm1482, %v4328, 0
      %v4364 = vsel %vm1482, %v4329, 0
      %v4367 = vsel %vm1482, %v4330, 0
      %v4370 = vsel %vm1482, %v4331, 0
      %v4373 = vsel %vm1482, %v4332, 0
      %v4376 = vsel %vm1482, %v4333, 0
      %v4379 = vsel %vm1482, %v4334, 0
      %v4382 = vsel %vm1482, %v4335, 0
      %v4385 = vsel %vm1531, %v4287, 0
      %4387 = vmatpush.bf16.msra.mxu0 0
      %4388 = vmatpush.bf16.msra.mxu0 0
      %4389 = vmatpush.bf16.msra.mxu0 0
      %4390 = vmatpush.bf16.msra.mxu0 0
      %4391 = vmatpush.bf16.msra.mxu0 0
      %4392 = vmatpush.bf16.msra.mxu0 0
      %4393 = vmatpush.bf16.msra.mxu0 0
      %4394 = vmatpush.bf16.msra.mxu0 %v4385
      %4395 = vmatmul.bf16.gmra.mxu0 %v4337
      %v4396 = vpop.f32.mrf.mxu0
      %v4397 = vadd.f32 0.0, %v4396
      %v4398 = vpop.f32.mrf.mxu0
      %v4399 = vadd.f32 0.0, %v4398
      %4400 = vmatmul.bf16.gmra.mxu0 %v4340
      %v4401 = vpop.f32.mrf.mxu0
      %v4402 = vadd.f32 0.0, %v4401
      %v4403 = vpop.f32.mrf.mxu0
      %v4404 = vadd.f32 0.0, %v4403
      %4405 = vmatmul.bf16.gmra.mxu0 %v4343
      %v4406 = vpop.f32.mrf.mxu0
      %v4407 = vadd.f32 0.0, %v4406
      %v4408 = vpop.f32.mrf.mxu0
      %v4409 = vadd.f32 0.0, %v4408
      %4410 = vmatmul.bf16.gmra.mxu0 %v4346
      %v4411 = vpop.f32.mrf.mxu0
      %v4412 = vadd.f32 0.0, %v4411
      %v4413 = vpop.f32.mrf.mxu0
      %v4414 = vadd.f32 0.0, %v4413
      %4415 = vmatmul.bf16.gmra.mxu0 %v4349
      %v4416 = vpop.f32.mrf.mxu0
      %v4417 = vadd.f32 0.0, %v4416
      %v4418 = vpop.f32.mrf.mxu0
      %v4419 = vadd.f32 0.0, %v4418
      %4420 = vmatmul.bf16.gmra.mxu0 %v4352
      %v4421 = vpop.f32.mrf.mxu0
      %v4422 = vadd.f32 0.0, %v4421
      %v4423 = vpop.f32.mrf.mxu0
      %v4424 = vadd.f32 0.0, %v4423
      %4425 = vmatmul.bf16.gmra.mxu0 %v4355
      %v4426 = vpop.f32.mrf.mxu0
      %v4427 = vadd.f32 0.0, %v4426
      %v4428 = vpop.f32.mrf.mxu0
      %v4429 = vadd.f32 0.0, %v4428
      %4430 = vmatmul.bf16.gmra.mxu0 %v4358
      %v4431 = vpop.f32.mrf.mxu0
      %v4432 = vadd.f32 0.0, %v4431
      %v4433 = vpop.f32.mrf.mxu0
      %v4434 = vadd.f32 0.0, %v4433
      %4435 = vmatmul.bf16.gmra.mxu0 %v4361
      %v4436 = vpop.f32.mrf.mxu0
      %v4437 = vadd.f32 0.0, %v4436
      %v4438 = vpop.f32.mrf.mxu0
      %v4439 = vadd.f32 0.0, %v4438
      %4440 = vmatmul.bf16.gmra.mxu0 %v4364
      %v4441 = vpop.f32.mrf.mxu0
      %v4442 = vadd.f32 0.0, %v4441
      %v4443 = vpop.f32.mrf.mxu0
      %v4444 = vadd.f32 0.0, %v4443
      %4445 = vmatmul.bf16.gmra.mxu0 %v4367
      %v4446 = vpop.f32.mrf.mxu0
      %v4447 = vadd.f32 0.0, %v4446
      %v4448 = vpop.f32.mrf.mxu0
      %v4449 = vadd.f32 0.0, %v4448
      %4450 = vmatmul.bf16.gmra.mxu0 %v4370
      %v4451 = vpop.f32.mrf.mxu0
      %v4452 = vadd.f32 0.0, %v4451
      %v4453 = vpop.f32.mrf.mxu0
      %v4454 = vadd.f32 0.0, %v4453
      %4455 = vmatmul.bf16.gmra.mxu0 %v4373
      %v4456 = vpop.f32.mrf.mxu0
      %v4457 = vadd.f32 0.0, %v4456
      %v4458 = vpop.f32.mrf.mxu0
      %v4459 = vadd.f32 0.0, %v4458
      %4460 = vmatmul.bf16.gmra.mxu0 %v4376
      %v4461 = vpop.f32.mrf.mxu0
      %v4462 = vadd.f32 0.0, %v4461
      %v4463 = vpop.f32.mrf.mxu0
      %v4464 = vadd.f32 0.0, %v4463
      %4465 = vmatmul.bf16.gmra.mxu0 %v4379
      %v4466 = vpop.f32.mrf.mxu0
      %v4467 = vadd.f32 0.0, %v4466
      %v4468 = vpop.f32.mrf.mxu0
      %v4469 = vadd.f32 0.0, %v4468
      %4470 = vmatmul.bf16.gmra.mxu0 %v4382
      %v4471 = vpop.f32.mrf.mxu0
      %v4472 = vadd.f32 0.0, %v4471
      %v4473 = vpop.f32.mrf.mxu0
      %v4474 = vadd.f32 0.0, %v4473
      %4475 = vdwg.mxu0
      %v4476 = vadd.f32 %v3822, %v4397
      %v4477 = vadd.f32 %v3823, %v4399
      %v4478 = vadd.f32 %v3824, %v4402
      %v4479 = vadd.f32 %v3825, %v4404
      %v4480 = vadd.f32 %v3826, %v4407
      %v4481 = vadd.f32 %v3827, %v4409
      %v4482 = vadd.f32 %v3828, %v4412
      %v4483 = vadd.f32 %v3829, %v4414
      %v4484 = vadd.f32 %v3830, %v4417
      %v4485 = vadd.f32 %v3831, %v4419
      %v4486 = vadd.f32 %v3832, %v4422
      %v4487 = vadd.f32 %v3833, %v4424
      %v4488 = vadd.f32 %v3834, %v4427
      %v4489 = vadd.f32 %v3835, %v4429
      %v4490 = vadd.f32 %v3836, %v4432
      %v4491 = vadd.f32 %v3837, %v4434
      %v4492 = vadd.f32 %v3838, %v4437
      %v4493 = vadd.f32 %v3839, %v4439
      %v4494 = vadd.f32 %v3840, %v4442
      %v4495 = vadd.f32 %v3841, %v4444
      %v4496 = vadd.f32 %v3842, %v4447
      %v4497 = vadd.f32 %v3843, %v4449
      %v4498 = vadd.f32 %v3844, %v4452
      %v4499 = vadd.f32 %v3845, %v4454
      %v4500 = vadd.f32 %v3846, %v4457
      %v4501 = vadd.f32 %v3847, %v4459
      %v4502 = vadd.f32 %v3848, %v4462
      %v4503 = vadd.f32 %v3849, %v4464
      %v4504 = vadd.f32 %v3850, %v4467
      %v4505 = vadd.f32 %v3851, %v4469
      %v4506 = vadd.f32 %v3852, %v4472
      %v4507 = vadd.f32 %v3853, %v4474
      %v4508 = vld [vmem:[%s3567] sm:$0xe]
      %v4509 = vld [vmem:[%s3567 + $0xc] sm:$0xe]
      %v4510 = vld [vmem:[%s3567 + $0x18] sm:$0xe]
      %v4511 = vld [vmem:[%s3567 + $0x24] sm:$0xe]
      %v4512 = vld [vmem:[%s3567 + $0x30] sm:$0xe]
      %v4513 = vld [vmem:[%s3567 + $0x3c] sm:$0xe]
      %v4514 = vld [vmem:[%s3567 + $0x48] sm:$0xe]
      %v4515 = vld [vmem:[%s3567 + $0x54] sm:$0xe]
      %v4516 = vld [vmem:[%s3567 + $0x60] sm:$0xe]
      %v4517 = vld [vmem:[%s3567 + $0x6c] sm:$0xe]
      %v4518 = vld [vmem:[%s3567 + $0x78] sm:$0xe]
      %v4519 = vld [vmem:[%s3567 + $0x84] sm:$0xe]
      %v4520 = vld [vmem:[%s3567 + $0x90] sm:$0xe]
      %v4521 = vld [vmem:[%s3567 + $0x9c] sm:$0xe]
      %v4522 = vld [vmem:[%s3567 + $0xa8] sm:$0xe]
      %v4523 = vld [vmem:[%s3567 + $0xb4] sm:$0xe]
      %v4572 = vrot.slane %v4508, 5
      %v4573 = vrot.slane %v4572, 4
      %v4574 = vrot.slane %v3855, 5
      %v4575 = vsel %vm1894, %v4573, %v4574
      %v4576 = vrot.slane %v4574, 4
      %v4577 = vrot.slane %v3856, 5
      %v4578 = vsel %vm1894, %v4576, %v4577
      %v4579 = vrot.slane %v4509, 5
      %v4580 = vrot.slane %v4579, 4
      %v4581 = vrot.slane %v3858, 5
      %v4582 = vsel %vm1894, %v4580, %v4581
      %v4583 = vrot.slane %v4581, 4
      %v4584 = vrot.slane %v3859, 5
      %v4585 = vsel %vm1894, %v4583, %v4584
      %v4586 = vrot.slane %v4510, 5
      %v4587 = vrot.slane %v4586, 4
      %v4588 = vrot.slane %v3861, 5
      %v4589 = vsel %vm1894, %v4587, %v4588
      %v4590 = vrot.slane %v4588, 4
      %v4591 = vrot.slane %v3862, 5
      %v4592 = vsel %vm1894, %v4590, %v4591
      %v4593 = vrot.slane %v4511, 5
      %v4594 = vrot.slane %v4593, 4
      %v4595 = vrot.slane %v3864, 5
      %v4596 = vsel %vm1894, %v4594, %v4595
      %v4597 = vrot.slane %v4595, 4
      %v4598 = vrot.slane %v3865, 5
      %v4599 = vsel %vm1894, %v4597, %v4598
      %v4600 = vrot.slane %v4512, 5
      %v4601 = vrot.slane %v4600, 4
      %v4602 = vrot.slane %v3867, 5
      %v4603 = vsel %vm1894, %v4601, %v4602
      %v4604 = vrot.slane %v4602, 4
      %v4605 = vrot.slane %v3868, 5
      %v4606 = vsel %vm1894, %v4604, %v4605
      %v4607 = vrot.slane %v4513, 5
      %v4608 = vrot.slane %v4607, 4
      %v4609 = vrot.slane %v3870, 5
      %v4610 = vsel %vm1894, %v4608, %v4609
      %v4611 = vrot.slane %v4609, 4
      %v4612 = vrot.slane %v3871, 5
      %v4613 = vsel %vm1894, %v4611, %v4612
      %v4614 = vrot.slane %v4514, 5
      %v4615 = vrot.slane %v4614, 4
      %v4616 = vrot.slane %v3873, 5
      %v4617 = vsel %vm1894, %v4615, %v4616
      %v4618 = vrot.slane %v4616, 4
      %v4619 = vrot.slane %v3874, 5
      %v4620 = vsel %vm1894, %v4618, %v4619
      %v4621 = vrot.slane %v4515, 5
      %v4622 = vrot.slane %v4621, 4
      %v4623 = vrot.slane %v3876, 5
      %v4624 = vsel %vm1894, %v4622, %v4623
      %v4625 = vrot.slane %v4623, 4
      %v4626 = vrot.slane %v3877, 5
      %v4627 = vsel %vm1894, %v4625, %v4626
      %v4628 = vrot.slane %v4516, 5
      %v4629 = vrot.slane %v4628, 4
      %v4630 = vrot.slane %v3879, 5
      %v4631 = vsel %vm1894, %v4629, %v4630
      %v4632 = vrot.slane %v4630, 4
      %v4633 = vrot.slane %v3880, 5
      %v4634 = vsel %vm1894, %v4632, %v4633
      %v4635 = vrot.slane %v4517, 5
      %v4636 = vrot.slane %v4635, 4
      %v4637 = vrot.slane %v3882, 5
      %v4638 = vsel %vm1894, %v4636, %v4637
      %v4639 = vrot.slane %v4637, 4
      %v4640 = vrot.slane %v3883, 5
      %v4641 = vsel %vm1894, %v4639, %v4640
      %v4642 = vrot.slane %v4518, 5
      %v4643 = vrot.slane %v4642, 4
      %v4644 = vrot.slane %v3885, 5
      %v4645 = vsel %vm1894, %v4643, %v4644
      %v4646 = vrot.slane %v4644, 4
      %v4647 = vrot.slane %v3886, 5
      %v4648 = vsel %vm1894, %v4646, %v4647
      %v4649 = vrot.slane %v4519, 5
      %v4650 = vrot.slane %v4649, 4
      %v4651 = vrot.slane %v3888, 5
      %v4652 = vsel %vm1894, %v4650, %v4651
      %v4653 = vrot.slane %v4651, 4
      %v4654 = vrot.slane %v3889, 5
      %v4655 = vsel %vm1894, %v4653, %v4654
      %v4656 = vrot.slane %v4520, 5
      %v4657 = vrot.slane %v4656, 4
      %v4658 = vrot.slane %v3891, 5
      %v4659 = vsel %vm1894, %v4657, %v4658
      %v4660 = vrot.slane %v4658, 4
      %v4661 = vrot.slane %v3892, 5
      %v4662 = vsel %vm1894, %v4660, %v4661
      %v4663 = vrot.slane %v4521, 5
      %v4664 = vrot.slane %v4663, 4
      %v4665 = vrot.slane %v3894, 5
      %v4666 = vsel %vm1894, %v4664, %v4665
      %v4667 = vrot.slane %v4665, 4
      %v4668 = vrot.slane %v3895, 5
      %v4669 = vsel %vm1894, %v4667, %v4668
      %v4670 = vrot.slane %v4522, 5
      %v4671 = vrot.slane %v4670, 4
      %v4672 = vrot.slane %v3897, 5
      %v4673 = vsel %vm1894, %v4671, %v4672
      %v4674 = vrot.slane %v4672, 4
      %v4675 = vrot.slane %v3898, 5
      %v4676 = vsel %vm1894, %v4674, %v4675
      %v4677 = vrot.slane %v4523, 5
      %v4678 = vrot.slane %v4677, 4
      %v4679 = vrot.slane %v3900, 5
      %v4680 = vsel %vm1894, %v4678, %v4679
      %v4681 = vrot.slane %v4679, 4
      %v4682 = vrot.slane %v3901, 5
      %v4683 = vsel %vm1894, %v4681, %v4682
      %s4684 = scalar_lea.vmem %s3, 16
      %v4685 = vld [vmem:[%s4684] sm:$0x3]
      %v4686 = vunpack.c.l.b16 %v4575
      %v4687 = vunpack.c.l.b16 %v4578
      %v4688 = vunpack.c.l.b16 %v4582
      %v4689 = vunpack.c.l.b16 %v4585
      %v4690 = vunpack.c.l.b16 %v4589
      %v4691 = vunpack.c.l.b16 %v4592
      %v4692 = vunpack.c.l.b16 %v4596
      %v4693 = vunpack.c.l.b16 %v4599
      %v4694 = vunpack.c.l.b16 %v4603
      %v4695 = vunpack.c.l.b16 %v4606
      %v4696 = vunpack.c.l.b16 %v4610
      %v4697 = vunpack.c.l.b16 %v4613
      %v4698 = vunpack.c.l.b16 %v4617
      %v4699 = vunpack.c.l.b16 %v4620
      %v4700 = vunpack.c.l.b16 %v4624
      %v4701 = vunpack.c.l.b16 %v4627
      %v4702 = vunpack.c.l.b16 %v4631
      %v4703 = vunpack.c.l.b16 %v4634
      %v4704 = vunpack.c.l.b16 %v4638
      %v4705 = vunpack.c.l.b16 %v4641
      %v4706 = vunpack.c.l.b16 %v4645
      %v4707 = vunpack.c.l.b16 %v4648
      %v4708 = vunpack.c.l.b16 %v4652
      %v4709 = vunpack.c.l.b16 %v4655
      %v4710 = vunpack.c.l.b16 %v4659
      %v4711 = vunpack.c.l.b16 %v4662
      %v4712 = vunpack.c.l.b16 %v4666
      %v4713 = vunpack.c.l.b16 %v4669
      %v4714 = vunpack.c.l.b16 %v4673
      %v4715 = vunpack.c.l.b16 %v4676
      %v4716 = vunpack.c.l.b16 %v4680
      %v4717 = vunpack.c.l.b16 %v4683
      %v4718 = vpack.c.b16 %v4687, %v4686
      %v4719 = vpack.c.b16 %v4689, %v4688
      %v4720 = vpack.c.b16 %v4691, %v4690
      %v4721 = vpack.c.b16 %v4693, %v4692
      %v4722 = vpack.c.b16 %v4695, %v4694
      %v4723 = vpack.c.b16 %v4697, %v4696
      %v4724 = vpack.c.b16 %v4699, %v4698
      %v4725 = vpack.c.b16 %v4701, %v4700
      %v4726 = vpack.c.b16 %v4703, %v4702
      %v4727 = vpack.c.b16 %v4705, %v4704
      %v4728 = vpack.c.b16 %v4707, %v4706
      %v4729 = vpack.c.b16 %v4709, %v4708
      %v4730 = vpack.c.b16 %v4711, %v4710
      %v4731 = vpack.c.b16 %v4713, %v4712
      %v4732 = vpack.c.b16 %v4715, %v4714
      %v4733 = vpack.c.b16 %v4717, %v4716
      %v4735 = vsel %vm1482, %v4718, 0
      %v4738 = vsel %vm1482, %v4719, 0
      %v4741 = vsel %vm1482, %v4720, 0
      %v4744 = vsel %vm1482, %v4721, 0
      %v4747 = vsel %vm1482, %v4722, 0
      %v4750 = vsel %vm1482, %v4723, 0
      %v4753 = vsel %vm1482, %v4724, 0
      %v4756 = vsel %vm1482, %v4725, 0
      %v4759 = vsel %vm1482, %v4726, 0
      %v4762 = vsel %vm1482, %v4727, 0
      %v4765 = vsel %vm1482, %v4728, 0
      %v4768 = vsel %vm1482, %v4729, 0
      %v4771 = vsel %vm1482, %v4730, 0
      %v4774 = vsel %vm1482, %v4731, 0
      %v4777 = vsel %vm1482, %v4732, 0
      %v4780 = vsel %vm1482, %v4733, 0
      %v4783 = vsel %vm1531, %v4685, 0
      %4785 = vmatpush.bf16.msra.mxu0 0
      %4786 = vmatpush.bf16.msra.mxu0 0
      %4787 = vmatpush.bf16.msra.mxu0 0
      %4788 = vmatpush.bf16.msra.mxu0 0
      %4789 = vmatpush.bf16.msra.mxu0 0
      %4790 = vmatpush.bf16.msra.mxu0 0
      %4791 = vmatpush.bf16.msra.mxu0 0
      %4792 = vmatpush.bf16.msra.mxu0 %v4783
      %4793 = vmatmul.bf16.gmra.mxu0 %v4735
      %v4794 = vpop.f32.mrf.mxu0
      %v4795 = vadd.f32 0.0, %v4794
      %v4796 = vpop.f32.mrf.mxu0
      %v4797 = vadd.f32 0.0, %v4796
      %4798 = vmatmul.bf16.gmra.mxu0 %v4738
      %v4799 = vpop.f32.mrf.mxu0
      %v4800 = vadd.f32 0.0, %v4799
      %v4801 = vpop.f32.mrf.mxu0
      %v4802 = vadd.f32 0.0, %v4801
      %4803 = vmatmul.bf16.gmra.mxu0 %v4741
      %v4804 = vpop.f32.mrf.mxu0
      %v4805 = vadd.f32 0.0, %v4804
      %v4806 = vpop.f32.mrf.mxu0
      %v4807 = vadd.f32 0.0, %v4806
      %4808 = vmatmul.bf16.gmra.mxu0 %v4744
      %v4809 = vpop.f32.mrf.mxu0
      %v4810 = vadd.f32 0.0, %v4809
      %v4811 = vpop.f32.mrf.mxu0
      %v4812 = vadd.f32 0.0, %v4811
      %4813 = vmatmul.bf16.gmra.mxu0 %v4747
      %v4814 = vpop.f32.mrf.mxu0
      %v4815 = vadd.f32 0.0, %v4814
      %v4816 = vpop.f32.mrf.mxu0
      %v4817 = vadd.f32 0.0, %v4816
      %4818 = vmatmul.bf16.gmra.mxu0 %v4750
      %v4819 = vpop.f32.mrf.mxu0
      %v4820 = vadd.f32 0.0, %v4819
      %v4821 = vpop.f32.mrf.mxu0
      %v4822 = vadd.f32 0.0, %v4821
      %4823 = vmatmul.bf16.gmra.mxu0 %v4753
      %v4824 = vpop.f32.mrf.mxu0
      %v4825 = vadd.f32 0.0, %v4824
      %v4826 = vpop.f32.mrf.mxu0
      %v4827 = vadd.f32 0.0, %v4826
      %4828 = vmatmul.bf16.gmra.mxu0 %v4756
      %v4829 = vpop.f32.mrf.mxu0
      %v4830 = vadd.f32 0.0, %v4829
      %v4831 = vpop.f32.mrf.mxu0
      %v4832 = vadd.f32 0.0, %v4831
      %4833 = vmatmul.bf16.gmra.mxu0 %v4759
      %v4834 = vpop.f32.mrf.mxu0
      %v4835 = vadd.f32 0.0, %v4834
      %v4836 = vpop.f32.mrf.mxu0
      %v4837 = vadd.f32 0.0, %v4836
      %4838 = vmatmul.bf16.gmra.mxu0 %v4762
      %v4839 = vpop.f32.mrf.mxu0
      %v4840 = vadd.f32 0.0, %v4839
      %v4841 = vpop.f32.mrf.mxu0
      %v4842 = vadd.f32 0.0, %v4841
      %4843 = vmatmul.bf16.gmra.mxu0 %v4765
      %v4844 = vpop.f32.mrf.mxu0
      %v4845 = vadd.f32 0.0, %v4844
      %v4846 = vpop.f32.mrf.mxu0
      %v4847 = vadd.f32 0.0, %v4846
      %4848 = vmatmul.bf16.gmra.mxu0 %v4768
      %v4849 = vpop.f32.mrf.mxu0
      %v4850 = vadd.f32 0.0, %v4849
      %v4851 = vpop.f32.mrf.mxu0
      %v4852 = vadd.f32 0.0, %v4851
      %4853 = vmatmul.bf16.gmra.mxu0 %v4771
      %v4854 = vpop.f32.mrf.mxu0
      %v4855 = vadd.f32 0.0, %v4854
      %v4856 = vpop.f32.mrf.mxu0
      %v4857 = vadd.f32 0.0, %v4856
      %4858 = vmatmul.bf16.gmra.mxu0 %v4774
      %v4859 = vpop.f32.mrf.mxu0
      %v4860 = vadd.f32 0.0, %v4859
      %v4861 = vpop.f32.mrf.mxu0
      %v4862 = vadd.f32 0.0, %v4861
      %4863 = vmatmul.bf16.gmra.mxu0 %v4777
      %v4864 = vpop.f32.mrf.mxu0
      %v4865 = vadd.f32 0.0, %v4864
      %v4866 = vpop.f32.mrf.mxu0
      %v4867 = vadd.f32 0.0, %v4866
      %4868 = vmatmul.bf16.gmra.mxu0 %v4780
      %v4869 = vpop.f32.mrf.mxu0
      %v4870 = vadd.f32 0.0, %v4869
      %v4871 = vpop.f32.mrf.mxu0
      %v4872 = vadd.f32 0.0, %v4871
      %4873 = vdwg.mxu0
      %v4874 = vadd.f32 %v4476, %v4795
      %v4875 = vadd.f32 %v4477, %v4797
      %v4876 = vadd.f32 %v4478, %v4800
      %v4877 = vadd.f32 %v4479, %v4802
      %v4878 = vadd.f32 %v4480, %v4805
      %v4879 = vadd.f32 %v4481, %v4807
      %v4880 = vadd.f32 %v4482, %v4810
      %v4881 = vadd.f32 %v4483, %v4812
      %v4882 = vadd.f32 %v4484, %v4815
      %v4883 = vadd.f32 %v4485, %v4817
      %v4884 = vadd.f32 %v4486, %v4820
      %v4885 = vadd.f32 %v4487, %v4822
      %v4886 = vadd.f32 %v4488, %v4825
      %v4887 = vadd.f32 %v4489, %v4827
      %v4888 = vadd.f32 %v4490, %v4830
      %v4889 = vadd.f32 %v4491, %v4832
      %v4890 = vadd.f32 %v4492, %v4835
      %v4891 = vadd.f32 %v4493, %v4837
      %v4892 = vadd.f32 %v4494, %v4840
      %v4893 = vadd.f32 %v4495, %v4842
      %v4894 = vadd.f32 %v4496, %v4845
      %v4895 = vadd.f32 %v4497, %v4847
      %v4896 = vadd.f32 %v4498, %v4850
      %v4897 = vadd.f32 %v4499, %v4852
      %v4898 = vadd.f32 %v4500, %v4855
      %v4899 = vadd.f32 %v4501, %v4857
      %v4900 = vadd.f32 %v4502, %v4860
      %v4901 = vadd.f32 %v4503, %v4862
      %v4902 = vadd.f32 %v4504, %v4865
      %v4903 = vadd.f32 %v4505, %v4867
      %v4904 = vadd.f32 %v4506, %v4870
      %v4905 = vadd.f32 %v4507, %v4872
      %v4906 = vpack.c.bf16 %v4874, %v4874
      %v4907 = vpack.c.bf16 %v4875, %v4875
      %v4908 = vpack.c.bf16 %v4876, %v4876
      %v4909 = vpack.c.bf16 %v4877, %v4877
      %v4910 = vpack.c.bf16 %v4878, %v4878
      %v4911 = vpack.c.bf16 %v4879, %v4879
      %v4912 = vpack.c.bf16 %v4880, %v4880
      %v4913 = vpack.c.bf16 %v4881, %v4881
      %v4914 = vpack.c.bf16 %v4882, %v4882
      %v4915 = vpack.c.bf16 %v4883, %v4883
      %v4916 = vpack.c.bf16 %v4884, %v4884
      %v4917 = vpack.c.bf16 %v4885, %v4885
      %v4918 = vpack.c.bf16 %v4886, %v4886
      %v4919 = vpack.c.bf16 %v4887, %v4887
      %v4920 = vpack.c.bf16 %v4888, %v4888
      %v4921 = vpack.c.bf16 %v4889, %v4889
      %v4922 = vpack.c.bf16 %v4890, %v4890
      %v4923 = vpack.c.bf16 %v4891, %v4891
      %v4924 = vpack.c.bf16 %v4892, %v4892
      %v4925 = vpack.c.bf16 %v4893, %v4893
      %v4926 = vpack.c.bf16 %v4894, %v4894
      %v4927 = vpack.c.bf16 %v4895, %v4895
      %v4928 = vpack.c.bf16 %v4896, %v4896
      %v4929 = vpack.c.bf16 %v4897, %v4897
      %v4930 = vpack.c.bf16 %v4898, %v4898
      %v4931 = vpack.c.bf16 %v4899, %v4899
      %v4932 = vpack.c.bf16 %v4900, %v4900
      %v4933 = vpack.c.bf16 %v4901, %v4901
      %v4934 = vpack.c.bf16 %v4902, %v4902
      %v4935 = vpack.c.bf16 %v4903, %v4903
      %v4936 = vpack.c.bf16 %v4904, %v4904
      %v4937 = vpack.c.bf16 %v4905, %v4905
      %4938 = vst.msk [vmem:[%s231] sm:$0xf] %vm405, %v4906
      %4939 = vst.msk [vmem:[%s231 + $0x4] sm:$0xf] %vm405, %v4907
      %4940 = vst.msk [vmem:[%s231 + $0x8] sm:$0xf] %vm405, %v4908
      %4941 = vst.msk [vmem:[%s231 + $0xc] sm:$0xf] %vm405, %v4909
      %4942 = vst.msk [vmem:[%s231 + $0x10] sm:$0xf] %vm405, %v4910
      %4943 = vst.msk [vmem:[%s231 + $0x14] sm:$0xf] %vm405, %v4911
      %4944 = vst.msk [vmem:[%s231 + $0x18] sm:$0xf] %vm405, %v4912
      %4945 = vst.msk [vmem:[%s231 + $0x1c] sm:$0xf] %vm405, %v4913
      %4946 = vst.msk [vmem:[%s231 + $0x20] sm:$0xf] %vm405, %v4914
      %4947 = vst.msk [vmem:[%s231 + $0x24] sm:$0xf] %vm405, %v4915
      %4948 = vst.msk [vmem:[%s231 + $0x28] sm:$0xf] %vm405, %v4916
      %4949 = vst.msk [vmem:[%s231 + $0x2c] sm:$0xf] %vm405, %v4917
      %4950 = vst.msk [vmem:[%s231 + $0x30] sm:$0xf] %vm405, %v4918
      %4951 = vst.msk [vmem:[%s231 + $0x34] sm:$0xf] %vm405, %v4919
      %4952 = vst.msk [vmem:[%s231 + $0x38] sm:$0xf] %vm405, %v4920
      %4953 = vst.msk [vmem:[%s231 + $0x3c] sm:$0xf] %vm405, %v4921
      %4954 = vst.msk [vmem:[%s231 + $0x40] sm:$0xf] %vm405, %v4922
      %4955 = vst.msk [vmem:[%s231 + $0x44] sm:$0xf] %vm405, %v4923
      %4956 = vst.msk [vmem:[%s231 + $0x48] sm:$0xf] %vm405, %v4924
      %4957 = vst.msk [vmem:[%s231 + $0x4c] sm:$0xf] %vm405, %v4925
      %4958 = vst.msk [vmem:[%s231 + $0x50] sm:$0xf] %vm405, %v4926
      %4959 = vst.msk [vmem:[%s231 + $0x54] sm:$0xf] %vm405, %v4927
      %4960 = vst.msk [vmem:[%s231 + $0x58] sm:$0xf] %vm405, %v4928
      %4961 = vst.msk [vmem:[%s231 + $0x5c] sm:$0xf] %vm405, %v4929
      %4962 = vst.msk [vmem:[%s231 + $0x60] sm:$0xf] %vm405, %v4930
      %4963 = vst.msk [vmem:[%s231 + $0x64] sm:$0xf] %vm405, %v4931
      %4964 = vst.msk [vmem:[%s231 + $0x68] sm:$0xf] %vm405, %v4932
      %4965 = vst.msk [vmem:[%s231 + $0x6c] sm:$0xf] %vm405, %v4933
      %4966 = vst.msk [vmem:[%s231 + $0x70] sm:$0xf] %vm405, %v4934
      %4967 = vst.msk [vmem:[%s231 + $0x74] sm:$0xf] %vm405, %v4935
      %4968 = vst.msk [vmem:[%s231 + $0x78] sm:$0xf] %vm405, %v4936
      %4969 = vst.msk [vmem:[%s231 + $0x7c] sm:$0xf] %vm405, %v4937
      %v4970 = vsel %vm1482, %v4874, 0.0
      %v4971 = vsel %vm1482, %v4875, 0.0
      %v4972 = vadd.f32 %v4970, %v4971
      %v4973 = vsel %vm1482, %v4876, 0.0
      %v4974 = vadd.f32 %v4972, %v4973
      %v4975 = vsel %vm1482, %v4877, 0.0
      %v4976 = vadd.f32 %v4974, %v4975
      %v4977 = vsel %vm1482, %v4878, 0.0
      %v4978 = vadd.f32 %v4976, %v4977
      %v4979 = vsel %vm1482, %v4879, 0.0
      %v4980 = vadd.f32 %v4978, %v4979
      %v4981 = vsel %vm1482, %v4880, 0.0
      %v4982 = vadd.f32 %v4980, %v4981
      %v4983 = vsel %vm1482, %v4881, 0.0
      %v4984 = vadd.f32 %v4982, %v4983
      %v4985 = vsel %vm1482, %v4882, 0.0
      %v4986 = vadd.f32 %v4984, %v4985
      %v4987 = vsel %vm1482, %v4883, 0.0
      %v4988 = vadd.f32 %v4986, %v4987
      %v4989 = vsel %vm1482, %v4884, 0.0
      %v4990 = vadd.f32 %v4988, %v4989
      %v4991 = vsel %vm1482, %v4885, 0.0
      %v4992 = vadd.f32 %v4990, %v4991
      %v4993 = vsel %vm1482, %v4886, 0.0
      %v4994 = vadd.f32 %v4992, %v4993
      %v4995 = vsel %vm1482, %v4887, 0.0
      %v4996 = vadd.f32 %v4994, %v4995
      %v4997 = vsel %vm1482, %v4888, 0.0
      %v4998 = vadd.f32 %v4996, %v4997
      %v4999 = vsel %vm1482, %v4889, 0.0
      %v5000 = vadd.f32 %v4998, %v4999
      %v5001 = vsel %vm1482, %v4890, 0.0
      %v5002 = vadd.f32 %v5000, %v5001
      %v5003 = vsel %vm1482, %v4891, 0.0
      %v5004 = vadd.f32 %v5002, %v5003
      %v5005 = vsel %vm1482, %v4892, 0.0
      %v5006 = vadd.f32 %v5004, %v5005
      %v5007 = vsel %vm1482, %v4893, 0.0
      %v5008 = vadd.f32 %v5006, %v5007
      %v5009 = vsel %vm1482, %v4894, 0.0
      %v5010 = vadd.f32 %v5008, %v5009
      %v5011 = vsel %vm1482, %v4895, 0.0
      %v5012 = vadd.f32 %v5010, %v5011
      %v5013 = vsel %vm1482, %v4896, 0.0
      %v5014 = vadd.f32 %v5012, %v5013
      %v5015 = vsel %vm1482, %v4897, 0.0
      %v5016 = vadd.f32 %v5014, %v5015
      %v5017 = vsel %vm1482, %v4898, 0.0
      %v5018 = vadd.f32 %v5016, %v5017
      %v5019 = vsel %vm1482, %v4899, 0.0
      %v5020 = vadd.f32 %v5018, %v5019
      %v5021 = vsel %vm1482, %v4900, 0.0
      %v5022 = vadd.f32 %v5020, %v5021
      %v5023 = vsel %vm1482, %v4901, 0.0
      %v5024 = vadd.f32 %v5022, %v5023
      %v5025 = vsel %vm1482, %v4902, 0.0
      %v5026 = vadd.f32 %v5024, %v5025
      %v5027 = vsel %vm1482, %v4903, 0.0
      %v5028 = vadd.f32 %v5026, %v5027
      %v5029 = vsel %vm1482, %v4904, 0.0
      %v5030 = vadd.f32 %v5028, %v5029
      %v5031 = vsel %vm1482, %v4905, 0.0
      %v5032 = vadd.f32 %v5030, %v5031
      %v5033 = vrot.slane %v5032, 4
      %v5034 = vadd.f32 %v5032, %v5033
      %v5035 = vrot.slane %v5034, 2
      %v5036 = vadd.f32 %v5034, %v5035
      %v5037 = vrot.slane %v5036, 1
      %v5038 = vadd.f32 %v5036, %v5037
      %v5039 = vmul.f32 %v4874, %v4874
      %v5040 = vmul.f32 %v4875, %v4875
      %v5041 = vmul.f32 %v4876, %v4876
      %v5042 = vmul.f32 %v4877, %v4877
      %v5043 = vmul.f32 %v4878, %v4878
      %v5044 = vmul.f32 %v4879, %v4879
      %v5045 = vmul.f32 %v4880, %v4880
      %v5046 = vmul.f32 %v4881, %v4881
      %v5047 = vmul.f32 %v4882, %v4882
      %v5048 = vmul.f32 %v4883, %v4883
      %v5049 = vmul.f32 %v4884, %v4884
      %v5050 = vmul.f32 %v4885, %v4885
      %v5051 = vmul.f32 %v4886, %v4886
      %v5052 = vmul.f32 %v4887, %v4887
      %v5053 = vmul.f32 %v4888, %v4888
      %v5054 = vmul.f32 %v4889, %v4889
      %v5055 = vmul.f32 %v4890, %v4890
      %v5056 = vmul.f32 %v4891, %v4891
      %v5057 = vmul.f32 %v4892, %v4892
      %v5058 = vmul.f32 %v4893, %v4893
      %v5059 = vmul.f32 %v4894, %v4894
      %v5060 = vmul.f32 %v4895, %v4895
      %v5061 = vmul.f32 %v4896, %v4896
      %v5062 = vmul.f32 %v4897, %v4897
      %v5063 = vmul.f32 %v4898, %v4898
      %v5064 = vmul.f32 %v4899, %v4899
      %v5065 = vmul.f32 %v4900, %v4900
      %v5066 = vmul.f32 %v4901, %v4901
      %v5067 = vmul.f32 %v4902, %v4902
      %v5068 = vmul.f32 %v4903, %v4903
      %v5069 = vmul.f32 %v4904, %v4904
      %v5070 = vmul.f32 %v4905, %v4905
      %v5071 = vsel %vm1482, %v5039, 0.0
      %v5072 = vsel %vm1482, %v5040, 0.0
      %v5073 = vadd.f32 %v5071, %v5072
      %v5074 = vsel %vm1482, %v5041, 0.0
      %v5075 = vadd.f32 %v5073, %v5074
      %v5076 = vsel %vm1482, %v5042, 0.0
      %v5077 = vadd.f32 %v5075, %v5076
      %v5078 = vsel %vm1482, %v5043, 0.0
      %v5079 = vadd.f32 %v5077, %v5078
      %v5080 = vsel %vm1482, %v5044, 0.0
      %v5081 = vadd.f32 %v5079, %v5080
      %v5082 = vsel %vm1482, %v5045, 0.0
      %v5083 = vadd.f32 %v5081, %v5082
      %v5084 = vsel %vm1482, %v5046, 0.0
      %v5085 = vadd.f32 %v5083, %v5084
      %v5086 = vsel %vm1482, %v5047, 0.0
      %v5087 = vadd.f32 %v5085, %v5086
      %v5088 = vsel %vm1482, %v5048, 0.0
      %v5089 = vadd.f32 %v5087, %v5088
      %v5090 = vsel %vm1482, %v5049, 0.0
      %v5091 = vadd.f32 %v5089, %v5090
      %v5092 = vsel %vm1482, %v5050, 0.0
      %v5093 = vadd.f32 %v5091, %v5092
      %v5094 = vsel %vm1482, %v5051, 0.0
      %v5095 = vadd.f32 %v5093, %v5094
      %v5096 = vsel %vm1482, %v5052, 0.0
      %v5097 = vadd.f32 %v5095, %v5096
      %v5098 = vsel %vm1482, %v5053, 0.0
      %v5099 = vadd.f32 %v5097, %v5098
      %v5100 = vsel %vm1482, %v5054, 0.0
      %v5101 = vadd.f32 %v5099, %v5100
      %v5102 = vsel %vm1482, %v5055, 0.0
      %v5103 = vadd.f32 %v5101, %v5102
      %v5104 = vsel %vm1482, %v5056, 0.0
      %v5105 = vadd.f32 %v5103, %v5104
      %v5106 = vsel %vm1482, %v5057, 0.0
      %v5107 = vadd.f32 %v5105, %v5106
      %v5108 = vsel %vm1482, %v5058, 0.0
      %v5109 = vadd.f32 %v5107, %v5108
      %v5110 = vsel %vm1482, %v5059, 0.0
      %v5111 = vadd.f32 %v5109, %v5110
      %v5112 = vsel %vm1482, %v5060, 0.0
      %v5113 = vadd.f32 %v5111, %v5112
      %v5114 = vsel %vm1482, %v5061, 0.0
      %v5115 = vadd.f32 %v5113, %v5114
      %v5116 = vsel %vm1482, %v5062, 0.0
      %v5117 = vadd.f32 %v5115, %v5116
      %v5118 = vsel %vm1482, %v5063, 0.0
      %v5119 = vadd.f32 %v5117, %v5118
      %v5120 = vsel %vm1482, %v5064, 0.0
      %v5121 = vadd.f32 %v5119, %v5120
      %v5122 = vsel %vm1482, %v5065, 0.0
      %v5123 = vadd.f32 %v5121, %v5122
      %v5124 = vsel %vm1482, %v5066, 0.0
      %v5125 = vadd.f32 %v5123, %v5124
      %v5126 = vsel %vm1482, %v5067, 0.0
      %v5127 = vadd.f32 %v5125, %v5126
      %v5128 = vsel %vm1482, %v5068, 0.0
      %v5129 = vadd.f32 %v5127, %v5128
      %v5130 = vsel %vm1482, %v5069, 0.0
      %v5131 = vadd.f32 %v5129, %v5130
      %v5132 = vsel %vm1482, %v5070, 0.0
      %v5133 = vadd.f32 %v5131, %v5132
      %v5134 = vrot.slane %v5133, 4
      %v5135 = vadd.f32 %v5133, %v5134
      %v5136 = vrot.slane %v5135, 2
      %v5137 = vadd.f32 %v5135, %v5136
      %v5138 = vrot.slane %v5137, 1
      %v5139 = vadd.f32 %v5137, %v5138
      %vm5140 = vcmask 1040384
      %v5141 = vsel %vm5140, %v5038, %v5139
      %vm5142 = vcmask 25600
      %5143 = vst.msk [vmem:[%s235] sm:$0x3] %vm5142, %v5141
      %p5144 = scmp.lt.s32.totalorder %s17, 1
      %s5145 = scalar_select %p5144, %s17, 1
      %s5146 = smul.addr %s5145, 32
      %s5147 = smul.addr %s5146, 4
      %s5148 = scalar_lea.vmem %s4, %s5147
      %p5149 = scmp.lt.s32.totalorder %s17, 1
      %s5150 = scalar_select %p5149, %s17, 1
      %s5151 = smul.addr %s5150, 2
      %s5152 = scalar_lea.vmem %s5, %s5151
      // Predicated region
      $region37: #{_lambda_.5} parent=35 // pred_check
        %p5153 = pneg %p124
      $region38: #{_lambda_.5} parent=35 // pred_check_branch
        %5155 = sbr.rel (%p5153) target = $region40
      $region39: #{_lambda_.5} parent=35 // pred_region
        _
      $region40: #{_lambda_.5} parent=35 // pred_fallthru
        _
      // Predicated region
      $region41: #{_lambda_.5} parent=35 // pred_check
        %p5156 = pneg %p150
      $region42: #{_lambda_.5} parent=35 // pred_check_branch
        %5158 = sbr.rel (%p5156) target = $region44
      $region43: #{_lambda_.5} parent=35 // pred_region
        _
      $region44: #{_lambda_.5} parent=35 // pred_fallthru
        _
    $region36: #{_lambda_.5} parent=5 // pred_fallthru
      _
    %p5159 = scmp.le.s32.totalorder 2, %s12
    // Predicated region
    $region45: #{_lambda_.5} parent=5 // pred_check
      %p5160 = pneg %p5159
    $region46: #{_lambda_.5} parent=5 // pred_check_branch
      %5162 = sbr.rel (%p5160) target = $region48
    $region47: #{_lambda_.5} parent=5 // pred_region
      %s5163 = ssub.s32 %s12, 2
      // Predicated region
      $region49: #{_lambda_.5} parent=47 // pred_check
        %p5164 = pneg %p130
      $region50: #{_lambda_.5} parent=47 // pred_check_branch
        %5166 = sbr.rel (%p5164) target = $region52
      $region51: #{_lambda_.5} parent=47 // pred_region
        %p5167 = scmp.lt.s32.totalorder %s18, 1
        %s5168 = scalar_select %p5167, %s18, 1
        %s5169 = smul.addr %s5168, 32
        %s5170 = smul.addr %s5169, 4
        %s5171 = scalar_lea.vmem %s4, %s5170
      $region52: #{_lambda_.5} parent=47 // pred_fallthru
        _
      // Predicated region
      $region53: #{_lambda_.5} parent=47 // pred_check
        %p5172 = pneg %p156
      $region54: #{_lambda_.5} parent=47 // pred_check_branch
        %5174 = sbr.rel (%p5172) target = $region56
      $region55: #{_lambda_.5} parent=47 // pred_region
        %p5175 = scmp.lt.s32.totalorder %s18, 1
        %s5176 = scalar_select %p5175, %s18, 1
        %s5177 = smul.addr %s5176, 2
        %s5178 = scalar_lea.vmem %s5, %s5177
      $region56: #{_lambda_.5} parent=47 // pred_fallthru
        _
    $region48: #{_lambda_.5} parent=5 // pred_fallthru
      _
  $region6: #{_lambda_.5} parent=0 // loop_footer
    %s16 = sadd.s32 1, %s12
  $region7: #{_lambda_.5} parent=0 // loop_footer_branch
    %11 = sbr.rel target = $region3
  $region8: #{_lambda_.5} parent=0 // loop_exit
    _

</llo_original>
